<compile_context>
chip_gen: v7x
topology: tpu7x:2x2x1
jax: 0.10.0
libtpu: 0.0.40
codegen_flags: <defaults>
</compile_context>

<pallas_src>
import jax
import jax.numpy as jnp
import numpy as np
from jax import lax
from jax.experimental import pallas as pl
from jax.experimental.pallas import tpu as pltpu

SELU_ALPHA = 1.6732632423543772848170429916717
SELU_SCALE = 1.0507009873554804934193349852946


def _selu(x):
    return SELU_SCALE * jnp.where(x > 0, x, SELU_ALPHA * (jnp.exp(x) - 1.0))


def _sigmoid_k(x):
    # exp -> EUP, approx reciprocal -> EUP; no VPU divide on the serial path.
    return pl.reciprocal(1.0 + jnp.exp(-x), approx=True)


# ---------------------------------------------------------------------------
# Single fused kernel: bidirectional GRU recurrence + MLP head + sigmoid.
# ---------------------------------------------------------------------------
def _make_disc_kernel(T, B, H):
    H2, H3 = 2 * H, 3 * H

    def kernel(bx_ref, wih_ref, bih_ref, whh_f_ref, whh_b_ref,
               bhn_f_ref, bhn_b_ref, sel_ref,
               w1t_ref, w1b_ref, b1_ref, w2_ref, b2_ref, w3_ref, b3_ref,
               wo_ref, bo_ref, out_ref):
        # ---- hoisted input projections: all steps, all gates, both directions ----
        # columns [0:3H) -> forward (r,z,n), [3H:6H) -> backward (r,z,n);
        # b_ih (+ b_hh for the r,z gates) is already folded into bih_ref.
        xproj = (jnp.dot(bx_ref[...], wih_ref[...],
                         preferred_element_type=jnp.float32) + bih_ref[...])   # (T*B, 6H)

        whh_f = whh_f_ref[...]
        whh_b = whh_b_ref[...]
        bhn_f = jnp.broadcast_to(bhn_f_ref[...], (B, H))   # broadcast once, not per step
        bhn_b = jnp.broadcast_to(bhn_b_ref[...], (B, H))

        def gru_step(h, xg, whh, bhn):
            hg = jnp.dot(h, whh, preferred_element_type=jnp.float32)   # (B, 3H)
            rz = _sigmoid_k(xg[:, :H2] + hg[:, :H2])                   # (B, 2H)
            r = rz[:, :H]
            z = rz[:, H:]
            n = jnp.tanh(xg[:, H2:] + r * (hg[:, H2:] + bhn))
            return (1.0 - z) * n + z * h

        h_f = jnp.zeros((B, H), jnp.float32)
        h_b = jnp.zeros((B, H), jnp.float32)
        # Fully unrolled (T is small & static); forward step t and backward step T-1-t
        # are independent, so interleaving exposes parallel MXU/EUP work each iteration.
        for t in range(T):
            xg_f = xproj[t * B:(t + 1) * B, :H3]
            xg_b = xproj[(T - 1 - t) * B:(T - t) * B, H3:]
            h_f = gru_step(h_f, xg_f, whh_f, bhn_f)
            h_b = gru_step(h_b, xg_b, whh_b, bhn_b)

        # ---- MLP head ----
        # torch: hidden is (2, B, H) and hidden.view(B, 2H) is a RAW memory reshape that
        # mixes batch rows.  With hidden_flat = [h_f; h_b] (2B, H):
        #     mlp_in[i]      = [hidden_flat[2i] | hidden_flat[2i+1]]
        #     mlp_in[i] @ W1 =  hidden_flat[2i] @ W1[:H] + hidden_flat[2i+1] @ W1[H:]
        # realized with a constant 0/1 selection matmul (sel_ref), avoiding an in-kernel
        # minor-dim reshape.
        hidden_flat = jnp.concatenate([h_f, h_b], axis=0)                          # (2B, H)
        a_top = jnp.dot(hidden_flat, w1t_ref[...], preferred_element_type=jnp.float32)
        a_bot = jnp.dot(hidden_flat, w1b_ref[...], preferred_element_type=jnp.float32)
        stacked = jnp.concatenate([a_top, a_bot], axis=0)                          # (4B, M)
        h1 = _selu(jnp.dot(sel_ref[...], stacked,
                           preferred_element_type=jnp.float32) + b1_ref[...])      # (B, M)
        h2 = _selu(jnp.dot(h1, w2_ref[...], preferred_element_type=jnp.float32) + b2_ref[...])
        h3 = _selu(jnp.dot(h2, w3_ref[...], preferred_element_type=jnp.float32) + b3_ref[...])
        out_ref[...] = _sigmoid_k(
            jnp.dot(h3, wo_ref[...], preferred_element_type=jnp.float32) + bo_ref[...])

    return kernel


# ---------------------------------------------------------------------------
# Wrapper
# ---------------------------------------------------------------------------
def discriminator_forward(b, p):
    T, B, I = b.shape
    H = p["whh_f"].shape[0]
    H2 = 2 * H

    # ---- layout-only parameter packing (cheap; const-folded under jit) ----
    bx = b.reshape(T * B, I)                                      # contiguous view of b
    wih_cat = jnp.concatenate([p["wih_f"], p["wih_b"]], axis=1)   # (I, 6H)

    def fold(bih, bhh):  # r,z gates: b_ih + b_hh ; n gate: b_ih only (b_hn inside r*(.))
        return jnp.concatenate([bih[:, :H2] + bhh[:, :H2], bih[:, H2:]], axis=1)

    bih_cat = jnp.concatenate(
        [fold(p["bih_f"], p["bhh_f"]), fold(p["bih_b"], p["bhh_b"])], axis=1)   # (1, 6H)
    bhn_f = p["bhh_f"][:, H2:]                                    # (1, H)
    bhn_b = p["bhh_b"][:, H2:]
    w1_top = p["w1"][:H]                                          # (H, M)
    w1_bot = p["w1"][H:]                                          # (H, M)

    # Constant selector implementing torch's hidden.view(B, 2H) row mixing (see kernel).
    sel_np = np.zeros((B, 4 * B), np.float32)
    for i in range(B):
        sel_np[i, 2 * i] = 1.0                # picks hidden_flat[2i]   @ W1[:H]
        sel_np[i, 2 * B + 2 * i + 1] = 1.0    # picks hidden_flat[2i+1] @ W1[H:]
    sel = jnp.asarray(sel_np)

    vmem = pl.BlockSpec(memory_space=pltpu.MemorySpace.VMEM)
    out = pl.pallas_call(
        _make_disc_kernel(T, B, H),
        out_shape=jax.ShapeDtypeStruct((B, 1), jnp.float32),
        in_specs=[vmem] * 17,
        out_specs=vmem,
        compiler_params=pltpu.CompilerParams(vmem_limit_bytes=64 << 20),
    )(bx, wih_cat, bih_cat, p["whh_f"], p["whh_b"], bhn_f, bhn_b, sel,
      w1_top, w1_bot, p["b1"], p["w2"], p["b2"], p["w3"], p["b3"], p["wo"], p["bo"])
    return out


# ---------------------------------------------------------------------------
# Pure-JAX reference (for correctness check)
# ---------------------------------------------------------------------------
def _sigmoid_ref(x):
    return 1.0 / (1.0 + jnp.exp(-x))


def _gru_ref_dir(b, wih, whh, bih, bhh, reverse):
    T, B, I = b.shape
    H = whh.shape[0]
    xs = b[::-1] if reverse else b

    def step(h, x):
        gi = x @ wih + bih                     # (B, 3H), gate order (r, z, n)
        gh = h @ whh + bhh
        r = _sigmoid_ref(gi[:, :H] + gh[:, :H])
        z = _sigmoid_ref(gi[:, H:2 * H] + gh[:, H:2 * H])
        n = jnp.tanh(gi[:, 2 * H:] + r * gh[:, 2 * H:])
        return (1.0 - z) * n + z * h, None

    h, _ = lax.scan(step, jnp.zeros((B, H), jnp.float32), xs)
    return h


def reference(b, p):
    B = b.shape[1]
    h_f = _gru_ref_dir(b, p["wih_f"], p["whh_f"], p["bih_f"], p["bhh_f"], reverse=False)
    h_b = _gru_ref_dir(b, p["wih_b"], p["whh_b"], p["bih_b"], p["bhh_b"], reverse=True)
    hidden = jnp.stack([h_f, h_b], axis=0).reshape(B, -1)   # torch hidden.view(B, 2H)
    x = _selu(hidden @ p["w1"] + p["b1"])
    x = _selu(x @ p["w2"] + p["b2"])
    x = _selu(x @ p["w3"] + p["b3"])
    return _sigmoid_ref(x @ p["wo"] + p["bo"])


# ---------------------------------------------------------------------------
# Deterministic parameter init (synthetic; shapes follow the module __init__,
# stored as (in_features, out_features) with GRU gates concatenated (r, z, n)).
# ---------------------------------------------------------------------------
def init_params(key, input_size, hidden_size, mlp_size):
    ks = jax.random.split(key, 16)
    s = 0.1

    def w(k, shape):
        return (jax.random.normal(k, shape, jnp.float32) * s).astype(jnp.float32)

    I, H, M = input_size, hidden_size, mlp_size
    return dict(
        wih_f=w(ks[0], (I, 3 * H)), whh_f=w(ks[1], (H, 3 * H)),
        bih_f=w(ks[2], (1, 3 * H)), bhh_f=w(ks[3], (1, 3 * H)),
        wih_b=w(ks[4], (I, 3 * H)), whh_b=w(ks[5], (H, 3 * H)),
        bih_b=w(ks[6], (1, 3 * H)), bhh_b=w(ks[7], (1, 3 * H)),
        w1=w(ks[8], (2 * H, M)), b1=w(ks[9], (1, M)),
        w2=w(ks[10], (M, M)),    b2=w(ks[11], (1, M)),
        w3=w(ks[12], (M, M)),    b3=w(ks[13], (1, M)),
        wo=w(ks[14], (M, 1)),    bo=w(ks[15], (1, 1)),
    )


if __name__ == "__main__":
    # Small shapes consistent with the module (seq-major GRU input, as torch nn.GRU).
    T, B, I, H, M = 8, 4, 16, 32, 128   # seq, batch, input_size, gru hidden, mlp width

    key = jax.random.PRNGKey(0)
    kb, kp = jax.random.split(key)
    b = jax.random.normal(kb, (T, B, I), jnp.float32)
    params = init_params(kp, I, H, M)

    fwd = jax.jit(discriminator_forward)
    out = jax.block_until_ready(fwd(b, params))
    assert out.shape == (B, 1) and out.dtype == jnp.float32

    ref = reference(b, params)
    max_err = float(jnp.max(jnp.abs(out - ref)))
    assert max_err < 1e-2, f"kernel/reference mismatch: {max_err}"

    print("KERNEL_OK")
</pallas_src>

<mosaic_0001>
module attributes {stable_mosaic.version = 11 : i64} {
  func.func @kernel(%arg0: memref<32x16xf32, #tpu.memory_space<vmem>>, %arg1: memref<16x192xf32, #tpu.memory_space<vmem>>, %arg2: memref<1x192xf32, #tpu.memory_space<vmem>>, %arg3: memref<32x96xf32, #tpu.memory_space<vmem>>, %arg4: memref<32x96xf32, #tpu.memory_space<vmem>>, %arg5: memref<1x32xf32, #tpu.memory_space<vmem>>, %arg6: memref<1x32xf32, #tpu.memory_space<vmem>>, %arg7: memref<4x16xf32, #tpu.memory_space<vmem>>, %arg8: memref<32x128xf32, #tpu.memory_space<vmem>>, %arg9: memref<32x128xf32, #tpu.memory_space<vmem>>, %arg10: memref<1x128xf32, #tpu.memory_space<vmem>>, %arg11: memref<128x128xf32, #tpu.memory_space<vmem>>, %arg12: memref<1x128xf32, #tpu.memory_space<vmem>>, %arg13: memref<128x128xf32, #tpu.memory_space<vmem>>, %arg14: memref<1x128xf32, #tpu.memory_space<vmem>>, %arg15: memref<128x1xf32, #tpu.memory_space<vmem>>, %arg16: memref<1x1xf32, #tpu.memory_space<vmem>>, %arg17: memref<4x1xf32, #tpu.memory_space<vmem>>) attributes {dimension_semantics = [], scalar_prefetch = 0 : i64, scratch_operands = 0 : i64, tpu.core_type = #tpu.core_type<tc>} {
    %c0 = arith.constant 0 : index
    %c0_0 = arith.constant 0 : index
    %0 = vector.load %arg0[%c0, %c0_0] : memref<32x16xf32, #tpu.memory_space<vmem>>, vector<32x16xf32>
    %c0_1 = arith.constant 0 : index
    %c0_2 = arith.constant 0 : index
    %1 = vector.load %arg1[%c0_1, %c0_2] : memref<16x192xf32, #tpu.memory_space<vmem>>, vector<16x192xf32>
    %cst = arith.constant dense<0.000000e+00> : vector<32x192xf32>
    %2 = tpu.matmul %0, %1, %cst {dimension_numbers = #tpu.dot_dimension_numbers<[1], [0], [0], [1], [0, 0, 1, 1], [], []>} : vector<32x16xf32>, vector<16x192xf32>, vector<32x192xf32> -> vector<32x192xf32>
    %c0_3 = arith.constant 0 : index
    %c0_4 = arith.constant 0 : index
    %3 = vector.load %arg2[%c0_3, %c0_4] : memref<1x192xf32, #tpu.memory_space<vmem>>, vector<1x192xf32>
    %4 = vector.broadcast %3 : vector<1x192xf32> to vector<32x192xf32>
    %5 = arith.addf %2, %4 : vector<32x192xf32>
    %c0_5 = arith.constant 0 : index
    %c0_6 = arith.constant 0 : index
    %6 = vector.load %arg3[%c0_5, %c0_6] : memref<32x96xf32, #tpu.memory_space<vmem>>, vector<32x96xf32>
    %c0_7 = arith.constant 0 : index
    %c0_8 = arith.constant 0 : index
    %7 = vector.load %arg4[%c0_7, %c0_8] : memref<32x96xf32, #tpu.memory_space<vmem>>, vector<32x96xf32>
    %c0_9 = arith.constant 0 : index
    %c0_10 = arith.constant 0 : index
    %8 = vector.load %arg5[%c0_9, %c0_10] : memref<1x32xf32, #tpu.memory_space<vmem>>, vector<1x32xf32>
    %9 = vector.shape_cast %8 : vector<1x32xf32> to vector<1x32xf32>
    %10 = vector.broadcast %9 : vector<1x32xf32> to vector<4x32xf32>
    %c0_11 = arith.constant 0 : index
    %c0_12 = arith.constant 0 : index
    %11 = vector.load %arg6[%c0_11, %c0_12] : memref<1x32xf32, #tpu.memory_space<vmem>>, vector<1x32xf32>
    %12 = vector.shape_cast %11 : vector<1x32xf32> to vector<1x32xf32>
    %13 = vector.broadcast %12 : vector<1x32xf32> to vector<4x32xf32>
    %cst_13 = arith.constant 0.000000e+00 : f32
    %14 = vector.broadcast %cst_13 : f32 to vector<4x32xf32>
    %cst_14 = arith.constant 0.000000e+00 : f32
    %15 = vector.broadcast %cst_14 : f32 to vector<4x32xf32>
    %16 = vector.extract_strided_slice %5 {offsets = [0, 0], sizes = [4, 96], strides = [1, 1]} : vector<32x192xf32> to vector<4x96xf32>
    %17 = vector.extract_strided_slice %5 {offsets = [28, 96], sizes = [4, 96], strides = [1, 1]} : vector<32x192xf32> to vector<4x96xf32>
    %cst_15 = arith.constant dense<0.000000e+00> : vector<4x96xf32>
    %18 = tpu.matmul %14, %6, %cst_15 {dimension_numbers = #tpu.dot_dimension_numbers<[1], [0], [0], [1], [0, 0, 1, 1], [], []>} : vector<4x32xf32>, vector<32x96xf32>, vector<4x96xf32> -> vector<4x96xf32>
    %19 = vector.extract_strided_slice %16 {offsets = [0, 0], sizes = [4, 64], strides = [1, 1]} : vector<4x96xf32> to vector<4x64xf32>
    %20 = vector.extract_strided_slice %18 {offsets = [0, 0], sizes = [4, 64], strides = [1, 1]} : vector<4x96xf32> to vector<4x64xf32>
    %21 = arith.addf %19, %20 : vector<4x64xf32>
    %cst_16 = arith.constant 0.000000e+00 : f32
    %22 = vector.broadcast %cst_16 : f32 to vector<4x64xf32>
    %23 = arith.subf %22, %21 : vector<4x64xf32>
    %24 = math.exp %23 : vector<4x64xf32>
    %cst_17 = arith.constant 1.000000e+00 : f32
    %25 = vector.broadcast %cst_17 : f32 to vector<4x64xf32>
    %26 = arith.addf %25, %24 : vector<4x64xf32>
    %27 = tpu.reciprocal %26 {approx = true} : vector<4x64xf32> -> vector<4x64xf32>
    %28 = vector.extract_strided_slice %27 {offsets = [0, 0], sizes = [4, 32], strides = [1, 1]} : vector<4x64xf32> to vector<4x32xf32>
    %29 = vector.extract_strided_slice %27 {offsets = [0, 32], sizes = [4, 32], strides = [1, 1]} : vector<4x64xf32> to vector<4x32xf32>
    %30 = vector.extract_strided_slice %16 {offsets = [0, 64], sizes = [4, 32], strides = [1, 1]} : vector<4x96xf32> to vector<4x32xf32>
    %31 = vector.extract_strided_slice %18 {offsets = [0, 64], sizes = [4, 32], strides = [1, 1]} : vector<4x96xf32> to vector<4x32xf32>
    %32 = arith.addf %31, %10 : vector<4x32xf32>
    %33 = arith.mulf %28, %32 : vector<4x32xf32>
    %34 = arith.addf %30, %33 : vector<4x32xf32>
    %35 = math.tanh %34 : vector<4x32xf32>
    %cst_18 = arith.constant 1.000000e+00 : f32
    %36 = vector.broadcast %cst_18 : f32 to vector<4x32xf32>
    %37 = arith.subf %36, %29 : vector<4x32xf32>
    %38 = arith.mulf %37, %35 : vector<4x32xf32>
    %39 = arith.mulf %29, %14 : vector<4x32xf32>
    %40 = arith.addf %38, %39 : vector<4x32xf32>
    %cst_19 = arith.constant dense<0.000000e+00> : vector<4x96xf32>
    %41 = tpu.matmul %15, %7, %cst_19 {dimension_numbers = #tpu.dot_dimension_numbers<[1], [0], [0], [1], [0, 0, 1, 1], [], []>} : vector<4x32xf32>, vector<32x96xf32>, vector<4x96xf32> -> vector<4x96xf32>
    %42 = vector.extract_strided_slice %17 {offsets = [0, 0], sizes = [4, 64], strides = [1, 1]} : vector<4x96xf32> to vector<4x64xf32>
    %43 = vector.extract_strided_slice %41 {offsets = [0, 0], sizes = [4, 64], strides = [1, 1]} : vector<4x96xf32> to vector<4x64xf32>
    %44 = arith.addf %42, %43 : vector<4x64xf32>
    %cst_20 = arith.constant 0.000000e+00 : f32
    %45 = vector.broadcast %cst_20 : f32 to vector<4x64xf32>
    %46 = arith.subf %45, %44 : vector<4x64xf32>
    %47 = math.exp %46 : vector<4x64xf32>
    %cst_21 = arith.constant 1.000000e+00 : f32
    %48 = vector.broadcast %cst_21 : f32 to vector<4x64xf32>
    %49 = arith.addf %48, %47 : vector<4x64xf32>
    %50 = tpu.reciprocal %49 {approx = true} : vector<4x64xf32> -> vector<4x64xf32>
    %51 = vector.extract_strided_slice %50 {offsets = [0, 0], sizes = [4, 32], strides = [1, 1]} : vector<4x64xf32> to vector<4x32xf32>
    %52 = vector.extract_strided_slice %50 {offsets = [0, 32], sizes = [4, 32], strides = [1, 1]} : vector<4x64xf32> to vector<4x32xf32>
    %53 = vector.extract_strided_slice %17 {offsets = [0, 64], sizes = [4, 32], strides = [1, 1]} : vector<4x96xf32> to vector<4x32xf32>
    %54 = vector.extract_strided_slice %41 {offsets = [0, 64], sizes = [4, 32], strides = [1, 1]} : vector<4x96xf32> to vector<4x32xf32>
    %55 = arith.addf %54, %13 : vector<4x32xf32>
    %56 = arith.mulf %51, %55 : vector<4x32xf32>
    %57 = arith.addf %53, %56 : vector<4x32xf32>
    %58 = math.tanh %57 : vector<4x32xf32>
    %cst_22 = arith.constant 1.000000e+00 : f32
    %59 = vector.broadcast %cst_22 : f32 to vector<4x32xf32>
    %60 = arith.subf %59, %52 : vector<4x32xf32>
    %61 = arith.mulf %60, %58 : vector<4x32xf32>
    %62 = arith.mulf %52, %15 : vector<4x32xf32>
    %63 = arith.addf %61, %62 : vector<4x32xf32>
    %64 = vector.extract_strided_slice %5 {offsets = [4, 0], sizes = [4, 96], strides = [1, 1]} : vector<32x192xf32> to vector<4x96xf32>
    %65 = vector.extract_strided_slice %5 {offsets = [24, 96], sizes = [4, 96], strides = [1, 1]} : vector<32x192xf32> to vector<4x96xf32>
    %cst_23 = arith.constant dense<0.000000e+00> : vector<4x96xf32>
    %66 = tpu.matmul %40, %6, %cst_23 {dimension_numbers = #tpu.dot_dimension_numbers<[1], [0], [0], [1], [0, 0, 1, 1], [], []>} : vector<4x32xf32>, vector<32x96xf32>, vector<4x96xf32> -> vector<4x96xf32>
    %67 = vector.extract_strided_slice %64 {offsets = [0, 0], sizes = [4, 64], strides = [1, 1]} : vector<4x96xf32> to vector<4x64xf32>
    %68 = vector.extract_strided_slice %66 {offsets = [0, 0], sizes = [4, 64], strides = [1, 1]} : vector<4x96xf32> to vector<4x64xf32>
    %69 = arith.addf %67, %68 : vector<4x64xf32>
    %cst_24 = arith.constant 0.000000e+00 : f32
    %70 = vector.broadcast %cst_24 : f32 to vector<4x64xf32>
    %71 = arith.subf %70, %69 : vector<4x64xf32>
    %72 = math.exp %71 : vector<4x64xf32>
    %cst_25 = arith.constant 1.000000e+00 : f32
    %73 = vector.broadcast %cst_25 : f32 to vector<4x64xf32>
    %74 = arith.addf %73, %72 : vector<4x64xf32>
    %75 = tpu.reciprocal %74 {approx = true} : vector<4x64xf32> -> vector<4x64xf32>
    %76 = vector.extract_strided_slice %75 {offsets = [0, 0], sizes = [4, 32], strides = [1, 1]} : vector<4x64xf32> to vector<4x32xf32>
    %77 = vector.extract_strided_slice %75 {offsets = [0, 32], sizes = [4, 32], strides = [1, 1]} : vector<4x64xf32> to vector<4x32xf32>
    %78 = vector.extract_strided_slice %64 {offsets = [0, 64], sizes = [4, 32], strides = [1, 1]} : vector<4x96xf32> to vector<4x32xf32>
    %79 = vector.extract_strided_slice %66 {offsets = [0, 64], sizes = [4, 32], strides = [1, 1]} : vector<4x96xf32> to vector<4x32xf32>
    %80 = arith.addf %79, %10 : vector<4x32xf32>
    %81 = arith.mulf %76, %80 : vector<4x32xf32>
    %82 = arith.addf %78, %81 : vector<4x32xf32>
    %83 = math.tanh %82 : vector<4x32xf32>
    %cst_26 = arith.constant 1.000000e+00 : f32
    %84 = vector.broadcast %cst_26 : f32 to vector<4x32xf32>
    %85 = arith.subf %84, %77 : vector<4x32xf32>
    %86 = arith.mulf %85, %83 : vector<4x32xf32>
    %87 = arith.mulf %77, %40 : vector<4x32xf32>
    %88 = arith.addf %86, %87 : vector<4x32xf32>
    %cst_27 = arith.constant dense<0.000000e+00> : vector<4x96xf32>
    %89 = tpu.matmul %63, %7, %cst_27 {dimension_numbers = #tpu.dot_dimension_numbers<[1], [0], [0], [1], [0, 0, 1, 1], [], []>} : vector<4x32xf32>, vector<32x96xf32>, vector<4x96xf32> -> vector<4x96xf32>
    %90 = vector.extract_strided_slice %65 {offsets = [0, 0], sizes = [4, 64], strides = [1, 1]} : vector<4x96xf32> to vector<4x64xf32>
    %91 = vector.extract_strided_slice %89 {offsets = [0, 0], sizes = [4, 64], strides = [1, 1]} : vector<4x96xf32> to vector<4x64xf32>
    %92 = arith.addf %90, %91 : vector<4x64xf32>
    %cst_28 = arith.constant 0.000000e+00 : f32
    %93 = vector.broadcast %cst_28 : f32 to vector<4x64xf32>
    %94 = arith.subf %93, %92 : vector<4x64xf32>
    %95 = math.exp %94 : vector<4x64xf32>
    %cst_29 = arith.constant 1.000000e+00 : f32
    %96 = vector.broadcast %cst_29 : f32 to vector<4x64xf32>
    %97 = arith.addf %96, %95 : vector<4x64xf32>
    %98 = tpu.reciprocal %97 {approx = true} : vector<4x64xf32> -> vector<4x64xf32>
    %99 = vector.extract_strided_slice %98 {offsets = [0, 0], sizes = [4, 32], strides = [1, 1]} : vector<4x64xf32> to vector<4x32xf32>
    %100 = vector.extract_strided_slice %98 {offsets = [0, 32], sizes = [4, 32], strides = [1, 1]} : vector<4x64xf32> to vector<4x32xf32>
    %101 = vector.extract_strided_slice %65 {offsets = [0, 64], sizes = [4, 32], strides = [1, 1]} : vector<4x96xf32> to vector<4x32xf32>
    %102 = vector.extract_strided_slice %89 {offsets = [0, 64], sizes = [4, 32], strides = [1, 1]} : vector<4x96xf32> to vector<4x32xf32>
    %103 = arith.addf %102, %13 : vector<4x32xf32>
    %104 = arith.mulf %99, %103 : vector<4x32xf32>
    %105 = arith.addf %101, %104 : vector<4x32xf32>
    %106 = math.tanh %105 : vector<4x32xf32>
    %cst_30 = arith.constant 1.000000e+00 : f32
    %107 = vector.broadcast %cst_30 : f32 to vector<4x32xf32>
    %108 = arith.subf %107, %100 : vector<4x32xf32>
    %109 = arith.mulf %108, %106 : vector<4x32xf32>
    %110 = arith.mulf %100, %63 : vector<4x32xf32>
    %111 = arith.addf %109, %110 : vector<4x32xf32>
    %112 = vector.extract_strided_slice %5 {offsets = [8, 0], sizes = [4, 96], strides = [1, 1]} : vector<32x192xf32> to vector<4x96xf32>
    %113 = vector.extract_strided_slice %5 {offsets = [20, 96], sizes = [4, 96], strides = [1, 1]} : vector<32x192xf32> to vector<4x96xf32>
    %cst_31 = arith.constant dense<0.000000e+00> : vector<4x96xf32>
    %114 = tpu.matmul %88, %6, %cst_31 {dimension_numbers = #tpu.dot_dimension_numbers<[1], [0], [0], [1], [0, 0, 1, 1], [], []>} : vector<4x32xf32>, vector<32x96xf32>, vector<4x96xf32> -> vector<4x96xf32>
    %115 = vector.extract_strided_slice %112 {offsets = [0, 0], sizes = [4, 64], strides = [1, 1]} : vector<4x96xf32> to vector<4x64xf32>
    %116 = vector.extract_strided_slice %114 {offsets = [0, 0], sizes = [4, 64], strides = [1, 1]} : vector<4x96xf32> to vector<4x64xf32>
    %117 = arith.addf %115, %116 : vector<4x64xf32>
    %cst_32 = arith.constant 0.000000e+00 : f32
    %118 = vector.broadcast %cst_32 : f32 to vector<4x64xf32>
    %119 = arith.subf %118, %117 : vector<4x64xf32>
    %120 = math.exp %119 : vector<4x64xf32>
    %cst_33 = arith.constant 1.000000e+00 : f32
    %121 = vector.broadcast %cst_33 : f32 to vector<4x64xf32>
    %122 = arith.addf %121, %120 : vector<4x64xf32>
    %123 = tpu.reciprocal %122 {approx = true} : vector<4x64xf32> -> vector<4x64xf32>
    %124 = vector.extract_strided_slice %123 {offsets = [0, 0], sizes = [4, 32], strides = [1, 1]} : vector<4x64xf32> to vector<4x32xf32>
    %125 = vector.extract_strided_slice %123 {offsets = [0, 32], sizes = [4, 32], strides = [1, 1]} : vector<4x64xf32> to vector<4x32xf32>
    %126 = vector.extract_strided_slice %112 {offsets = [0, 64], sizes = [4, 32], strides = [1, 1]} : vector<4x96xf32> to vector<4x32xf32>
    %127 = vector.extract_strided_slice %114 {offsets = [0, 64], sizes = [4, 32], strides = [1, 1]} : vector<4x96xf32> to vector<4x32xf32>
    %128 = arith.addf %127, %10 : vector<4x32xf32>
    %129 = arith.mulf %124, %128 : vector<4x32xf32>
    %130 = arith.addf %126, %129 : vector<4x32xf32>
    %131 = math.tanh %130 : vector<4x32xf32>
    %cst_34 = arith.constant 1.000000e+00 : f32
    %132 = vector.broadcast %cst_34 : f32 to vector<4x32xf32>
    %133 = arith.subf %132, %125 : vector<4x32xf32>
    %134 = arith.mulf %133, %131 : vector<4x32xf32>
    %135 = arith.mulf %125, %88 : vector<4x32xf32>
    %136 = arith.addf %134, %135 : vector<4x32xf32>
    %cst_35 = arith.constant dense<0.000000e+00> : vector<4x96xf32>
    %137 = tpu.matmul %111, %7, %cst_35 {dimension_numbers = #tpu.dot_dimension_numbers<[1], [0], [0], [1], [0, 0, 1, 1], [], []>} : vector<4x32xf32>, vector<32x96xf32>, vector<4x96xf32> -> vector<4x96xf32>
    %138 = vector.extract_strided_slice %113 {offsets = [0, 0], sizes = [4, 64], strides = [1, 1]} : vector<4x96xf32> to vector<4x64xf32>
    %139 = vector.extract_strided_slice %137 {offsets = [0, 0], sizes = [4, 64], strides = [1, 1]} : vector<4x96xf32> to vector<4x64xf32>
    %140 = arith.addf %138, %139 : vector<4x64xf32>
    %cst_36 = arith.constant 0.000000e+00 : f32
    %141 = vector.broadcast %cst_36 : f32 to vector<4x64xf32>
    %142 = arith.subf %141, %140 : vector<4x64xf32>
    %143 = math.exp %142 : vector<4x64xf32>
    %cst_37 = arith.constant 1.000000e+00 : f32
    %144 = vector.broadcast %cst_37 : f32 to vector<4x64xf32>
    %145 = arith.addf %144, %143 : vector<4x64xf32>
    %146 = tpu.reciprocal %145 {approx = true} : vector<4x64xf32> -> vector<4x64xf32>
    %147 = vector.extract_strided_slice %146 {offsets = [0, 0], sizes = [4, 32], strides = [1, 1]} : vector<4x64xf32> to vector<4x32xf32>
    %148 = vector.extract_strided_slice %146 {offsets = [0, 32], sizes = [4, 32], strides = [1, 1]} : vector<4x64xf32> to vector<4x32xf32>
    %149 = vector.extract_strided_slice %113 {offsets = [0, 64], sizes = [4, 32], strides = [1, 1]} : vector<4x96xf32> to vector<4x32xf32>
    %150 = vector.extract_strided_slice %137 {offsets = [0, 64], sizes = [4, 32], strides = [1, 1]} : vector<4x96xf32> to vector<4x32xf32>
    %151 = arith.addf %150, %13 : vector<4x32xf32>
    %152 = arith.mulf %147, %151 : vector<4x32xf32>
    %153 = arith.addf %149, %152 : vector<4x32xf32>
    %154 = math.tanh %153 : vector<4x32xf32>
    %cst_38 = arith.constant 1.000000e+00 : f32
    %155 = vector.broadcast %cst_38 : f32 to vector<4x32xf32>
    %156 = arith.subf %155, %148 : vector<4x32xf32>
    %157 = arith.mulf %156, %154 : vector<4x32xf32>
    %158 = arith.mulf %148, %111 : vector<4x32xf32>
    %159 = arith.addf %157, %158 : vector<4x32xf32>
    %160 = vector.extract_strided_slice %5 {offsets = [12, 0], sizes = [4, 96], strides = [1, 1]} : vector<32x192xf32> to vector<4x96xf32>
    %161 = vector.extract_strided_slice %5 {offsets = [16, 96], sizes = [4, 96], strides = [1, 1]} : vector<32x192xf32> to vector<4x96xf32>
    %cst_39 = arith.constant dense<0.000000e+00> : vector<4x96xf32>
    %162 = tpu.matmul %136, %6, %cst_39 {dimension_numbers = #tpu.dot_dimension_numbers<[1], [0], [0], [1], [0, 0, 1, 1], [], []>} : vector<4x32xf32>, vector<32x96xf32>, vector<4x96xf32> -> vector<4x96xf32>
    %163 = vector.extract_strided_slice %160 {offsets = [0, 0], sizes = [4, 64], strides = [1, 1]} : vector<4x96xf32> to vector<4x64xf32>
    %164 = vector.extract_strided_slice %162 {offsets = [0, 0], sizes = [4, 64], strides = [1, 1]} : vector<4x96xf32> to vector<4x64xf32>
    %165 = arith.addf %163, %164 : vector<4x64xf32>
    %cst_40 = arith.constant 0.000000e+00 : f32
    %166 = vector.broadcast %cst_40 : f32 to vector<4x64xf32>
    %167 = arith.subf %166, %165 : vector<4x64xf32>
    %168 = math.exp %167 : vector<4x64xf32>
    %cst_41 = arith.constant 1.000000e+00 : f32
    %169 = vector.broadcast %cst_41 : f32 to vector<4x64xf32>
    %170 = arith.addf %169, %168 : vector<4x64xf32>
    %171 = tpu.reciprocal %170 {approx = true} : vector<4x64xf32> -> vector<4x64xf32>
    %172 = vector.extract_strided_slice %171 {offsets = [0, 0], sizes = [4, 32], strides = [1, 1]} : vector<4x64xf32> to vector<4x32xf32>
    %173 = vector.extract_strided_slice %171 {offsets = [0, 32], sizes = [4, 32], strides = [1, 1]} : vector<4x64xf32> to vector<4x32xf32>
    %174 = vector.extract_strided_slice %160 {offsets = [0, 64], sizes = [4, 32], strides = [1, 1]} : vector<4x96xf32> to vector<4x32xf32>
    %175 = vector.extract_strided_slice %162 {offsets = [0, 64], sizes = [4, 32], strides = [1, 1]} : vector<4x96xf32> to vector<4x32xf32>
    %176 = arith.addf %175, %10 : vector<4x32xf32>
    %177 = arith.mulf %172, %176 : vector<4x32xf32>
    %178 = arith.addf %174, %177 : vector<4x32xf32>
    %179 = math.tanh %178 : vector<4x32xf32>
    %cst_42 = arith.constant 1.000000e+00 : f32
    %180 = vector.broadcast %cst_42 : f32 to vector<4x32xf32>
    %181 = arith.subf %180, %173 : vector<4x32xf32>
    %182 = arith.mulf %181, %179 : vector<4x32xf32>
    %183 = arith.mulf %173, %136 : vector<4x32xf32>
    %184 = arith.addf %182, %183 : vector<4x32xf32>
    %cst_43 = arith.constant dense<0.000000e+00> : vector<4x96xf32>
    %185 = tpu.matmul %159, %7, %cst_43 {dimension_numbers = #tpu.dot_dimension_numbers<[1], [0], [0], [1], [0, 0, 1, 1], [], []>} : vector<4x32xf32>, vector<32x96xf32>, vector<4x96xf32> -> vector<4x96xf32>
    %186 = vector.extract_strided_slice %161 {offsets = [0, 0], sizes = [4, 64], strides = [1, 1]} : vector<4x96xf32> to vector<4x64xf32>
    %187 = vector.extract_strided_slice %185 {offsets = [0, 0], sizes = [4, 64], strides = [1, 1]} : vector<4x96xf32> to vector<4x64xf32>
    %188 = arith.addf %186, %187 : vector<4x64xf32>
    %cst_44 = arith.constant 0.000000e+00 : f32
    %189 = vector.broadcast %cst_44 : f32 to vector<4x64xf32>
    %190 = arith.subf %189, %188 : vector<4x64xf32>
    %191 = math.exp %190 : vector<4x64xf32>
    %cst_45 = arith.constant 1.000000e+00 : f32
    %192 = vector.broadcast %cst_45 : f32 to vector<4x64xf32>
    %193 = arith.addf %192, %191 : vector<4x64xf32>
    %194 = tpu.reciprocal %193 {approx = true} : vector<4x64xf32> -> vector<4x64xf32>
    %195 = vector.extract_strided_slice %194 {offsets = [0, 0], sizes = [4, 32], strides = [1, 1]} : vector<4x64xf32> to vector<4x32xf32>
    %196 = vector.extract_strided_slice %194 {offsets = [0, 32], sizes = [4, 32], strides = [1, 1]} : vector<4x64xf32> to vector<4x32xf32>
    %197 = vector.extract_strided_slice %161 {offsets = [0, 64], sizes = [4, 32], strides = [1, 1]} : vector<4x96xf32> to vector<4x32xf32>
    %198 = vector.extract_strided_slice %185 {offsets = [0, 64], sizes = [4, 32], strides = [1, 1]} : vector<4x96xf32> to vector<4x32xf32>
    %199 = arith.addf %198, %13 : vector<4x32xf32>
    %200 = arith.mulf %195, %199 : vector<4x32xf32>
    %201 = arith.addf %197, %200 : vector<4x32xf32>
    %202 = math.tanh %201 : vector<4x32xf32>
    %cst_46 = arith.constant 1.000000e+00 : f32
    %203 = vector.broadcast %cst_46 : f32 to vector<4x32xf32>
    %204 = arith.subf %203, %196 : vector<4x32xf32>
    %205 = arith.mulf %204, %202 : vector<4x32xf32>
    %206 = arith.mulf %196, %159 : vector<4x32xf32>
    %207 = arith.addf %205, %206 : vector<4x32xf32>
    %208 = vector.extract_strided_slice %5 {offsets = [16, 0], sizes = [4, 96], strides = [1, 1]} : vector<32x192xf32> to vector<4x96xf32>
    %209 = vector.extract_strided_slice %5 {offsets = [12, 96], sizes = [4, 96], strides = [1, 1]} : vector<32x192xf32> to vector<4x96xf32>
    %cst_47 = arith.constant dense<0.000000e+00> : vector<4x96xf32>
    %210 = tpu.matmul %184, %6, %cst_47 {dimension_numbers = #tpu.dot_dimension_numbers<[1], [0], [0], [1], [0, 0, 1, 1], [], []>} : vector<4x32xf32>, vector<32x96xf32>, vector<4x96xf32> -> vector<4x96xf32>
    %211 = vector.extract_strided_slice %208 {offsets = [0, 0], sizes = [4, 64], strides = [1, 1]} : vector<4x96xf32> to vector<4x64xf32>
    %212 = vector.extract_strided_slice %210 {offsets = [0, 0], sizes = [4, 64], strides = [1, 1]} : vector<4x96xf32> to vector<4x64xf32>
    %213 = arith.addf %211, %212 : vector<4x64xf32>
    %cst_48 = arith.constant 0.000000e+00 : f32
    %214 = vector.broadcast %cst_48 : f32 to vector<4x64xf32>
    %215 = arith.subf %214, %213 : vector<4x64xf32>
    %216 = math.exp %215 : vector<4x64xf32>
    %cst_49 = arith.constant 1.000000e+00 : f32
    %217 = vector.broadcast %cst_49 : f32 to vector<4x64xf32>
    %218 = arith.addf %217, %216 : vector<4x64xf32>
    %219 = tpu.reciprocal %218 {approx = true} : vector<4x64xf32> -> vector<4x64xf32>
    %220 = vector.extract_strided_slice %219 {offsets = [0, 0], sizes = [4, 32], strides = [1, 1]} : vector<4x64xf32> to vector<4x32xf32>
    %221 = vector.extract_strided_slice %219 {offsets = [0, 32], sizes = [4, 32], strides = [1, 1]} : vector<4x64xf32> to vector<4x32xf32>
    %222 = vector.extract_strided_slice %208 {offsets = [0, 64], sizes = [4, 32], strides = [1, 1]} : vector<4x96xf32> to vector<4x32xf32>
    %223 = vector.extract_strided_slice %210 {offsets = [0, 64], sizes = [4, 32], strides = [1, 1]} : vector<4x96xf32> to vector<4x32xf32>
    %224 = arith.addf %223, %10 : vector<4x32xf32>
    %225 = arith.mulf %220, %224 : vector<4x32xf32>
    %226 = arith.addf %222, %225 : vector<4x32xf32>
    %227 = math.tanh %226 : vector<4x32xf32>
    %cst_50 = arith.constant 1.000000e+00 : f32
    %228 = vector.broadcast %cst_50 : f32 to vector<4x32xf32>
    %229 = arith.subf %228, %221 : vector<4x32xf32>
    %230 = arith.mulf %229, %227 : vector<4x32xf32>
    %231 = arith.mulf %221, %184 : vector<4x32xf32>
    %232 = arith.addf %230, %231 : vector<4x32xf32>
    %cst_51 = arith.constant dense<0.000000e+00> : vector<4x96xf32>
    %233 = tpu.matmul %207, %7, %cst_51 {dimension_numbers = #tpu.dot_dimension_numbers<[1], [0], [0], [1], [0, 0, 1, 1], [], []>} : vector<4x32xf32>, vector<32x96xf32>, vector<4x96xf32> -> vector<4x96xf32>
    %234 = vector.extract_strided_slice %209 {offsets = [0, 0], sizes = [4, 64], strides = [1, 1]} : vector<4x96xf32> to vector<4x64xf32>
    %235 = vector.extract_strided_slice %233 {offsets = [0, 0], sizes = [4, 64], strides = [1, 1]} : vector<4x96xf32> to vector<4x64xf32>
    %236 = arith.addf %234, %235 : vector<4x64xf32>
    %cst_52 = arith.constant 0.000000e+00 : f32
    %237 = vector.broadcast %cst_52 : f32 to vector<4x64xf32>
    %238 = arith.subf %237, %236 : vector<4x64xf32>
    %239 = math.exp %238 : vector<4x64xf32>
    %cst_53 = arith.constant 1.000000e+00 : f32
    %240 = vector.broadcast %cst_53 : f32 to vector<4x64xf32>
    %241 = arith.addf %240, %239 : vector<4x64xf32>
    %242 = tpu.reciprocal %241 {approx = true} : vector<4x64xf32> -> vector<4x64xf32>
    %243 = vector.extract_strided_slice %242 {offsets = [0, 0], sizes = [4, 32], strides = [1, 1]} : vector<4x64xf32> to vector<4x32xf32>
    %244 = vector.extract_strided_slice %242 {offsets = [0, 32], sizes = [4, 32], strides = [1, 1]} : vector<4x64xf32> to vector<4x32xf32>
    %245 = vector.extract_strided_slice %209 {offsets = [0, 64], sizes = [4, 32], strides = [1, 1]} : vector<4x96xf32> to vector<4x32xf32>
    %246 = vector.extract_strided_slice %233 {offsets = [0, 64], sizes = [4, 32], strides = [1, 1]} : vector<4x96xf32> to vector<4x32xf32>
    %247 = arith.addf %246, %13 : vector<4x32xf32>
    %248 = arith.mulf %243, %247 : vector<4x32xf32>
    %249 = arith.addf %245, %248 : vector<4x32xf32>
    %250 = math.tanh %249 : vector<4x32xf32>
    %cst_54 = arith.constant 1.000000e+00 : f32
    %251 = vector.broadcast %cst_54 : f32 to vector<4x32xf32>
    %252 = arith.subf %251, %244 : vector<4x32xf32>
    %253 = arith.mulf %252, %250 : vector<4x32xf32>
    %254 = arith.mulf %244, %207 : vector<4x32xf32>
    %255 = arith.addf %253, %254 : vector<4x32xf32>
    %256 = vector.extract_strided_slice %5 {offsets = [20, 0], sizes = [4, 96], strides = [1, 1]} : vector<32x192xf32> to vector<4x96xf32>
    %257 = vector.extract_strided_slice %5 {offsets = [8, 96], sizes = [4, 96], strides = [1, 1]} : vector<32x192xf32> to vector<4x96xf32>
    %cst_55 = arith.constant dense<0.000000e+00> : vector<4x96xf32>
    %258 = tpu.matmul %232, %6, %cst_55 {dimension_numbers = #tpu.dot_dimension_numbers<[1], [0], [0], [1], [0, 0, 1, 1], [], []>} : vector<4x32xf32>, vector<32x96xf32>, vector<4x96xf32> -> vector<4x96xf32>
    %259 = vector.extract_strided_slice %256 {offsets = [0, 0], sizes = [4, 64], strides = [1, 1]} : vector<4x96xf32> to vector<4x64xf32>
    %260 = vector.extract_strided_slice %258 {offsets = [0, 0], sizes = [4, 64], strides = [1, 1]} : vector<4x96xf32> to vector<4x64xf32>
    %261 = arith.addf %259, %260 : vector<4x64xf32>
    %cst_56 = arith.constant 0.000000e+00 : f32
    %262 = vector.broadcast %cst_56 : f32 to vector<4x64xf32>
    %263 = arith.subf %262, %261 : vector<4x64xf32>
    %264 = math.exp %263 : vector<4x64xf32>
    %cst_57 = arith.constant 1.000000e+00 : f32
    %265 = vector.broadcast %cst_57 : f32 to vector<4x64xf32>
    %266 = arith.addf %265, %264 : vector<4x64xf32>
    %267 = tpu.reciprocal %266 {approx = true} : vector<4x64xf32> -> vector<4x64xf32>
    %268 = vector.extract_strided_slice %267 {offsets = [0, 0], sizes = [4, 32], strides = [1, 1]} : vector<4x64xf32> to vector<4x32xf32>
    %269 = vector.extract_strided_slice %267 {offsets = [0, 32], sizes = [4, 32], strides = [1, 1]} : vector<4x64xf32> to vector<4x32xf32>
    %270 = vector.extract_strided_slice %256 {offsets = [0, 64], sizes = [4, 32], strides = [1, 1]} : vector<4x96xf32> to vector<4x32xf32>
    %271 = vector.extract_strided_slice %258 {offsets = [0, 64], sizes = [4, 32], strides = [1, 1]} : vector<4x96xf32> to vector<4x32xf32>
    %272 = arith.addf %271, %10 : vector<4x32xf32>
    %273 = arith.mulf %268, %272 : vector<4x32xf32>
    %274 = arith.addf %270, %273 : vector<4x32xf32>
    %275 = math.tanh %274 : vector<4x32xf32>
    %cst_58 = arith.constant 1.000000e+00 : f32
    %276 = vector.broadcast %cst_58 : f32 to vector<4x32xf32>
    %277 = arith.subf %276, %269 : vector<4x32xf32>
    %278 = arith.mulf %277, %275 : vector<4x32xf32>
    %279 = arith.mulf %269, %232 : vector<4x32xf32>
    %280 = arith.addf %278, %279 : vector<4x32xf32>
    %cst_59 = arith.constant dense<0.000000e+00> : vector<4x96xf32>
    %281 = tpu.matmul %255, %7, %cst_59 {dimension_numbers = #tpu.dot_dimension_numbers<[1], [0], [0], [1], [0, 0, 1, 1], [], []>} : vector<4x32xf32>, vector<32x96xf32>, vector<4x96xf32> -> vector<4x96xf32>
    %282 = vector.extract_strided_slice %257 {offsets = [0, 0], sizes = [4, 64], strides = [1, 1]} : vector<4x96xf32> to vector<4x64xf32>
    %283 = vector.extract_strided_slice %281 {offsets = [0, 0], sizes = [4, 64], strides = [1, 1]} : vector<4x96xf32> to vector<4x64xf32>
    %284 = arith.addf %282, %283 : vector<4x64xf32>
    %cst_60 = arith.constant 0.000000e+00 : f32
    %285 = vector.broadcast %cst_60 : f32 to vector<4x64xf32>
    %286 = arith.subf %285, %284 : vector<4x64xf32>
    %287 = math.exp %286 : vector<4x64xf32>
    %cst_61 = arith.constant 1.000000e+00 : f32
    %288 = vector.broadcast %cst_61 : f32 to vector<4x64xf32>
    %289 = arith.addf %288, %287 : vector<4x64xf32>
    %290 = tpu.reciprocal %289 {approx = true} : vector<4x64xf32> -> vector<4x64xf32>
    %291 = vector.extract_strided_slice %290 {offsets = [0, 0], sizes = [4, 32], strides = [1, 1]} : vector<4x64xf32> to vector<4x32xf32>
    %292 = vector.extract_strided_slice %290 {offsets = [0, 32], sizes = [4, 32], strides = [1, 1]} : vector<4x64xf32> to vector<4x32xf32>
    %293 = vector.extract_strided_slice %257 {offsets = [0, 64], sizes = [4, 32], strides = [1, 1]} : vector<4x96xf32> to vector<4x32xf32>
    %294 = vector.extract_strided_slice %281 {offsets = [0, 64], sizes = [4, 32], strides = [1, 1]} : vector<4x96xf32> to vector<4x32xf32>
    %295 = arith.addf %294, %13 : vector<4x32xf32>
    %296 = arith.mulf %291, %295 : vector<4x32xf32>
    %297 = arith.addf %293, %296 : vector<4x32xf32>
    %298 = math.tanh %297 : vector<4x32xf32>
    %cst_62 = arith.constant 1.000000e+00 : f32
    %299 = vector.broadcast %cst_62 : f32 to vector<4x32xf32>
    %300 = arith.subf %299, %292 : vector<4x32xf32>
    %301 = arith.mulf %300, %298 : vector<4x32xf32>
    %302 = arith.mulf %292, %255 : vector<4x32xf32>
    %303 = arith.addf %301, %302 : vector<4x32xf32>
    %304 = vector.extract_strided_slice %5 {offsets = [24, 0], sizes = [4, 96], strides = [1, 1]} : vector<32x192xf32> to vector<4x96xf32>
    %305 = vector.extract_strided_slice %5 {offsets = [4, 96], sizes = [4, 96], strides = [1, 1]} : vector<32x192xf32> to vector<4x96xf32>
    %cst_63 = arith.constant dense<0.000000e+00> : vector<4x96xf32>
    %306 = tpu.matmul %280, %6, %cst_63 {dimension_numbers = #tpu.dot_dimension_numbers<[1], [0], [0], [1], [0, 0, 1, 1], [], []>} : vector<4x32xf32>, vector<32x96xf32>, vector<4x96xf32> -> vector<4x96xf32>
    %307 = vector.extract_strided_slice %304 {offsets = [0, 0], sizes = [4, 64], strides = [1, 1]} : vector<4x96xf32> to vector<4x64xf32>
    %308 = vector.extract_strided_slice %306 {offsets = [0, 0], sizes = [4, 64], strides = [1, 1]} : vector<4x96xf32> to vector<4x64xf32>
    %309 = arith.addf %307, %308 : vector<4x64xf32>
    %cst_64 = arith.constant 0.000000e+00 : f32
    %310 = vector.broadcast %cst_64 : f32 to vector<4x64xf32>
    %311 = arith.subf %310, %309 : vector<4x64xf32>
    %312 = math.exp %311 : vector<4x64xf32>
    %cst_65 = arith.constant 1.000000e+00 : f32
    %313 = vector.broadcast %cst_65 : f32 to vector<4x64xf32>
    %314 = arith.addf %313, %312 : vector<4x64xf32>
    %315 = tpu.reciprocal %314 {approx = true} : vector<4x64xf32> -> vector<4x64xf32>
    %316 = vector.extract_strided_slice %315 {offsets = [0, 0], sizes = [4, 32], strides = [1, 1]} : vector<4x64xf32> to vector<4x32xf32>
    %317 = vector.extract_strided_slice %315 {offsets = [0, 32], sizes = [4, 32], strides = [1, 1]} : vector<4x64xf32> to vector<4x32xf32>
    %318 = vector.extract_strided_slice %304 {offsets = [0, 64], sizes = [4, 32], strides = [1, 1]} : vector<4x96xf32> to vector<4x32xf32>
    %319 = vector.extract_strided_slice %306 {offsets = [0, 64], sizes = [4, 32], strides = [1, 1]} : vector<4x96xf32> to vector<4x32xf32>
    %320 = arith.addf %319, %10 : vector<4x32xf32>
    %321 = arith.mulf %316, %320 : vector<4x32xf32>
    %322 = arith.addf %318, %321 : vector<4x32xf32>
    %323 = math.tanh %322 : vector<4x32xf32>
    %cst_66 = arith.constant 1.000000e+00 : f32
    %324 = vector.broadcast %cst_66 : f32 to vector<4x32xf32>
    %325 = arith.subf %324, %317 : vector<4x32xf32>
    %326 = arith.mulf %325, %323 : vector<4x32xf32>
    %327 = arith.mulf %317, %280 : vector<4x32xf32>
    %328 = arith.addf %326, %327 : vector<4x32xf32>
    %cst_67 = arith.constant dense<0.000000e+00> : vector<4x96xf32>
    %329 = tpu.matmul %303, %7, %cst_67 {dimension_numbers = #tpu.dot_dimension_numbers<[1], [0], [0], [1], [0, 0, 1, 1], [], []>} : vector<4x32xf32>, vector<32x96xf32>, vector<4x96xf32> -> vector<4x96xf32>
    %330 = vector.extract_strided_slice %305 {offsets = [0, 0], sizes = [4, 64], strides = [1, 1]} : vector<4x96xf32> to vector<4x64xf32>
    %331 = vector.extract_strided_slice %329 {offsets = [0, 0], sizes = [4, 64], strides = [1, 1]} : vector<4x96xf32> to vector<4x64xf32>
    %332 = arith.addf %330, %331 : vector<4x64xf32>
    %cst_68 = arith.constant 0.000000e+00 : f32
    %333 = vector.broadcast %cst_68 : f32 to vector<4x64xf32>
    %334 = arith.subf %333, %332 : vector<4x64xf32>
    %335 = math.exp %334 : vector<4x64xf32>
    %cst_69 = arith.constant 1.000000e+00 : f32
    %336 = vector.broadcast %cst_69 : f32 to vector<4x64xf32>
    %337 = arith.addf %336, %335 : vector<4x64xf32>
    %338 = tpu.reciprocal %337 {approx = true} : vector<4x64xf32> -> vector<4x64xf32>
    %339 = vector.extract_strided_slice %338 {offsets = [0, 0], sizes = [4, 32], strides = [1, 1]} : vector<4x64xf32> to vector<4x32xf32>
    %340 = vector.extract_strided_slice %338 {offsets = [0, 32], sizes = [4, 32], strides = [1, 1]} : vector<4x64xf32> to vector<4x32xf32>
    %341 = vector.extract_strided_slice %305 {offsets = [0, 64], sizes = [4, 32], strides = [1, 1]} : vector<4x96xf32> to vector<4x32xf32>
    %342 = vector.extract_strided_slice %329 {offsets = [0, 64], sizes = [4, 32], strides = [1, 1]} : vector<4x96xf32> to vector<4x32xf32>
    %343 = arith.addf %342, %13 : vector<4x32xf32>
    %344 = arith.mulf %339, %343 : vector<4x32xf32>
    %345 = arith.addf %341, %344 : vector<4x32xf32>
    %346 = math.tanh %345 : vector<4x32xf32>
    %cst_70 = arith.constant 1.000000e+00 : f32
    %347 = vector.broadcast %cst_70 : f32 to vector<4x32xf32>
    %348 = arith.subf %347, %340 : vector<4x32xf32>
    %349 = arith.mulf %348, %346 : vector<4x32xf32>
    %350 = arith.mulf %340, %303 : vector<4x32xf32>
    %351 = arith.addf %349, %350 : vector<4x32xf32>
    %352 = vector.extract_strided_slice %5 {offsets = [28, 0], sizes = [4, 96], strides = [1, 1]} : vector<32x192xf32> to vector<4x96xf32>
    %353 = vector.extract_strided_slice %5 {offsets = [0, 96], sizes = [4, 96], strides = [1, 1]} : vector<32x192xf32> to vector<4x96xf32>
    %cst_71 = arith.constant dense<0.000000e+00> : vector<4x96xf32>
    %354 = tpu.matmul %328, %6, %cst_71 {dimension_numbers = #tpu.dot_dimension_numbers<[1], [0], [0], [1], [0, 0, 1, 1], [], []>} : vector<4x32xf32>, vector<32x96xf32>, vector<4x96xf32> -> vector<4x96xf32>
    %355 = vector.extract_strided_slice %352 {offsets = [0, 0], sizes = [4, 64], strides = [1, 1]} : vector<4x96xf32> to vector<4x64xf32>
    %356 = vector.extract_strided_slice %354 {offsets = [0, 0], sizes = [4, 64], strides = [1, 1]} : vector<4x96xf32> to vector<4x64xf32>
    %357 = arith.addf %355, %356 : vector<4x64xf32>
    %cst_72 = arith.constant 0.000000e+00 : f32
    %358 = vector.broadcast %cst_72 : f32 to vector<4x64xf32>
    %359 = arith.subf %358, %357 : vector<4x64xf32>
    %360 = math.exp %359 : vector<4x64xf32>
    %cst_73 = arith.constant 1.000000e+00 : f32
    %361 = vector.broadcast %cst_73 : f32 to vector<4x64xf32>
    %362 = arith.addf %361, %360 : vector<4x64xf32>
    %363 = tpu.reciprocal %362 {approx = true} : vector<4x64xf32> -> vector<4x64xf32>
    %364 = vector.extract_strided_slice %363 {offsets = [0, 0], sizes = [4, 32], strides = [1, 1]} : vector<4x64xf32> to vector<4x32xf32>
    %365 = vector.extract_strided_slice %363 {offsets = [0, 32], sizes = [4, 32], strides = [1, 1]} : vector<4x64xf32> to vector<4x32xf32>
    %366 = vector.extract_strided_slice %352 {offsets = [0, 64], sizes = [4, 32], strides = [1, 1]} : vector<4x96xf32> to vector<4x32xf32>
    %367 = vector.extract_strided_slice %354 {offsets = [0, 64], sizes = [4, 32], strides = [1, 1]} : vector<4x96xf32> to vector<4x32xf32>
    %368 = arith.addf %367, %10 : vector<4x32xf32>
    %369 = arith.mulf %364, %368 : vector<4x32xf32>
    %370 = arith.addf %366, %369 : vector<4x32xf32>
    %371 = math.tanh %370 : vector<4x32xf32>
    %cst_74 = arith.constant 1.000000e+00 : f32
    %372 = vector.broadcast %cst_74 : f32 to vector<4x32xf32>
    %373 = arith.subf %372, %365 : vector<4x32xf32>
    %374 = arith.mulf %373, %371 : vector<4x32xf32>
    %375 = arith.mulf %365, %328 : vector<4x32xf32>
    %376 = arith.addf %374, %375 : vector<4x32xf32>
    %cst_75 = arith.constant dense<0.000000e+00> : vector<4x96xf32>
    %377 = tpu.matmul %351, %7, %cst_75 {dimension_numbers = #tpu.dot_dimension_numbers<[1], [0], [0], [1], [0, 0, 1, 1], [], []>} : vector<4x32xf32>, vector<32x96xf32>, vector<4x96xf32> -> vector<4x96xf32>
    %378 = vector.extract_strided_slice %353 {offsets = [0, 0], sizes = [4, 64], strides = [1, 1]} : vector<4x96xf32> to vector<4x64xf32>
    %379 = vector.extract_strided_slice %377 {offsets = [0, 0], sizes = [4, 64], strides = [1, 1]} : vector<4x96xf32> to vector<4x64xf32>
    %380 = arith.addf %378, %379 : vector<4x64xf32>
    %cst_76 = arith.constant 0.000000e+00 : f32
    %381 = vector.broadcast %cst_76 : f32 to vector<4x64xf32>
    %382 = arith.subf %381, %380 : vector<4x64xf32>
    %383 = math.exp %382 : vector<4x64xf32>
    %cst_77 = arith.constant 1.000000e+00 : f32
    %384 = vector.broadcast %cst_77 : f32 to vector<4x64xf32>
    %385 = arith.addf %384, %383 : vector<4x64xf32>
    %386 = tpu.reciprocal %385 {approx = true} : vector<4x64xf32> -> vector<4x64xf32>
    %387 = vector.extract_strided_slice %386 {offsets = [0, 0], sizes = [4, 32], strides = [1, 1]} : vector<4x64xf32> to vector<4x32xf32>
    %388 = vector.extract_strided_slice %386 {offsets = [0, 32], sizes = [4, 32], strides = [1, 1]} : vector<4x64xf32> to vector<4x32xf32>
    %389 = vector.extract_strided_slice %353 {offsets = [0, 64], sizes = [4, 32], strides = [1, 1]} : vector<4x96xf32> to vector<4x32xf32>
    %390 = vector.extract_strided_slice %377 {offsets = [0, 64], sizes = [4, 32], strides = [1, 1]} : vector<4x96xf32> to vector<4x32xf32>
    %391 = arith.addf %390, %13 : vector<4x32xf32>
    %392 = arith.mulf %387, %391 : vector<4x32xf32>
    %393 = arith.addf %389, %392 : vector<4x32xf32>
    %394 = math.tanh %393 : vector<4x32xf32>
    %cst_78 = arith.constant 1.000000e+00 : f32
    %395 = vector.broadcast %cst_78 : f32 to vector<4x32xf32>
    %396 = arith.subf %395, %388 : vector<4x32xf32>
    %397 = arith.mulf %396, %394 : vector<4x32xf32>
    %398 = arith.mulf %388, %351 : vector<4x32xf32>
    %399 = arith.addf %397, %398 : vector<4x32xf32>
    %400 = tpu.concatenate %376, %399 in 0 : vector<4x32xf32>, vector<4x32xf32> -> vector<8x32xf32>
    %c0_79 = arith.constant 0 : index
    %c0_80 = arith.constant 0 : index
    %401 = vector.load %arg8[%c0_79, %c0_80] : memref<32x128xf32, #tpu.memory_space<vmem>>, vector<32x128xf32>
    %cst_81 = arith.constant dense<0.000000e+00> : vector<8x128xf32>
    %402 = tpu.matmul %400, %401, %cst_81 {dimension_numbers = #tpu.dot_dimension_numbers<[1], [0], [0], [1], [0, 0, 1, 1], [], []>} : vector<8x32xf32>, vector<32x128xf32>, vector<8x128xf32> -> vector<8x128xf32>
    %c0_82 = arith.constant 0 : index
    %c0_83 = arith.constant 0 : index
    %403 = vector.load %arg9[%c0_82, %c0_83] : memref<32x128xf32, #tpu.memory_space<vmem>>, vector<32x128xf32>
    %cst_84 = arith.constant dense<0.000000e+00> : vector<8x128xf32>
    %404 = tpu.matmul %400, %403, %cst_84 {dimension_numbers = #tpu.dot_dimension_numbers<[1], [0], [0], [1], [0, 0, 1, 1], [], []>} : vector<8x32xf32>, vector<32x128xf32>, vector<8x128xf32> -> vector<8x128xf32>
    %405 = tpu.concatenate %402, %404 in 0 : vector<8x128xf32>, vector<8x128xf32> -> vector<16x128xf32>
    %c0_85 = arith.constant 0 : index
    %c0_86 = arith.constant 0 : index
    %406 = vector.load %arg7[%c0_85, %c0_86] : memref<4x16xf32, #tpu.memory_space<vmem>>, vector<4x16xf32>
    %cst_87 = arith.constant dense<0.000000e+00> : vector<4x128xf32>
    %407 = tpu.matmul %406, %405, %cst_87 {dimension_numbers = #tpu.dot_dimension_numbers<[1], [0], [0], [1], [0, 0, 1, 1], [], []>} : vector<4x16xf32>, vector<16x128xf32>, vector<4x128xf32> -> vector<4x128xf32>
    %c0_88 = arith.constant 0 : index
    %c0_89 = arith.constant 0 : index
    %408 = vector.load %arg10[%c0_88, %c0_89] : memref<1x128xf32, #tpu.memory_space<vmem>>, vector<1x128xf32>
    %409 = vector.broadcast %408 : vector<1x128xf32> to vector<4x128xf32>
    %410 = arith.addf %407, %409 : vector<4x128xf32>
    %cst_90 = arith.constant 0.000000e+00 : f32
    %411 = vector.broadcast %cst_90 : f32 to vector<4x128xf32>
    %412 = arith.cmpf ogt, %410, %411 : vector<4x128xf32>
    %413 = math.exp %410 : vector<4x128xf32>
    %cst_91 = arith.constant 1.000000e+00 : f32
    %414 = vector.broadcast %cst_91 : f32 to vector<4x128xf32>
    %415 = arith.subf %413, %414 : vector<4x128xf32>
    %cst_92 = arith.constant 1.67326319 : f32
    %416 = vector.broadcast %cst_92 : f32 to vector<4x128xf32>
    %417 = arith.mulf %416, %415 : vector<4x128xf32>
    %418 = arith.select %412, %410, %417 : vector<4x128xi1>, vector<4x128xf32>
    %cst_93 = arith.constant 1.05070102 : f32
    %419 = vector.broadcast %cst_93 : f32 to vector<4x128xf32>
    %420 = arith.mulf %419, %418 : vector<4x128xf32>
    %c0_94 = arith.constant 0 : index
    %c0_95 = arith.constant 0 : index
    %421 = vector.load %arg11[%c0_94, %c0_95] : memref<128x128xf32, #tpu.memory_space<vmem>>, vector<128x128xf32>
    %cst_96 = arith.constant dense<0.000000e+00> : vector<4x128xf32>
    %422 = tpu.matmul %420, %421, %cst_96 {dimension_numbers = #tpu.dot_dimension_numbers<[1], [0], [0], [1], [0, 0, 1, 1], [], []>} : vector<4x128xf32>, vector<128x128xf32>, vector<4x128xf32> -> vector<4x128xf32>
    %c0_97 = arith.constant 0 : index
    %c0_98 = arith.constant 0 : index
    %423 = vector.load %arg12[%c0_97, %c0_98] : memref<1x128xf32, #tpu.memory_space<vmem>>, vector<1x128xf32>
    %424 = vector.broadcast %423 : vector<1x128xf32> to vector<4x128xf32>
    %425 = arith.addf %422, %424 : vector<4x128xf32>
    %cst_99 = arith.constant 0.000000e+00 : f32
    %426 = vector.broadcast %cst_99 : f32 to vector<4x128xf32>
    %427 = arith.cmpf ogt, %425, %426 : vector<4x128xf32>
    %428 = math.exp %425 : vector<4x128xf32>
    %cst_100 = arith.constant 1.000000e+00 : f32
    %429 = vector.broadcast %cst_100 : f32 to vector<4x128xf32>
    %430 = arith.subf %428, %429 : vector<4x128xf32>
    %cst_101 = arith.constant 1.67326319 : f32
    %431 = vector.broadcast %cst_101 : f32 to vector<4x128xf32>
    %432 = arith.mulf %431, %430 : vector<4x128xf32>
    %433 = arith.select %427, %425, %432 : vector<4x128xi1>, vector<4x128xf32>
    %cst_102 = arith.constant 1.05070102 : f32
    %434 = vector.broadcast %cst_102 : f32 to vector<4x128xf32>
    %435 = arith.mulf %434, %433 : vector<4x128xf32>
    %c0_103 = arith.constant 0 : index
    %c0_104 = arith.constant 0 : index
    %436 = vector.load %arg13[%c0_103, %c0_104] : memref<128x128xf32, #tpu.memory_space<vmem>>, vector<128x128xf32>
    %cst_105 = arith.constant dense<0.000000e+00> : vector<4x128xf32>
    %437 = tpu.matmul %435, %436, %cst_105 {dimension_numbers = #tpu.dot_dimension_numbers<[1], [0], [0], [1], [0, 0, 1, 1], [], []>} : vector<4x128xf32>, vector<128x128xf32>, vector<4x128xf32> -> vector<4x128xf32>
    %c0_106 = arith.constant 0 : index
    %c0_107 = arith.constant 0 : index
    %438 = vector.load %arg14[%c0_106, %c0_107] : memref<1x128xf32, #tpu.memory_space<vmem>>, vector<1x128xf32>
    %439 = vector.broadcast %438 : vector<1x128xf32> to vector<4x128xf32>
    %440 = arith.addf %437, %439 : vector<4x128xf32>
    %cst_108 = arith.constant 0.000000e+00 : f32
    %441 = vector.broadcast %cst_108 : f32 to vector<4x128xf32>
    %442 = arith.cmpf ogt, %440, %441 : vector<4x128xf32>
    %443 = math.exp %440 : vector<4x128xf32>
    %cst_109 = arith.constant 1.000000e+00 : f32
    %444 = vector.broadcast %cst_109 : f32 to vector<4x128xf32>
    %445 = arith.subf %443, %444 : vector<4x128xf32>
    %cst_110 = arith.constant 1.67326319 : f32
    %446 = vector.broadcast %cst_110 : f32 to vector<4x128xf32>
    %447 = arith.mulf %446, %445 : vector<4x128xf32>
    %448 = arith.select %442, %440, %447 : vector<4x128xi1>, vector<4x128xf32>
    %cst_111 = arith.constant 1.05070102 : f32
    %449 = vector.broadcast %cst_111 : f32 to vector<4x128xf32>
    %450 = arith.mulf %449, %448 : vector<4x128xf32>
    %c0_112 = arith.constant 0 : index
    %c0_113 = arith.constant 0 : index
    %451 = vector.load %arg15[%c0_112, %c0_113] : memref<128x1xf32, #tpu.memory_space<vmem>>, vector<128x1xf32>
    %cst_114 = arith.constant dense<0.000000e+00> : vector<4x1xf32>
    %452 = tpu.matmul %450, %451, %cst_114 {dimension_numbers = #tpu.dot_dimension_numbers<[1], [0], [0], [1], [0, 0, 1, 1], [], []>} : vector<4x128xf32>, vector<128x1xf32>, vector<4x1xf32> -> vector<4x1xf32>
    %c0_115 = arith.constant 0 : index
    %c0_116 = arith.constant 0 : index
    %453 = vector.load %arg16[%c0_115, %c0_116] : memref<1x1xf32, #tpu.memory_space<vmem>>, vector<1x1xf32>
    %454 = vector.broadcast %453 : vector<1x1xf32> to vector<4x1xf32>
    %455 = arith.addf %452, %454 : vector<4x1xf32>
    %cst_117 = arith.constant 0.000000e+00 : f32
    %456 = vector.broadcast %cst_117 : f32 to vector<4x1xf32>
    %457 = arith.subf %456, %455 : vector<4x1xf32>
    %458 = math.exp %457 : vector<4x1xf32>
    %cst_118 = arith.constant 1.000000e+00 : f32
    %459 = vector.broadcast %cst_118 : f32 to vector<4x1xf32>
    %460 = arith.addf %459, %458 : vector<4x1xf32>
    %461 = tpu.reciprocal %460 {approx = true} : vector<4x1xf32> -> vector<4x1xf32>
    %c0_119 = arith.constant 0 : index
    %c0_120 = arith.constant 0 : index
    %462 = vector.load %arg17[%c0_119, %c0_120] : memref<4x1xf32, #tpu.memory_space<vmem>>, vector<4x1xf32>
    tpu.vector_store %arg17[%c0_119, %c0_120], %461 {strides = array<i32>} : memref<4x1xf32, #tpu.memory_space<vmem>>, vector<4x1xf32>,
    return
  }
}

</mosaic_0001>

<llo_original>
// kernel: discriminator_forward.1
$region0: #{discriminator_forward.1}
  #allocation0 [shape = 'u32[]', space=smem, size = 0x4, offset = 0x4, fixed_abs, tag = 'smem constant byte address 0x4 - core index']
  #allocation1 [shape = 'u32[144,128]{1,0:T(1,128)}', space=vmem, size = 0x12000, scoped, tag = 'internal scratch']
  #allocation2 [shape = 'f32[1,1]{1,0:T(1,128)S(1)}', space=vmem, size = 0x200, scoped, tag = 'scoped memory for discriminator_forward.1']
  %s0 = inlined_call_operand.hbm [shape: f32[32,16], index: 0, kind: input, shape index: {}]
  %s1 = inlined_call_operand.hbm [shape: f32[16,192], index: 1, kind: input, shape index: {}]
  %s2 = inlined_call_operand.hbm [shape: f32[1,192], index: 2, kind: input, shape index: {}]
  %s3 = inlined_call_operand.hbm [shape: f32[32,96], index: 3, kind: input, shape index: {}]
  %s4 = inlined_call_operand.hbm [shape: f32[32,96], index: 4, kind: input, shape index: {}]
  %s5 = inlined_call_operand.hbm [shape: f32[1,32], index: 5, kind: input, shape index: {}]
  %s6 = inlined_call_operand.hbm [shape: f32[1,32], index: 6, kind: input, shape index: {}]
  %s7 = inlined_call_operand.hbm [shape: f32[4,16], index: 7, kind: input, shape index: {}]
  %s8 = inlined_call_operand.hbm [shape: f32[32,128], index: 8, kind: input, shape index: {}]
  %s9 = inlined_call_operand.hbm [shape: f32[32,128], index: 9, kind: input, shape index: {}]
  %s10 = inlined_call_operand.hbm [shape: f32[1,128], index: 10, kind: input, shape index: {}]
  %s11 = inlined_call_operand.hbm [shape: f32[128,128], index: 11, kind: input, shape index: {}]
  %s12 = inlined_call_operand.hbm [shape: f32[1,128], index: 12, kind: input, shape index: {}]
  %s13 = inlined_call_operand.hbm [shape: f32[128,128], index: 13, kind: input, shape index: {}]
  %s14 = inlined_call_operand.hbm [shape: f32[1,128], index: 14, kind: input, shape index: {}]
  %s15 = inlined_call_operand.hbm [shape: f32[128,1], index: 15, kind: input, shape index: {}]
  %s16 = inlined_call_operand.<no memory space> [shape: f32[1,1], index: 16, kind: input, shape index: {}]
  %s17 = inlined_call_operand.hbm [shape: f32[4,1], index: 17, kind: output, shape index: {}]
  %s18 = sld [smem:[#allocation0]]
  $region142: #{discriminator_forward.1} parent=0
    _
  %s20 = ssub.s32 1, %s18
  %s21 = scalar_select 0, %s20, %s18
  %v22 = vstv %s16
  %23 = vst [vmem:[#allocation2] sm:$0x1] %v22
  $region1: #{discriminator_forward.1} parent=0
    #allocation3 [shape = 'u8[16384]{0}', space=vmem, size = 0x4000, scoped, tag = 'input window, operand 0, single buffered']
    #allocation4 [shape = 's32[1]{0}', space=sflag, size = 0x4, scoped, tag = 'scoped memory for discriminator_forward.1']
    #allocation5 [shape = 's32[1]{0}', space=sflag, size = 0x4, scoped, tag = 'scoped memory for discriminator_forward.1']
    #allocation6 [shape = 'u8[16384]{0}', space=vmem, size = 0x4000, scoped, tag = 'input window, operand 1, single buffered']
    #allocation7 [shape = 's32[1]{0}', space=sflag, size = 0x4, scoped, tag = 'scoped memory for discriminator_forward.1']
    #allocation8 [shape = 'u8[1024]{0}', space=vmem, size = 0x400, scoped, tag = 'input window, operand 2, single buffered']
    #allocation9 [shape = 'u8[16384]{0}', space=vmem, size = 0x4000, scoped, tag = 'input window, operand 3, single buffered']
    #allocation10 [shape = 's32[1]{0}', space=sflag, size = 0x4, scoped, tag = 'scoped memory for discriminator_forward.1']
    #allocation11 [shape = 'u8[16384]{0}', space=vmem, size = 0x4000, scoped, tag = 'input window, operand 4, single buffered']
    #allocation12 [shape = 'u8[512]{0}', space=vmem, size = 0x400, scoped, tag = 'input window, operand 5, single buffered']
    #allocation13 [shape = 's32[1]{0}', space=sflag, size = 0x4, scoped, tag = 'scoped memory for discriminator_forward.1']
    #allocation14 [shape = 'u8[512]{0}', space=vmem, size = 0x400, scoped, tag = 'input window, operand 6, single buffered']
    #allocation15 [shape = 'u8[2048]{0}', space=vmem, size = 0x800, scoped, tag = 'input window, operand 7, single buffered']
    #allocation16 [shape = 's32[1]{0}', space=sflag, size = 0x4, scoped, tag = 'scoped memory for discriminator_forward.1']
    #allocation17 [shape = 'u8[16384]{0}', space=vmem, size = 0x4000, scoped, tag = 'input window, operand 8, single buffered']
    #allocation18 [shape = 'u8[16384]{0}', space=vmem, size = 0x4000, scoped, tag = 'input window, operand 9, single buffered']
    #allocation19 [shape = 's32[1]{0}', space=sflag, size = 0x4, scoped, tag = 'scoped memory for discriminator_forward.1']
    #allocation20 [shape = 'u8[512]{0}', space=vmem, size = 0x400, scoped, tag = 'input window, operand 10, single buffered']
    #allocation21 [shape = 'u8[65536]{0}', space=vmem, size = 0x10000, scoped, tag = 'input window, operand 11, single buffered']
    #allocation22 [shape = 's32[1]{0}', space=sflag, size = 0x4, scoped, tag = 'scoped memory for discriminator_forward.1']
    #allocation23 [shape = 'u8[512]{0}', space=vmem, size = 0x400, scoped, tag = 'input window, operand 12, single buffered']
    #allocation24 [shape = 'u8[65536]{0}', space=vmem, size = 0x10000, scoped, tag = 'input window, operand 13, single buffered']
    #allocation25 [shape = 's32[1]{0}', space=sflag, size = 0x4, scoped, tag = 'scoped memory for discriminator_forward.1']
    #allocation26 [shape = 'u8[512]{0}', space=vmem, size = 0x400, scoped, tag = 'input window, operand 14, single buffered']
    #allocation27 [shape = 'u8[65536]{0}', space=vmem, size = 0x10000, scoped, tag = 'input window, operand 15, single buffered']
    #allocation28 [shape = 's32[1]{0}', space=sflag, size = 0x4, scoped, tag = 'scoped memory for discriminator_forward.1']
    #allocation29 [shape = 'u8[2048]{0}', space=vmem, size = 0x800, scoped, tag = 'output window, operand 0, single buffered']
    %24 = vsyncpa [#allocation4], 0
    %25 = vsyncpa [#allocation7], 0
    %26 = vsyncpa [#allocation10], 0
    %27 = vsyncpa [#allocation13], 0
    %28 = vsyncpa [#allocation16], 0
    %29 = vsyncpa [#allocation19], 0
    %30 = vsyncpa [#allocation22], 0
    %31 = vsyncpa [#allocation25], 0
    %32 = vsyncpa [#allocation28], 0
    %33 = vsyncpa [#allocation5], 0
    // Predicated region
    $region2: #{discriminator_forward.1} parent=1 // pred_check
      _
    $region3: #{discriminator_forward.1} parent=1 // pred_check_branch
      %35 = sbr.rel (0) target = $region5
    $region4: #{discriminator_forward.1} parent=1 // pred_region
      %s37 = ssub.s32 512, 512
      %38 = vsyncadd [#allocation4], %s37
      %s39 = sshll.u32 [#allocation3], 4
      %s40 = int_to_ptr.vmem [resolvable:$true] %s39
      %45 = dma.hbm_to_vmem [thread:$0]  %s0, 512, %s40, [#allocation4], 128, 128, 8
    $region5: #{discriminator_forward.1} parent=1 // pred_fallthru
      _
    // Predicated region
    $region6: #{discriminator_forward.1} parent=1 // pred_check
      _
    $region7: #{discriminator_forward.1} parent=1 // pred_check_branch
      %47 = sbr.rel (0) target = $region9
    $region8: #{discriminator_forward.1} parent=1 // pred_region
      %s49 = ssub.s32 512, 512
      %50 = vsyncadd [#allocation7], %s49
      %s51 = sshll.u32 [#allocation6], 4
      %s52 = int_to_ptr.vmem [resolvable:$true] %s51
      %57 = dma.hbm_to_vmem [thread:$0]  %s1, 512, %s52, [#allocation7], 256, 256, 16
    $region9: #{discriminator_forward.1} parent=1 // pred_fallthru
      _
    // Predicated region
    $region10: #{discriminator_forward.1} parent=1 // pred_check
      _
    $region11: #{discriminator_forward.1} parent=1 // pred_check_branch
      %59 = sbr.rel (0) target = $region13
    $region12: #{discriminator_forward.1} parent=1 // pred_region
      %s61 = ssub.s32 32, 32
      %62 = vsyncadd [#allocation7], %s61
      %s64 = sshll.u32 [#allocation8], 4
      %s65 = int_to_ptr.vmem [resolvable:$true] %s64
      %67 = dma.hbm_to_vmem [thread:$0]  %s2, 32, %s65, [#allocation7]
    $region13: #{discriminator_forward.1} parent=1 // pred_fallthru
      _
    // Predicated region
    $region14: #{discriminator_forward.1} parent=1 // pred_check
      _
    $region15: #{discriminator_forward.1} parent=1 // pred_check_branch
      %69 = sbr.rel (0) target = $region17
    $region16: #{discriminator_forward.1} parent=1 // pred_region
      %s71 = ssub.s32 512, 512
      %72 = vsyncadd [#allocation10], %s71
      %s73 = sshll.u32 [#allocation9], 4
      %s74 = int_to_ptr.vmem [resolvable:$true] %s73
      %79 = dma.hbm_to_vmem [thread:$0]  %s3, 512, %s74, [#allocation10], 128, 128, 8
    $region17: #{discriminator_forward.1} parent=1 // pred_fallthru
      _
    // Predicated region
    $region18: #{discriminator_forward.1} parent=1 // pred_check
      _
    $region19: #{discriminator_forward.1} parent=1 // pred_check_branch
      %81 = sbr.rel (0) target = $region21
    $region20: #{discriminator_forward.1} parent=1 // pred_region
      %s83 = ssub.s32 512, 512
      %84 = vsyncadd [#allocation10], %s83
      %s85 = sshll.u32 [#allocation11], 4
      %s86 = int_to_ptr.vmem [resolvable:$true] %s85
      %91 = dma.hbm_to_vmem [thread:$0]  %s4, 512, %s86, [#allocation10], 128, 128, 8
    $region21: #{discriminator_forward.1} parent=1 // pred_fallthru
      _
    // Predicated region
    $region22: #{discriminator_forward.1} parent=1 // pred_check
      _
    $region23: #{discriminator_forward.1} parent=1 // pred_check_branch
      %93 = sbr.rel (0) target = $region25
    $region24: #{discriminator_forward.1} parent=1 // pred_region
      %s95 = ssub.s32 16, 16
      %96 = vsyncadd [#allocation13], %s95
      %s98 = sshll.u32 [#allocation12], 4
      %s99 = int_to_ptr.vmem [resolvable:$true] %s98
      %101 = dma.hbm_to_vmem [thread:$0]  %s5, 16, %s99, [#allocation13]
    $region25: #{discriminator_forward.1} parent=1 // pred_fallthru
      _
    // Predicated region
    $region26: #{discriminator_forward.1} parent=1 // pred_check
      _
    $region27: #{discriminator_forward.1} parent=1 // pred_check_branch
      %103 = sbr.rel (0) target = $region29
    $region28: #{discriminator_forward.1} parent=1 // pred_region
      %s105 = ssub.s32 16, 16
      %106 = vsyncadd [#allocation13], %s105
      %s108 = sshll.u32 [#allocation14], 4
      %s109 = int_to_ptr.vmem [resolvable:$true] %s108
      %111 = dma.hbm_to_vmem [thread:$0]  %s6, 16, %s109, [#allocation13]
    $region29: #{discriminator_forward.1} parent=1 // pred_fallthru
      _
    // Predicated region
    $region30: #{discriminator_forward.1} parent=1 // pred_check
      _
    $region31: #{discriminator_forward.1} parent=1 // pred_check_branch
      %113 = sbr.rel (0) target = $region33
    $region32: #{discriminator_forward.1} parent=1 // pred_region
      %s115 = ssub.s32 64, 64
      %116 = vsyncadd [#allocation16], %s115
      %s118 = sshll.u32 [#allocation15], 4
      %s119 = int_to_ptr.vmem [resolvable:$true] %s118
      %121 = dma.hbm_to_vmem [thread:$0]  %s7, 64, %s119, [#allocation16]
    $region33: #{discriminator_forward.1} parent=1 // pred_fallthru
      _
    // Predicated region
    $region34: #{discriminator_forward.1} parent=1 // pred_check
      _
    $region35: #{discriminator_forward.1} parent=1 // pred_check_branch
      %123 = sbr.rel (0) target = $region37
    $region36: #{discriminator_forward.1} parent=1 // pred_region
      %s125 = ssub.s32 512, 512
      %126 = vsyncadd [#allocation16], %s125
      %s127 = sshll.u32 [#allocation17], 4
      %s128 = int_to_ptr.vmem [resolvable:$true] %s127
      %133 = dma.hbm_to_vmem [thread:$0]  %s8, 512, %s128, [#allocation16], 128, 128, 8
    $region37: #{discriminator_forward.1} parent=1 // pred_fallthru
      _
    // Predicated region
    $region38: #{discriminator_forward.1} parent=1 // pred_check
      _
    $region39: #{discriminator_forward.1} parent=1 // pred_check_branch
      %135 = sbr.rel (0) target = $region41
    $region40: #{discriminator_forward.1} parent=1 // pred_region
      %s137 = ssub.s32 512, 512
      %138 = vsyncadd [#allocation19], %s137
      %s139 = sshll.u32 [#allocation18], 4
      %s140 = int_to_ptr.vmem [resolvable:$true] %s139
      %145 = dma.hbm_to_vmem [thread:$0]  %s9, 512, %s140, [#allocation19], 128, 128, 8
    $region41: #{discriminator_forward.1} parent=1 // pred_fallthru
      _
    // Predicated region
    $region42: #{discriminator_forward.1} parent=1 // pred_check
      _
    $region43: #{discriminator_forward.1} parent=1 // pred_check_branch
      %147 = sbr.rel (0) target = $region45
    $region44: #{discriminator_forward.1} parent=1 // pred_region
      %s149 = ssub.s32 16, 16
      %150 = vsyncadd [#allocation19], %s149
      %s152 = sshll.u32 [#allocation20], 4
      %s153 = int_to_ptr.vmem [resolvable:$true] %s152
      %155 = dma.hbm_to_vmem [thread:$0]  %s10, 16, %s153, [#allocation19]
    $region45: #{discriminator_forward.1} parent=1 // pred_fallthru
      _
    // Predicated region
    $region46: #{discriminator_forward.1} parent=1 // pred_check
      _
    $region47: #{discriminator_forward.1} parent=1 // pred_check_branch
      %157 = sbr.rel (0) target = $region49
    $region48: #{discriminator_forward.1} parent=1 // pred_region
      %s159 = ssub.s32 2048, 2048
      %160 = vsyncadd [#allocation22], %s159
      %s161 = sshll.u32 [#allocation21], 4
      %s162 = int_to_ptr.vmem [resolvable:$true] %s161
      %167 = dma.hbm_to_vmem [thread:$0]  %s11, 2048, %s162, [#allocation22], 128, 128, 8
    $region49: #{discriminator_forward.1} parent=1 // pred_fallthru
      _
    // Predicated region
    $region50: #{discriminator_forward.1} parent=1 // pred_check
      _
    $region51: #{discriminator_forward.1} parent=1 // pred_check_branch
      %169 = sbr.rel (0) target = $region53
    $region52: #{discriminator_forward.1} parent=1 // pred_region
      %s171 = ssub.s32 16, 16
      %172 = vsyncadd [#allocation22], %s171
      %s174 = sshll.u32 [#allocation23], 4
      %s175 = int_to_ptr.vmem [resolvable:$true] %s174
      %177 = dma.hbm_to_vmem [thread:$0]  %s12, 16, %s175, [#allocation22]
    $region53: #{discriminator_forward.1} parent=1 // pred_fallthru
      _
    // Predicated region
    $region54: #{discriminator_forward.1} parent=1 // pred_check
      _
    $region55: #{discriminator_forward.1} parent=1 // pred_check_branch
      %179 = sbr.rel (0) target = $region57
    $region56: #{discriminator_forward.1} parent=1 // pred_region
      %s181 = ssub.s32 2048, 2048
      %182 = vsyncadd [#allocation25], %s181
      %s183 = sshll.u32 [#allocation24], 4
      %s184 = int_to_ptr.vmem [resolvable:$true] %s183
      %189 = dma.hbm_to_vmem [thread:$0]  %s13, 2048, %s184, [#allocation25], 128, 128, 8
    $region57: #{discriminator_forward.1} parent=1 // pred_fallthru
      _
    // Predicated region
    $region58: #{discriminator_forward.1} parent=1 // pred_check
      _
    $region59: #{discriminator_forward.1} parent=1 // pred_check_branch
      %191 = sbr.rel (0) target = $region61
    $region60: #{discriminator_forward.1} parent=1 // pred_region
      %s193 = ssub.s32 16, 16
      %194 = vsyncadd [#allocation25], %s193
      %s196 = sshll.u32 [#allocation26], 4
      %s197 = int_to_ptr.vmem [resolvable:$true] %s196
      %199 = dma.hbm_to_vmem [thread:$0]  %s14, 16, %s197, [#allocation25]
    $region61: #{discriminator_forward.1} parent=1 // pred_fallthru
      _
    // Predicated region
    $region62: #{discriminator_forward.1} parent=1 // pred_check
      _
    $region63: #{discriminator_forward.1} parent=1 // pred_check_branch
      %201 = sbr.rel (0) target = $region65
    $region64: #{discriminator_forward.1} parent=1 // pred_region
      %s203 = ssub.s32 2048, 2048
      %204 = vsyncadd [#allocation28], %s203
      %s205 = sshll.u32 [#allocation27], 4
      %s206 = int_to_ptr.vmem [resolvable:$true] %s205
      %211 = dma.hbm_to_vmem [thread:$0]  %s15, 2048, %s206, [#allocation28], 128, 128, 8
    $region65: #{discriminator_forward.1} parent=1 // pred_fallthru
      _
    // Predicated region
    $region66: #{discriminator_forward.1} parent=1 // pred_check
      _
    $region67: #{discriminator_forward.1} parent=1 // pred_check_branch
      %213 = sbr.rel (0) target = $region69
    $region68: #{discriminator_forward.1} parent=1 // pred_region
      _
    $region69: #{discriminator_forward.1} parent=1 // pred_fallthru
      _
    // Predicated region
    $region70: #{discriminator_forward.1} parent=1 // pred_check
      _
    $region71: #{discriminator_forward.1} parent=1 // pred_check_branch
      %215 = sbr.rel (0) target = $region73
    $region72: #{discriminator_forward.1} parent=1 // pred_region
      %216 = dma.done [#allocation4], 512
    $region73: #{discriminator_forward.1} parent=1 // pred_fallthru
      _
    // Predicated region
    $region74: #{discriminator_forward.1} parent=1 // pred_check
      _
    $region75: #{discriminator_forward.1} parent=1 // pred_check_branch
      %218 = sbr.rel (0) target = $region77
    $region76: #{discriminator_forward.1} parent=1 // pred_region
      %219 = dma.done [#allocation7], 512
    $region77: #{discriminator_forward.1} parent=1 // pred_fallthru
      _
    // Predicated region
    $region78: #{discriminator_forward.1} parent=1 // pred_check
      _
    $region79: #{discriminator_forward.1} parent=1 // pred_check_branch
      %221 = sbr.rel (0) target = $region81
    $region80: #{discriminator_forward.1} parent=1 // pred_region
      %222 = dma.done [#allocation7], 32
    $region81: #{discriminator_forward.1} parent=1 // pred_fallthru
      _
    // Predicated region
    $region82: #{discriminator_forward.1} parent=1 // pred_check
      _
    $region83: #{discriminator_forward.1} parent=1 // pred_check_branch
      %224 = sbr.rel (0) target = $region85
    $region84: #{discriminator_forward.1} parent=1 // pred_region
      %225 = dma.done [#allocation10], 512
    $region85: #{discriminator_forward.1} parent=1 // pred_fallthru
      _
    // Predicated region
    $region86: #{discriminator_forward.1} parent=1 // pred_check
      _
    $region87: #{discriminator_forward.1} parent=1 // pred_check_branch
      %227 = sbr.rel (0) target = $region89
    $region88: #{discriminator_forward.1} parent=1 // pred_region
      %228 = dma.done [#allocation10], 512
    $region89: #{discriminator_forward.1} parent=1 // pred_fallthru
      _
    // Predicated region
    $region90: #{discriminator_forward.1} parent=1 // pred_check
      _
    $region91: #{discriminator_forward.1} parent=1 // pred_check_branch
      %230 = sbr.rel (0) target = $region93
    $region92: #{discriminator_forward.1} parent=1 // pred_region
      %231 = dma.done [#allocation13], 16
    $region93: #{discriminator_forward.1} parent=1 // pred_fallthru
      _
    // Predicated region
    $region94: #{discriminator_forward.1} parent=1 // pred_check
      _
    $region95: #{discriminator_forward.1} parent=1 // pred_check_branch
      %233 = sbr.rel (0) target = $region97
    $region96: #{discriminator_forward.1} parent=1 // pred_region
      %234 = dma.done [#allocation13], 16
    $region97: #{discriminator_forward.1} parent=1 // pred_fallthru
      _
    // Predicated region
    $region98: #{discriminator_forward.1} parent=1 // pred_check
      _
    $region99: #{discriminator_forward.1} parent=1 // pred_check_branch
      %236 = sbr.rel (0) target = $region101
    $region100: #{discriminator_forward.1} parent=1 // pred_region
      %237 = dma.done [#allocation16], 64
    $region101: #{discriminator_forward.1} parent=1 // pred_fallthru
      _
    // Predicated region
    $region102: #{discriminator_forward.1} parent=1 // pred_check
      _
    $region103: #{discriminator_forward.1} parent=1 // pred_check_branch
      %239 = sbr.rel (0) target = $region105
    $region104: #{discriminator_forward.1} parent=1 // pred_region
      %240 = dma.done [#allocation16], 512
    $region105: #{discriminator_forward.1} parent=1 // pred_fallthru
      _
    // Predicated region
    $region106: #{discriminator_forward.1} parent=1 // pred_check
      _
    $region107: #{discriminator_forward.1} parent=1 // pred_check_branch
      %242 = sbr.rel (0) target = $region109
    $region108: #{discriminator_forward.1} parent=1 // pred_region
      %243 = dma.done [#allocation19], 512
    $region109: #{discriminator_forward.1} parent=1 // pred_fallthru
      _
    // Predicated region
    $region110: #{discriminator_forward.1} parent=1 // pred_check
      _
    $region111: #{discriminator_forward.1} parent=1 // pred_check_branch
      %245 = sbr.rel (0) target = $region113
    $region112: #{discriminator_forward.1} parent=1 // pred_region
      %246 = dma.done [#allocation19], 16
    $region113: #{discriminator_forward.1} parent=1 // pred_fallthru
      _
    // Predicated region
    $region114: #{discriminator_forward.1} parent=1 // pred_check
      _
    $region115: #{discriminator_forward.1} parent=1 // pred_check_branch
      %248 = sbr.rel (0) target = $region117
    $region116: #{discriminator_forward.1} parent=1 // pred_region
      %249 = dma.done [#allocation22], 2048
    $region117: #{discriminator_forward.1} parent=1 // pred_fallthru
      _
    // Predicated region
    $region118: #{discriminator_forward.1} parent=1 // pred_check
      _
    $region119: #{discriminator_forward.1} parent=1 // pred_check_branch
      %251 = sbr.rel (0) target = $region121
    $region120: #{discriminator_forward.1} parent=1 // pred_region
      %252 = dma.done [#allocation22], 16
    $region121: #{discriminator_forward.1} parent=1 // pred_fallthru
      _
    // Predicated region
    $region122: #{discriminator_forward.1} parent=1 // pred_check
      _
    $region123: #{discriminator_forward.1} parent=1 // pred_check_branch
      %254 = sbr.rel (0) target = $region125
    $region124: #{discriminator_forward.1} parent=1 // pred_region
      %255 = dma.done [#allocation25], 2048
    $region125: #{discriminator_forward.1} parent=1 // pred_fallthru
      _
    // Predicated region
    $region126: #{discriminator_forward.1} parent=1 // pred_check
      _
    $region127: #{discriminator_forward.1} parent=1 // pred_check_branch
      %257 = sbr.rel (0) target = $region129
    $region128: #{discriminator_forward.1} parent=1 // pred_region
      %258 = dma.done [#allocation25], 16
    $region129: #{discriminator_forward.1} parent=1 // pred_fallthru
      _
    // Predicated region
    $region130: #{discriminator_forward.1} parent=1 // pred_check
      _
    $region131: #{discriminator_forward.1} parent=1 // pred_check_branch
      %260 = sbr.rel (0) target = $region133
    $region132: #{discriminator_forward.1} parent=1 // pred_region
      %261 = dma.done [#allocation28], 2048
    $region133: #{discriminator_forward.1} parent=1 // pred_fallthru
      _
    %v262 = vld [vmem:[#allocation3] sm:$0xff]
    %v263 = vld [vmem:[#allocation3 + $0x8] sm:$0xff]
    %v264 = vld [vmem:[#allocation3 + $0x10] sm:$0xff]
    %v265 = vld [vmem:[#allocation3 + $0x18] sm:$0xff]
    %v266 = vld [vmem:[#allocation6] sm:$0xff]
    %v267 = vld [vmem:[#allocation6 + $0x8] sm:$0xff]
    %v268 = vld [vmem:[#allocation6 + $0x10] sm:$0xff]
    %v269 = vld [vmem:[#allocation6 + $0x18] sm:$0xff]
    %v270 = vld [vmem:[#allocation8] sm:$0x3]
    %v272 = vlaneseq
    %v273 = vshrl.u32 %v272, 7
    %v274 = vsub.s32 0, %v273
    %v275 = vrot.slane %v270, %v274
    %v276 = vlaneseq
    %v277 = vshrl.u32 %v276, 7
    %v278 = vsub.s32 1, %v277
    %v279 = vrot.slane %v270, %v278
    %vm282 = vcmask 130048
    %v284 = vsel %vm282, %v262, 0
    %v287 = vsel %vm282, %v263, 0
    %v290 = vsel %vm282, %v264, 0
    %v293 = vsel %vm282, %v265, 0
    %295 = vmatprep.subr.mxu0 %v267
    %296 = vmatpush1.msra.mxu0 %v266
    %297 = vmatprep.subr.mxu0 %v269
    %298 = vmatpush1.msra.mxu0 %v268
    %299 = vmatprep.subr.mxu0 0.0
    %300 = vmatpush1.msra.mxu0 0.0
    %301 = vmatprep.subr.mxu0 0.0
    %302 = vmatpush1.msra.mxu0 0.0
    %303 = vmatprep.subr.mxu0 0.0
    %304 = vmatpush1.msra.mxu0 0.0
    %305 = vmatprep.subr.mxu0 0.0
    %306 = vmatpush1.msra.mxu0 0.0
    %307 = vmatprep.subr.mxu0 0.0
    %308 = vmatpush1.msra.mxu0 0.0
    %309 = vmatprep.subr.mxu0 0.0
    %310 = vmatpush1.msra.mxu0 0.0
    %311 = vmatprep.subr.mxu0 0.0
    %312 = vmatpush1.msra.mxu0 0.0
    %313 = vmatprep.subr.mxu0 0.0
    %314 = vmatpush1.msra.mxu0 0.0
    %315 = vmatprep.subr.mxu0 0.0
    %316 = vmatpush1.msra.mxu0 0.0
    %317 = vmatprep.subr.mxu0 0.0
    %318 = vmatpush1.msra.mxu0 0.0
    %319 = vmatprep.subr.mxu0 0.0
    %320 = vmatpush1.msra.mxu0 0.0
    %321 = vmatprep.subr.mxu0 0.0
    %322 = vmatpush1.msra.mxu0 0.0
    %323 = vmatprep.subr.mxu0 0.0
    %324 = vmatpush1.msra.mxu0 0.0
    %325 = vmatprep.subr.mxu0 0.0
    %326 = vmatpush1.msra.mxu0 0.0
    %327 = vmatprep.subr.mxu0 0.0
    %328 = vmatpush1.msra.mxu0 0.0
    %329 = vmatprep.subr.mxu0 0.0
    %330 = vmatpush1.msra.mxu0 0.0
    %331 = vmatprep.subr.mxu0 0.0
    %332 = vmatpush1.msra.mxu0 0.0
    %333 = vmatprep.subr.mxu0 0.0
    %334 = vmatpush1.msra.mxu0 0.0
    %335 = vmatprep.subr.mxu0 0.0
    %336 = vmatpush1.msra.mxu0 0.0
    %337 = vmatprep.subr.mxu0 0.0
    %338 = vmatpush1.msra.mxu0 0.0
    %339 = vmatprep.subr.mxu0 0.0
    %340 = vmatpush1.msra.mxu0 0.0
    %341 = vmatprep.subr.mxu0 0.0
    %342 = vmatpush1.msra.mxu0 0.0
    %343 = vmatprep.subr.mxu0 0.0
    %344 = vmatpush1.msra.mxu0 0.0
    %345 = vmatprep.subr.mxu0 0.0
    %346 = vmatpush1.msra.mxu0 0.0
    %347 = vmatprep.subr.mxu0 0.0
    %348 = vmatpush1.msra.mxu0 0.0
    %349 = vmatprep.subr.mxu0 0.0
    %350 = vmatpush1.msra.mxu0 0.0
    %351 = vmatprep.subr.mxu0 0.0
    %352 = vmatpush1.msra.mxu0 0.0
    %353 = vmatprep.subr.mxu0 0.0
    %354 = vmatpush1.msra.mxu0 0.0
    %355 = vmatprep.subr.mxu0 0.0
    %356 = vmatpush1.msra.mxu0 0.0
    %357 = vmatprep.subr.mxu0 0.0
    %358 = vmatpush1.msra.mxu0 0.0
    %359 = vmatprep.mubr.f32.mxu0 0.0
    %360 = vmatmul.mubr.f32.gmra.mrb[0].mxu0 %v284
    %v361 = vpop.f32.mrb[0].mxu0
    %v362 = vadd.f32 %v275, %v361
    %v363 = vpop.f32.mrb[0].mxu0
    %v364 = vadd.f32 %v279, %v363
    %365 = vmatprep.mubr.f32.mxu0 0.0
    %366 = vmatmul.mubr.f32.gmra.mrb[0].mxu0 %v287
    %v367 = vpop.f32.mrb[0].mxu0
    %v368 = vadd.f32 %v275, %v367
    %v369 = vpop.f32.mrb[0].mxu0
    %v370 = vadd.f32 %v279, %v369
    %371 = vmatprep.mubr.f32.mxu0 0.0
    %372 = vmatmul.mubr.f32.gmra.mrb[0].mxu0 %v290
    %v373 = vpop.f32.mrb[0].mxu0
    %v374 = vadd.f32 %v275, %v373
    %v375 = vpop.f32.mrb[0].mxu0
    %v376 = vadd.f32 %v279, %v375
    %377 = vmatprep.mubr.f32.mxu0 0.0
    %378 = vmatmul.mubr.f32.gmra.mrb[0].mxu0 %v293
    %v379 = vpop.f32.mrb[0].mxu0
    %v380 = vadd.f32 %v275, %v379
    %v381 = vpop.f32.mrb[0].mxu0
    %v382 = vadd.f32 %v279, %v381
    %383 = vdwg.mxu0
    %v384 = vld [vmem:[#allocation9] sm:$0xff]
    %v385 = vld [vmem:[#allocation9 + $0x8] sm:$0xff]
    %v386 = vld [vmem:[#allocation9 + $0x10] sm:$0xff]
    %v387 = vld [vmem:[#allocation9 + $0x18] sm:$0xff]
    %v388 = vld [vmem:[#allocation11] sm:$0xff]
    %v389 = vld [vmem:[#allocation11 + $0x8] sm:$0xff]
    %v390 = vld [vmem:[#allocation11 + $0x10] sm:$0xff]
    %v391 = vld [vmem:[#allocation11 + $0x18] sm:$0xff]
    %v392 = vld [vmem:[#allocation12] sm:$0x1]
    %v394 = vlaneseq
    %v395 = vshrl.u32 %v394, 7
    %v396 = vsub.s32 0, %v395
    %v397 = vrot.slane %v392, %v396
    %v398 = vld [vmem:[#allocation14] sm:$0x1]
    %v400 = vlaneseq
    %v401 = vshrl.u32 %v400, 7
    %v402 = vsub.s32 0, %v401
    %v403 = vrot.slane %v398, %v402
    %vm404 = vcmask 261120
    %v406 = vsel %vm404, 0.0, 0
    %408 = vmatprep.subr.mxu0 0.0
    %409 = vmatpush1.msra.mxu0 %v384
    %410 = vmatprep.subr.mxu0 0.0
    %411 = vmatpush1.msra.mxu0 %v385
    %412 = vmatprep.subr.mxu0 0.0
    %413 = vmatpush1.msra.mxu0 %v386
    %414 = vmatprep.subr.mxu0 0.0
    %415 = vmatpush1.msra.mxu0 %v387
    %416 = vmatprep.subr.mxu0 0.0
    %417 = vmatpush1.msra.mxu0 0.0
    %418 = vmatprep.subr.mxu0 0.0
    %419 = vmatpush1.msra.mxu0 0.0
    %420 = vmatprep.subr.mxu0 0.0
    %421 = vmatpush1.msra.mxu0 0.0
    %422 = vmatprep.subr.mxu0 0.0
    %423 = vmatpush1.msra.mxu0 0.0
    %424 = vmatprep.subr.mxu0 0.0
    %425 = vmatpush1.msra.mxu0 0.0
    %426 = vmatprep.subr.mxu0 0.0
    %427 = vmatpush1.msra.mxu0 0.0
    %428 = vmatprep.subr.mxu0 0.0
    %429 = vmatpush1.msra.mxu0 0.0
    %430 = vmatprep.subr.mxu0 0.0
    %431 = vmatpush1.msra.mxu0 0.0
    %432 = vmatprep.subr.mxu0 0.0
    %433 = vmatpush1.msra.mxu0 0.0
    %434 = vmatprep.subr.mxu0 0.0
    %435 = vmatpush1.msra.mxu0 0.0
    %436 = vmatprep.subr.mxu0 0.0
    %437 = vmatpush1.msra.mxu0 0.0
    %438 = vmatprep.subr.mxu0 0.0
    %439 = vmatpush1.msra.mxu0 0.0
    %440 = vmatprep.subr.mxu0 0.0
    %441 = vmatpush1.msra.mxu0 0.0
    %442 = vmatprep.subr.mxu0 0.0
    %443 = vmatpush1.msra.mxu0 0.0
    %444 = vmatprep.subr.mxu0 0.0
    %445 = vmatpush1.msra.mxu0 0.0
    %446 = vmatprep.subr.mxu0 0.0
    %447 = vmatpush1.msra.mxu0 0.0
    %448 = vmatprep.subr.mxu0 0.0
    %449 = vmatpush1.msra.mxu0 0.0
    %450 = vmatprep.subr.mxu0 0.0
    %451 = vmatpush1.msra.mxu0 0.0
    %452 = vmatprep.subr.mxu0 0.0
    %453 = vmatpush1.msra.mxu0 0.0
    %454 = vmatprep.subr.mxu0 0.0
    %455 = vmatpush1.msra.mxu0 0.0
    %456 = vmatprep.subr.mxu0 0.0
    %457 = vmatpush1.msra.mxu0 0.0
    %458 = vmatprep.subr.mxu0 0.0
    %459 = vmatpush1.msra.mxu0 0.0
    %460 = vmatprep.subr.mxu0 0.0
    %461 = vmatpush1.msra.mxu0 0.0
    %462 = vmatprep.subr.mxu0 0.0
    %463 = vmatpush1.msra.mxu0 0.0
    %464 = vmatprep.subr.mxu0 0.0
    %465 = vmatpush1.msra.mxu0 0.0
    %466 = vmatprep.subr.mxu0 0.0
    %467 = vmatpush1.msra.mxu0 0.0
    %468 = vmatprep.subr.mxu0 0.0
    %469 = vmatpush1.msra.mxu0 0.0
    %470 = vmatprep.subr.mxu0 0.0
    %471 = vmatpush1.msra.mxu0 0.0
    %472 = vmatprep.mubr.f32.mxu0 0.0
    %473 = vmatmul.mubr.f32.gmra.mrb[0].mxu0 %v406
    %v474 = vpop.f32.mrb[0].mxu0
    %v475 = vadd.f32 0.0, %v474
    %v476 = vpop.f32.mrb[0].mxu0
    %477 = vdwg.mxu0
    %v478 = vadd.f32 %v362, %v475
    %v479 = vsub.f32 0.0, %v478
    %v480 = vmul.f32 %v479, 1.442695
    %v481 = vpow.pop %v480
    %v482 = vadd.f32 %v481, 1.0
    %v483 = vrcp.pop %v482
    %484 = vrot.lane.b32.xlu0 %v397, 64
    %v485 = vpop.permute.xlu0 %484
    %v487 = vadd.f32 %v475, %v485
    %489 = vrot.lane.b32.xlu0 %v487, 64
    %v490 = vpop.permute.xlu0 %489
    %v492 = vmul.f32 %v483, %v490
    %494 = vrot.lane.b32.xlu0 %v492, 64
    %v495 = vpop.permute.xlu0 %494
    %v497 = vadd.f32 %v362, %v495
    %v498 = vtanh.pop %v497
    %v499 = vsub.f32 1.0, %v483
    %501 = vrot.lane.b32.xlu0 %v498, 96
    %v502 = vpop.permute.xlu0 %501
    %v504 = vmul.f32 %v499, %v502
    %v505 = vmul.f32 %v483, 0.0
    %v506 = vadd.f32 %v504, %v505
    %507 = vmatprep.subr.mxu0 0.0
    %508 = vmatpush1.msra.mxu0 %v388
    %509 = vmatprep.subr.mxu0 0.0
    %510 = vmatpush1.msra.mxu0 %v389
    %511 = vmatprep.subr.mxu0 0.0
    %512 = vmatpush1.msra.mxu0 %v390
    %513 = vmatprep.subr.mxu0 0.0
    %514 = vmatpush1.msra.mxu0 %v391
    %515 = vmatprep.subr.mxu0 0.0
    %516 = vmatpush1.msra.mxu0 0.0
    %517 = vmatprep.subr.mxu0 0.0
    %518 = vmatpush1.msra.mxu0 0.0
    %519 = vmatprep.subr.mxu0 0.0
    %520 = vmatpush1.msra.mxu0 0.0
    %521 = vmatprep.subr.mxu0 0.0
    %522 = vmatpush1.msra.mxu0 0.0
    %523 = vmatprep.subr.mxu0 0.0
    %524 = vmatpush1.msra.mxu0 0.0
    %525 = vmatprep.subr.mxu0 0.0
    %526 = vmatpush1.msra.mxu0 0.0
    %527 = vmatprep.subr.mxu0 0.0
    %528 = vmatpush1.msra.mxu0 0.0
    %529 = vmatprep.subr.mxu0 0.0
    %530 = vmatpush1.msra.mxu0 0.0
    %531 = vmatprep.subr.mxu0 0.0
    %532 = vmatpush1.msra.mxu0 0.0
    %533 = vmatprep.subr.mxu0 0.0
    %534 = vmatpush1.msra.mxu0 0.0
    %535 = vmatprep.subr.mxu0 0.0
    %536 = vmatpush1.msra.mxu0 0.0
    %537 = vmatprep.subr.mxu0 0.0
    %538 = vmatpush1.msra.mxu0 0.0
    %539 = vmatprep.subr.mxu0 0.0
    %540 = vmatpush1.msra.mxu0 0.0
    %541 = vmatprep.subr.mxu0 0.0
    %542 = vmatpush1.msra.mxu0 0.0
    %543 = vmatprep.subr.mxu0 0.0
    %544 = vmatpush1.msra.mxu0 0.0
    %545 = vmatprep.subr.mxu0 0.0
    %546 = vmatpush1.msra.mxu0 0.0
    %547 = vmatprep.subr.mxu0 0.0
    %548 = vmatpush1.msra.mxu0 0.0
    %549 = vmatprep.subr.mxu0 0.0
    %550 = vmatpush1.msra.mxu0 0.0
    %551 = vmatprep.subr.mxu0 0.0
    %552 = vmatpush1.msra.mxu0 0.0
    %553 = vmatprep.subr.mxu0 0.0
    %554 = vmatpush1.msra.mxu0 0.0
    %555 = vmatprep.subr.mxu0 0.0
    %556 = vmatpush1.msra.mxu0 0.0
    %557 = vmatprep.subr.mxu0 0.0
    %558 = vmatpush1.msra.mxu0 0.0
    %559 = vmatprep.subr.mxu0 0.0
    %560 = vmatpush1.msra.mxu0 0.0
    %561 = vmatprep.subr.mxu0 0.0
    %562 = vmatpush1.msra.mxu0 0.0
    %563 = vmatprep.subr.mxu0 0.0
    %564 = vmatpush1.msra.mxu0 0.0
    %565 = vmatprep.subr.mxu0 0.0
    %566 = vmatpush1.msra.mxu0 0.0
    %567 = vmatprep.subr.mxu0 0.0
    %568 = vmatpush1.msra.mxu0 0.0
    %569 = vmatprep.subr.mxu0 0.0
    %570 = vmatpush1.msra.mxu0 0.0
    %571 = vmatprep.mubr.f32.mxu0 0.0
    %572 = vmatmul.mubr.f32.gmra.mrb[0].mxu0 %v406
    %v573 = vpop.f32.mrb[0].mxu0
    %v574 = vadd.f32 0.0, %v573
    %v575 = vpop.f32.mrb[0].mxu0
    %576 = vdwg.mxu0
    %v578 = vrot.slane %v574, 4
    %579 = vrot.lane.b32.xlu0 %v578, 96
    %v580 = vpop.permute.xlu0 %579
    %v582 = vadd.f32 %v380, %v580
    %v583 = vadd.f32 %v382, %v580
    %v584 = vsub.f32 0.0, %v582
    %v585 = vsub.f32 0.0, %v583
    %v586 = vmul.f32 %v584, 1.442695
    %v587 = vpow.pop %v586
    %v588 = vmul.f32 %v585, 1.442695
    %v589 = vpow.pop %v588
    %v590 = vadd.f32 %v587, 1.0
    %v591 = vadd.f32 %v589, 1.0
    %v592 = vrcp.pop %v590
    %v593 = vrcp.pop %v591
    %594 = vrot.lane.b32.xlu0 %v403, 64
    %v595 = vpop.permute.xlu0 %594
    %v597 = vadd.f32 %v574, %v595
    %v599 = vrot.slane %v597, 4
    %600 = vrot.lane.b32.xlu0 %v599, 32
    %v601 = vpop.permute.xlu0 %600
    %v603 = vmul.f32 %v592, %v601
    %605 = vrot.lane.b32.xlu0 %v603, 64
    %v606 = vpop.permute.xlu0 %605
    %v608 = vadd.f32 %v382, %v606
    %v609 = vtanh.pop %v608
    %v610 = vsub.f32 1.0, %v593
    %612 = vrot.lane.b32.xlu0 %v609, 96
    %v613 = vpop.permute.xlu0 %612
    %v615 = vmul.f32 %v610, %v613
    %v616 = vmul.f32 %v593, 0.0
    %v617 = vadd.f32 %v615, %v616
    %619 = vrot.lane.b32.xlu0 %v506, 96
    %v620 = vpop.permute.xlu0 %619
    %v621 = vsel %vm404, %v620, 0
    %623 = vmatprep.subr.mxu0 0.0
    %624 = vmatpush1.msra.mxu0 %v384
    %625 = vmatprep.subr.mxu0 0.0
    %626 = vmatpush1.msra.mxu0 %v385
    %627 = vmatprep.subr.mxu0 0.0
    %628 = vmatpush1.msra.mxu0 %v386
    %629 = vmatprep.subr.mxu0 0.0
    %630 = vmatpush1.msra.mxu0 %v387
    %631 = vmatprep.subr.mxu0 0.0
    %632 = vmatpush1.msra.mxu0 0.0
    %633 = vmatprep.subr.mxu0 0.0
    %634 = vmatpush1.msra.mxu0 0.0
    %635 = vmatprep.subr.mxu0 0.0
    %636 = vmatpush1.msra.mxu0 0.0
    %637 = vmatprep.subr.mxu0 0.0
    %638 = vmatpush1.msra.mxu0 0.0
    %639 = vmatprep.subr.mxu0 0.0
    %640 = vmatpush1.msra.mxu0 0.0
    %641 = vmatprep.subr.mxu0 0.0
    %642 = vmatpush1.msra.mxu0 0.0
    %643 = vmatprep.subr.mxu0 0.0
    %644 = vmatpush1.msra.mxu0 0.0
    %645 = vmatprep.subr.mxu0 0.0
    %646 = vmatpush1.msra.mxu0 0.0
    %647 = vmatprep.subr.mxu0 0.0
    %648 = vmatpush1.msra.mxu0 0.0
    %649 = vmatprep.subr.mxu0 0.0
    %650 = vmatpush1.msra.mxu0 0.0
    %651 = vmatprep.subr.mxu0 0.0
    %652 = vmatpush1.msra.mxu0 0.0
    %653 = vmatprep.subr.mxu0 0.0
    %654 = vmatpush1.msra.mxu0 0.0
    %655 = vmatprep.subr.mxu0 0.0
    %656 = vmatpush1.msra.mxu0 0.0
    %657 = vmatprep.subr.mxu0 0.0
    %658 = vmatpush1.msra.mxu0 0.0
    %659 = vmatprep.subr.mxu0 0.0
    %660 = vmatpush1.msra.mxu0 0.0
    %661 = vmatprep.subr.mxu0 0.0
    %662 = vmatpush1.msra.mxu0 0.0
    %663 = vmatprep.subr.mxu0 0.0
    %664 = vmatpush1.msra.mxu0 0.0
    %665 = vmatprep.subr.mxu0 0.0
    %666 = vmatpush1.msra.mxu0 0.0
    %667 = vmatprep.subr.mxu0 0.0
    %668 = vmatpush1.msra.mxu0 0.0
    %669 = vmatprep.subr.mxu0 0.0
    %670 = vmatpush1.msra.mxu0 0.0
    %671 = vmatprep.subr.mxu0 0.0
    %672 = vmatpush1.msra.mxu0 0.0
    %673 = vmatprep.subr.mxu0 0.0
    %674 = vmatpush1.msra.mxu0 0.0
    %675 = vmatprep.subr.mxu0 0.0
    %676 = vmatpush1.msra.mxu0 0.0
    %677 = vmatprep.subr.mxu0 0.0
    %678 = vmatpush1.msra.mxu0 0.0
    %679 = vmatprep.subr.mxu0 0.0
    %680 = vmatpush1.msra.mxu0 0.0
    %681 = vmatprep.subr.mxu0 0.0
    %682 = vmatpush1.msra.mxu0 0.0
    %683 = vmatprep.subr.mxu0 0.0
    %684 = vmatpush1.msra.mxu0 0.0
    %685 = vmatprep.subr.mxu0 0.0
    %686 = vmatpush1.msra.mxu0 0.0
    %687 = vmatprep.mubr.f32.mxu0 0.0
    %688 = vmatmul.mubr.f32.gmra.mrb[0].mxu0 %v621
    %v689 = vpop.f32.mrb[0].mxu0
    %v690 = vadd.f32 0.0, %v689
    %v691 = vpop.f32.mrb[0].mxu0
    %692 = vdwg.mxu0
    %v694 = vrot.slane %v690, 4
    %v696 = vadd.f32 %v362, %v694
    %v697 = vsub.f32 0.0, %v696
    %v698 = vmul.f32 %v697, 1.442695
    %v699 = vpow.pop %v698
    %v700 = vadd.f32 %v699, 1.0
    %v701 = vrcp.pop %v700
    %v702 = vadd.f32 %v690, %v485
    %v704 = vrot.slane %v702, 4
    %705 = vrot.lane.b32.xlu0 %v704, 64
    %v706 = vpop.permute.xlu0 %705
    %v708 = vmul.f32 %v701, %v706
    %710 = vrot.lane.b32.xlu0 %v708, 64
    %v711 = vpop.permute.xlu0 %710
    %v713 = vadd.f32 %v362, %v711
    %v714 = vtanh.pop %v713
    %v715 = vsub.f32 1.0, %v701
    %717 = vrot.lane.b32.xlu0 %v714, 96
    %v718 = vpop.permute.xlu0 %717
    %v720 = vmul.f32 %v715, %v718
    %v721 = vrot.slane %v506, 4
    %v723 = vmul.f32 %v701, %v721
    %v724 = vadd.f32 %v720, %v723
    %v726 = vrot.slane %v617, 4
    %v727 = vsel %vm404, %v726, 0
    %729 = vmatprep.subr.mxu0 0.0
    %730 = vmatpush1.msra.mxu0 %v388
    %731 = vmatprep.subr.mxu0 0.0
    %732 = vmatpush1.msra.mxu0 %v389
    %733 = vmatprep.subr.mxu0 0.0
    %734 = vmatpush1.msra.mxu0 %v390
    %735 = vmatprep.subr.mxu0 0.0
    %736 = vmatpush1.msra.mxu0 %v391
    %737 = vmatprep.subr.mxu0 0.0
    %738 = vmatpush1.msra.mxu0 0.0
    %739 = vmatprep.subr.mxu0 0.0
    %740 = vmatpush1.msra.mxu0 0.0
    %741 = vmatprep.subr.mxu0 0.0
    %742 = vmatpush1.msra.mxu0 0.0
    %743 = vmatprep.subr.mxu0 0.0
    %744 = vmatpush1.msra.mxu0 0.0
    %745 = vmatprep.subr.mxu0 0.0
    %746 = vmatpush1.msra.mxu0 0.0
    %747 = vmatprep.subr.mxu0 0.0
    %748 = vmatpush1.msra.mxu0 0.0
    %749 = vmatprep.subr.mxu0 0.0
    %750 = vmatpush1.msra.mxu0 0.0
    %751 = vmatprep.subr.mxu0 0.0
    %752 = vmatpush1.msra.mxu0 0.0
    %753 = vmatprep.subr.mxu0 0.0
    %754 = vmatpush1.msra.mxu0 0.0
    %755 = vmatprep.subr.mxu0 0.0
    %756 = vmatpush1.msra.mxu0 0.0
    %757 = vmatprep.subr.mxu0 0.0
    %758 = vmatpush1.msra.mxu0 0.0
    %759 = vmatprep.subr.mxu0 0.0
    %760 = vmatpush1.msra.mxu0 0.0
    %761 = vmatprep.subr.mxu0 0.0
    %762 = vmatpush1.msra.mxu0 0.0
    %763 = vmatprep.subr.mxu0 0.0
    %764 = vmatpush1.msra.mxu0 0.0
    %765 = vmatprep.subr.mxu0 0.0
    %766 = vmatpush1.msra.mxu0 0.0
    %767 = vmatprep.subr.mxu0 0.0
    %768 = vmatpush1.msra.mxu0 0.0
    %769 = vmatprep.subr.mxu0 0.0
    %770 = vmatpush1.msra.mxu0 0.0
    %771 = vmatprep.subr.mxu0 0.0
    %772 = vmatpush1.msra.mxu0 0.0
    %773 = vmatprep.subr.mxu0 0.0
    %774 = vmatpush1.msra.mxu0 0.0
    %775 = vmatprep.subr.mxu0 0.0
    %776 = vmatpush1.msra.mxu0 0.0
    %777 = vmatprep.subr.mxu0 0.0
    %778 = vmatpush1.msra.mxu0 0.0
    %779 = vmatprep.subr.mxu0 0.0
    %780 = vmatpush1.msra.mxu0 0.0
    %781 = vmatprep.subr.mxu0 0.0
    %782 = vmatpush1.msra.mxu0 0.0
    %783 = vmatprep.subr.mxu0 0.0
    %784 = vmatpush1.msra.mxu0 0.0
    %785 = vmatprep.subr.mxu0 0.0
    %786 = vmatpush1.msra.mxu0 0.0
    %787 = vmatprep.subr.mxu0 0.0
    %788 = vmatpush1.msra.mxu0 0.0
    %789 = vmatprep.subr.mxu0 0.0
    %790 = vmatpush1.msra.mxu0 0.0
    %791 = vmatprep.subr.mxu0 0.0
    %792 = vmatpush1.msra.mxu0 0.0
    %793 = vmatprep.mubr.f32.mxu0 0.0
    %794 = vmatmul.mubr.f32.gmra.mrb[0].mxu0 %v727
    %v795 = vpop.f32.mrb[0].mxu0
    %v796 = vadd.f32 0.0, %v795
    %v797 = vpop.f32.mrb[0].mxu0
    %798 = vdwg.mxu0
    %800 = vrot.lane.b32.xlu0 %v796, 96
    %v801 = vpop.permute.xlu0 %800
    %v803 = vadd.f32 %v380, %v801
    %v804 = vadd.f32 %v382, %v801
    %v805 = vsub.f32 0.0, %v803
    %v806 = vsub.f32 0.0, %v804
    %v807 = vmul.f32 %v805, 1.442695
    %v808 = vpow.pop %v807
    %v809 = vmul.f32 %v806, 1.442695
    %v810 = vpow.pop %v809
    %v811 = vadd.f32 %v808, 1.0
    %v812 = vadd.f32 %v810, 1.0
    %v813 = vrcp.pop %v811
    %v814 = vrcp.pop %v812
    %v815 = vadd.f32 %v796, %v595
    %817 = vrot.lane.b32.xlu0 %v815, 32
    %v818 = vpop.permute.xlu0 %817
    %v820 = vmul.f32 %v813, %v818
    %822 = vrot.lane.b32.xlu0 %v820, 64
    %v823 = vpop.permute.xlu0 %822
    %v825 = vadd.f32 %v382, %v823
    %v826 = vtanh.pop %v825
    %v827 = vsub.f32 1.0, %v814
    %829 = vrot.lane.b32.xlu0 %v826, 96
    %v830 = vpop.permute.xlu0 %829
    %v832 = vmul.f32 %v827, %v830
    %v834 = vmul.f32 %v814, %v726
    %v835 = vadd.f32 %v832, %v834
    %v837 = vrot.slane %v724, 4
    %838 = vrot.lane.b32.xlu0 %v837, 96
    %v839 = vpop.permute.xlu0 %838
    %v840 = vsel %vm404, %v839, 0
    %842 = vmatprep.subr.mxu0 0.0
    %843 = vmatpush1.msra.mxu0 %v384
    %844 = vmatprep.subr.mxu0 0.0
    %845 = vmatpush1.msra.mxu0 %v385
    %846 = vmatprep.subr.mxu0 0.0
    %847 = vmatpush1.msra.mxu0 %v386
    %848 = vmatprep.subr.mxu0 0.0
    %849 = vmatpush1.msra.mxu0 %v387
    %850 = vmatprep.subr.mxu0 0.0
    %851 = vmatpush1.msra.mxu0 0.0
    %852 = vmatprep.subr.mxu0 0.0
    %853 = vmatpush1.msra.mxu0 0.0
    %854 = vmatprep.subr.mxu0 0.0
    %855 = vmatpush1.msra.mxu0 0.0
    %856 = vmatprep.subr.mxu0 0.0
    %857 = vmatpush1.msra.mxu0 0.0
    %858 = vmatprep.subr.mxu0 0.0
    %859 = vmatpush1.msra.mxu0 0.0
    %860 = vmatprep.subr.mxu0 0.0
    %861 = vmatpush1.msra.mxu0 0.0
    %862 = vmatprep.subr.mxu0 0.0
    %863 = vmatpush1.msra.mxu0 0.0
    %864 = vmatprep.subr.mxu0 0.0
    %865 = vmatpush1.msra.mxu0 0.0
    %866 = vmatprep.subr.mxu0 0.0
    %867 = vmatpush1.msra.mxu0 0.0
    %868 = vmatprep.subr.mxu0 0.0
    %869 = vmatpush1.msra.mxu0 0.0
    %870 = vmatprep.subr.mxu0 0.0
    %871 = vmatpush1.msra.mxu0 0.0
    %872 = vmatprep.subr.mxu0 0.0
    %873 = vmatpush1.msra.mxu0 0.0
    %874 = vmatprep.subr.mxu0 0.0
    %875 = vmatpush1.msra.mxu0 0.0
    %876 = vmatprep.subr.mxu0 0.0
    %877 = vmatpush1.msra.mxu0 0.0
    %878 = vmatprep.subr.mxu0 0.0
    %879 = vmatpush1.msra.mxu0 0.0
    %880 = vmatprep.subr.mxu0 0.0
    %881 = vmatpush1.msra.mxu0 0.0
    %882 = vmatprep.subr.mxu0 0.0
    %883 = vmatpush1.msra.mxu0 0.0
    %884 = vmatprep.subr.mxu0 0.0
    %885 = vmatpush1.msra.mxu0 0.0
    %886 = vmatprep.subr.mxu0 0.0
    %887 = vmatpush1.msra.mxu0 0.0
    %888 = vmatprep.subr.mxu0 0.0
    %889 = vmatpush1.msra.mxu0 0.0
    %890 = vmatprep.subr.mxu0 0.0
    %891 = vmatpush1.msra.mxu0 0.0
    %892 = vmatprep.subr.mxu0 0.0
    %893 = vmatpush1.msra.mxu0 0.0
    %894 = vmatprep.subr.mxu0 0.0
    %895 = vmatpush1.msra.mxu0 0.0
    %896 = vmatprep.subr.mxu0 0.0
    %897 = vmatpush1.msra.mxu0 0.0
    %898 = vmatprep.subr.mxu0 0.0
    %899 = vmatpush1.msra.mxu0 0.0
    %900 = vmatprep.subr.mxu0 0.0
    %901 = vmatpush1.msra.mxu0 0.0
    %902 = vmatprep.subr.mxu0 0.0
    %903 = vmatpush1.msra.mxu0 0.0
    %904 = vmatprep.subr.mxu0 0.0
    %905 = vmatpush1.msra.mxu0 0.0
    %906 = vmatprep.mubr.f32.mxu0 0.0
    %907 = vmatmul.mubr.f32.gmra.mrb[0].mxu0 %v840
    %v908 = vpop.f32.mrb[0].mxu0
    %v909 = vadd.f32 0.0, %v908
    %v910 = vpop.f32.mrb[0].mxu0
    %911 = vdwg.mxu0
    %v912 = vadd.f32 %v368, %v909
    %v913 = vsub.f32 0.0, %v912
    %v914 = vmul.f32 %v913, 1.442695
    %v915 = vpow.pop %v914
    %v916 = vadd.f32 %v915, 1.0
    %v917 = vrcp.pop %v916
    %v918 = vadd.f32 %v909, %v485
    %920 = vrot.lane.b32.xlu0 %v918, 64
    %v921 = vpop.permute.xlu0 %920
    %v923 = vmul.f32 %v917, %v921
    %925 = vrot.lane.b32.xlu0 %v923, 64
    %v926 = vpop.permute.xlu0 %925
    %v928 = vadd.f32 %v368, %v926
    %v929 = vtanh.pop %v928
    %v930 = vsub.f32 1.0, %v917
    %932 = vrot.lane.b32.xlu0 %v929, 96
    %v933 = vpop.permute.xlu0 %932
    %v935 = vmul.f32 %v930, %v933
    %v937 = vmul.f32 %v917, %v837
    %v938 = vadd.f32 %v935, %v937
    %v940 = vsel %vm404, %v835, 0
    %942 = vmatprep.subr.mxu0 0.0
    %943 = vmatpush1.msra.mxu0 %v388
    %944 = vmatprep.subr.mxu0 0.0
    %945 = vmatpush1.msra.mxu0 %v389
    %946 = vmatprep.subr.mxu0 0.0
    %947 = vmatpush1.msra.mxu0 %v390
    %948 = vmatprep.subr.mxu0 0.0
    %949 = vmatpush1.msra.mxu0 %v391
    %950 = vmatprep.subr.mxu0 0.0
    %951 = vmatpush1.msra.mxu0 0.0
    %952 = vmatprep.subr.mxu0 0.0
    %953 = vmatpush1.msra.mxu0 0.0
    %954 = vmatprep.subr.mxu0 0.0
    %955 = vmatpush1.msra.mxu0 0.0
    %956 = vmatprep.subr.mxu0 0.0
    %957 = vmatpush1.msra.mxu0 0.0
    %958 = vmatprep.subr.mxu0 0.0
    %959 = vmatpush1.msra.mxu0 0.0
    %960 = vmatprep.subr.mxu0 0.0
    %961 = vmatpush1.msra.mxu0 0.0
    %962 = vmatprep.subr.mxu0 0.0
    %963 = vmatpush1.msra.mxu0 0.0
    %964 = vmatprep.subr.mxu0 0.0
    %965 = vmatpush1.msra.mxu0 0.0
    %966 = vmatprep.subr.mxu0 0.0
    %967 = vmatpush1.msra.mxu0 0.0
    %968 = vmatprep.subr.mxu0 0.0
    %969 = vmatpush1.msra.mxu0 0.0
    %970 = vmatprep.subr.mxu0 0.0
    %971 = vmatpush1.msra.mxu0 0.0
    %972 = vmatprep.subr.mxu0 0.0
    %973 = vmatpush1.msra.mxu0 0.0
    %974 = vmatprep.subr.mxu0 0.0
    %975 = vmatpush1.msra.mxu0 0.0
    %976 = vmatprep.subr.mxu0 0.0
    %977 = vmatpush1.msra.mxu0 0.0
    %978 = vmatprep.subr.mxu0 0.0
    %979 = vmatpush1.msra.mxu0 0.0
    %980 = vmatprep.subr.mxu0 0.0
    %981 = vmatpush1.msra.mxu0 0.0
    %982 = vmatprep.subr.mxu0 0.0
    %983 = vmatpush1.msra.mxu0 0.0
    %984 = vmatprep.subr.mxu0 0.0
    %985 = vmatpush1.msra.mxu0 0.0
    %986 = vmatprep.subr.mxu0 0.0
    %987 = vmatpush1.msra.mxu0 0.0
    %988 = vmatprep.subr.mxu0 0.0
    %989 = vmatpush1.msra.mxu0 0.0
    %990 = vmatprep.subr.mxu0 0.0
    %991 = vmatpush1.msra.mxu0 0.0
    %992 = vmatprep.subr.mxu0 0.0
    %993 = vmatpush1.msra.mxu0 0.0
    %994 = vmatprep.subr.mxu0 0.0
    %995 = vmatpush1.msra.mxu0 0.0
    %996 = vmatprep.subr.mxu0 0.0
    %997 = vmatpush1.msra.mxu0 0.0
    %998 = vmatprep.subr.mxu0 0.0
    %999 = vmatpush1.msra.mxu0 0.0
    %1000 = vmatprep.subr.mxu0 0.0
    %1001 = vmatpush1.msra.mxu0 0.0
    %1002 = vmatprep.subr.mxu0 0.0
    %1003 = vmatpush1.msra.mxu0 0.0
    %1004 = vmatprep.subr.mxu0 0.0
    %1005 = vmatpush1.msra.mxu0 0.0
    %1006 = vmatprep.mubr.f32.mxu0 0.0
    %1007 = vmatmul.mubr.f32.gmra.mrb[0].mxu0 %v940
    %v1008 = vpop.f32.mrb[0].mxu0
    %v1009 = vadd.f32 0.0, %v1008
    %v1010 = vpop.f32.mrb[0].mxu0
    %1011 = vdwg.mxu0
    %v1013 = vrot.slane %v1009, 4
    %1014 = vrot.lane.b32.xlu0 %v1013, 96
    %v1015 = vpop.permute.xlu0 %1014
    %v1017 = vadd.f32 %v374, %v1015
    %v1018 = vadd.f32 %v376, %v1015
    %v1019 = vsub.f32 0.0, %v1017
    %v1020 = vsub.f32 0.0, %v1018
    %v1021 = vmul.f32 %v1019, 1.442695
    %v1022 = vpow.pop %v1021
    %v1023 = vmul.f32 %v1020, 1.442695
    %v1024 = vpow.pop %v1023
    %v1025 = vadd.f32 %v1022, 1.0
    %v1026 = vadd.f32 %v1024, 1.0
    %v1027 = vrcp.pop %v1025
    %v1028 = vrcp.pop %v1026
    %v1029 = vadd.f32 %v1009, %v595
    %v1031 = vrot.slane %v1029, 4
    %1032 = vrot.lane.b32.xlu0 %v1031, 32
    %v1033 = vpop.permute.xlu0 %1032
    %v1035 = vmul.f32 %v1027, %v1033
    %1037 = vrot.lane.b32.xlu0 %v1035, 64
    %v1038 = vpop.permute.xlu0 %1037
    %v1040 = vadd.f32 %v376, %v1038
    %v1041 = vtanh.pop %v1040
    %v1042 = vsub.f32 1.0, %v1028
    %1044 = vrot.lane.b32.xlu0 %v1041, 96
    %v1045 = vpop.permute.xlu0 %1044
    %v1047 = vmul.f32 %v1042, %v1045
    %v1048 = vrot.slane %v835, 4
    %v1050 = vmul.f32 %v1028, %v1048
    %v1051 = vadd.f32 %v1047, %v1050
    %1053 = vrot.lane.b32.xlu0 %v938, 96
    %v1054 = vpop.permute.xlu0 %1053
    %v1055 = vsel %vm404, %v1054, 0
    %1057 = vmatprep.subr.mxu0 0.0
    %1058 = vmatpush1.msra.mxu0 %v384
    %1059 = vmatprep.subr.mxu0 0.0
    %1060 = vmatpush1.msra.mxu0 %v385
    %1061 = vmatprep.subr.mxu0 0.0
    %1062 = vmatpush1.msra.mxu0 %v386
    %1063 = vmatprep.subr.mxu0 0.0
    %1064 = vmatpush1.msra.mxu0 %v387
    %1065 = vmatprep.subr.mxu0 0.0
    %1066 = vmatpush1.msra.mxu0 0.0
    %1067 = vmatprep.subr.mxu0 0.0
    %1068 = vmatpush1.msra.mxu0 0.0
    %1069 = vmatprep.subr.mxu0 0.0
    %1070 = vmatpush1.msra.mxu0 0.0
    %1071 = vmatprep.subr.mxu0 0.0
    %1072 = vmatpush1.msra.mxu0 0.0
    %1073 = vmatprep.subr.mxu0 0.0
    %1074 = vmatpush1.msra.mxu0 0.0
    %1075 = vmatprep.subr.mxu0 0.0
    %1076 = vmatpush1.msra.mxu0 0.0
    %1077 = vmatprep.subr.mxu0 0.0
    %1078 = vmatpush1.msra.mxu0 0.0
    %1079 = vmatprep.subr.mxu0 0.0
    %1080 = vmatpush1.msra.mxu0 0.0
    %1081 = vmatprep.subr.mxu0 0.0
    %1082 = vmatpush1.msra.mxu0 0.0
    %1083 = vmatprep.subr.mxu0 0.0
    %1084 = vmatpush1.msra.mxu0 0.0
    %1085 = vmatprep.subr.mxu0 0.0
    %1086 = vmatpush1.msra.mxu0 0.0
    %1087 = vmatprep.subr.mxu0 0.0
    %1088 = vmatpush1.msra.mxu0 0.0
    %1089 = vmatprep.subr.mxu0 0.0
    %1090 = vmatpush1.msra.mxu0 0.0
    %1091 = vmatprep.subr.mxu0 0.0
    %1092 = vmatpush1.msra.mxu0 0.0
    %1093 = vmatprep.subr.mxu0 0.0
    %1094 = vmatpush1.msra.mxu0 0.0
    %1095 = vmatprep.subr.mxu0 0.0
    %1096 = vmatpush1.msra.mxu0 0.0
    %1097 = vmatprep.subr.mxu0 0.0
    %1098 = vmatpush1.msra.mxu0 0.0
    %1099 = vmatprep.subr.mxu0 0.0
    %1100 = vmatpush1.msra.mxu0 0.0
    %1101 = vmatprep.subr.mxu0 0.0
    %1102 = vmatpush1.msra.mxu0 0.0
    %1103 = vmatprep.subr.mxu0 0.0
    %1104 = vmatpush1.msra.mxu0 0.0
    %1105 = vmatprep.subr.mxu0 0.0
    %1106 = vmatpush1.msra.mxu0 0.0
    %1107 = vmatprep.subr.mxu0 0.0
    %1108 = vmatpush1.msra.mxu0 0.0
    %1109 = vmatprep.subr.mxu0 0.0
    %1110 = vmatpush1.msra.mxu0 0.0
    %1111 = vmatprep.subr.mxu0 0.0
    %1112 = vmatpush1.msra.mxu0 0.0
    %1113 = vmatprep.subr.mxu0 0.0
    %1114 = vmatpush1.msra.mxu0 0.0
    %1115 = vmatprep.subr.mxu0 0.0
    %1116 = vmatpush1.msra.mxu0 0.0
    %1117 = vmatprep.subr.mxu0 0.0
    %1118 = vmatpush1.msra.mxu0 0.0
    %1119 = vmatprep.subr.mxu0 0.0
    %1120 = vmatpush1.msra.mxu0 0.0
    %1121 = vmatprep.mubr.f32.mxu0 0.0
    %1122 = vmatmul.mubr.f32.gmra.mrb[0].mxu0 %v1055
    %v1123 = vpop.f32.mrb[0].mxu0
    %v1124 = vadd.f32 0.0, %v1123
    %v1125 = vpop.f32.mrb[0].mxu0
    %1126 = vdwg.mxu0
    %v1128 = vrot.slane %v1124, 4
    %v1130 = vadd.f32 %v368, %v1128
    %v1131 = vsub.f32 0.0, %v1130
    %v1132 = vmul.f32 %v1131, 1.442695
    %v1133 = vpow.pop %v1132
    %v1134 = vadd.f32 %v1133, 1.0
    %v1135 = vrcp.pop %v1134
    %v1136 = vadd.f32 %v1124, %v485
    %v1138 = vrot.slane %v1136, 4
    %1139 = vrot.lane.b32.xlu0 %v1138, 64
    %v1140 = vpop.permute.xlu0 %1139
    %v1142 = vmul.f32 %v1135, %v1140
    %1144 = vrot.lane.b32.xlu0 %v1142, 64
    %v1145 = vpop.permute.xlu0 %1144
    %v1147 = vadd.f32 %v368, %v1145
    %v1148 = vtanh.pop %v1147
    %v1149 = vsub.f32 1.0, %v1135
    %1151 = vrot.lane.b32.xlu0 %v1148, 96
    %v1152 = vpop.permute.xlu0 %1151
    %v1154 = vmul.f32 %v1149, %v1152
    %v1155 = vrot.slane %v938, 4
    %v1157 = vmul.f32 %v1135, %v1155
    %v1158 = vadd.f32 %v1154, %v1157
    %v1160 = vrot.slane %v1051, 4
    %v1161 = vsel %vm404, %v1160, 0
    %1163 = vmatprep.subr.mxu0 0.0
    %1164 = vmatpush1.msra.mxu0 %v388
    %1165 = vmatprep.subr.mxu0 0.0
    %1166 = vmatpush1.msra.mxu0 %v389
    %1167 = vmatprep.subr.mxu0 0.0
    %1168 = vmatpush1.msra.mxu0 %v390
    %1169 = vmatprep.subr.mxu0 0.0
    %1170 = vmatpush1.msra.mxu0 %v391
    %1171 = vmatprep.subr.mxu0 0.0
    %1172 = vmatpush1.msra.mxu0 0.0
    %1173 = vmatprep.subr.mxu0 0.0
    %1174 = vmatpush1.msra.mxu0 0.0
    %1175 = vmatprep.subr.mxu0 0.0
    %1176 = vmatpush1.msra.mxu0 0.0
    %1177 = vmatprep.subr.mxu0 0.0
    %1178 = vmatpush1.msra.mxu0 0.0
    %1179 = vmatprep.subr.mxu0 0.0
    %1180 = vmatpush1.msra.mxu0 0.0
    %1181 = vmatprep.subr.mxu0 0.0
    %1182 = vmatpush1.msra.mxu0 0.0
    %1183 = vmatprep.subr.mxu0 0.0
    %1184 = vmatpush1.msra.mxu0 0.0
    %1185 = vmatprep.subr.mxu0 0.0
    %1186 = vmatpush1.msra.mxu0 0.0
    %1187 = vmatprep.subr.mxu0 0.0
    %1188 = vmatpush1.msra.mxu0 0.0
    %1189 = vmatprep.subr.mxu0 0.0
    %1190 = vmatpush1.msra.mxu0 0.0
    %1191 = vmatprep.subr.mxu0 0.0
    %1192 = vmatpush1.msra.mxu0 0.0
    %1193 = vmatprep.subr.mxu0 0.0
    %1194 = vmatpush1.msra.mxu0 0.0
    %1195 = vmatprep.subr.mxu0 0.0
    %1196 = vmatpush1.msra.mxu0 0.0
    %1197 = vmatprep.subr.mxu0 0.0
    %1198 = vmatpush1.msra.mxu0 0.0
    %1199 = vmatprep.subr.mxu0 0.0
    %1200 = vmatpush1.msra.mxu0 0.0
    %1201 = vmatprep.subr.mxu0 0.0
    %1202 = vmatpush1.msra.mxu0 0.0
    %1203 = vmatprep.subr.mxu0 0.0
    %1204 = vmatpush1.msra.mxu0 0.0
    %1205 = vmatprep.subr.mxu0 0.0
    %1206 = vmatpush1.msra.mxu0 0.0
    %1207 = vmatprep.subr.mxu0 0.0
    %1208 = vmatpush1.msra.mxu0 0.0
    %1209 = vmatprep.subr.mxu0 0.0
    %1210 = vmatpush1.msra.mxu0 0.0
    %1211 = vmatprep.subr.mxu0 0.0
    %1212 = vmatpush1.msra.mxu0 0.0
    %1213 = vmatprep.subr.mxu0 0.0
    %1214 = vmatpush1.msra.mxu0 0.0
    %1215 = vmatprep.subr.mxu0 0.0
    %1216 = vmatpush1.msra.mxu0 0.0
    %1217 = vmatprep.subr.mxu0 0.0
    %1218 = vmatpush1.msra.mxu0 0.0
    %1219 = vmatprep.subr.mxu0 0.0
    %1220 = vmatpush1.msra.mxu0 0.0
    %1221 = vmatprep.subr.mxu0 0.0
    %1222 = vmatpush1.msra.mxu0 0.0
    %1223 = vmatprep.subr.mxu0 0.0
    %1224 = vmatpush1.msra.mxu0 0.0
    %1225 = vmatprep.subr.mxu0 0.0
    %1226 = vmatpush1.msra.mxu0 0.0
    %1227 = vmatprep.mubr.f32.mxu0 0.0
    %1228 = vmatmul.mubr.f32.gmra.mrb[0].mxu0 %v1161
    %v1229 = vpop.f32.mrb[0].mxu0
    %v1230 = vadd.f32 0.0, %v1229
    %v1231 = vpop.f32.mrb[0].mxu0
    %1232 = vdwg.mxu0
    %1234 = vrot.lane.b32.xlu0 %v1230, 96
    %v1235 = vpop.permute.xlu0 %1234
    %v1237 = vadd.f32 %v374, %v1235
    %v1238 = vadd.f32 %v376, %v1235
    %v1239 = vsub.f32 0.0, %v1237
    %v1240 = vsub.f32 0.0, %v1238
    %v1241 = vmul.f32 %v1239, 1.442695
    %v1242 = vpow.pop %v1241
    %v1243 = vmul.f32 %v1240, 1.442695
    %v1244 = vpow.pop %v1243
    %v1245 = vadd.f32 %v1242, 1.0
    %v1246 = vadd.f32 %v1244, 1.0
    %v1247 = vrcp.pop %v1245
    %v1248 = vrcp.pop %v1246
    %v1249 = vadd.f32 %v1230, %v595
    %1251 = vrot.lane.b32.xlu0 %v1249, 32
    %v1252 = vpop.permute.xlu0 %1251
    %v1254 = vmul.f32 %v1247, %v1252
    %1256 = vrot.lane.b32.xlu0 %v1254, 64
    %v1257 = vpop.permute.xlu0 %1256
    %v1259 = vadd.f32 %v376, %v1257
    %v1260 = vtanh.pop %v1259
    %v1261 = vsub.f32 1.0, %v1248
    %1263 = vrot.lane.b32.xlu0 %v1260, 96
    %v1264 = vpop.permute.xlu0 %1263
    %v1266 = vmul.f32 %v1261, %v1264
    %v1268 = vmul.f32 %v1248, %v1160
    %v1269 = vadd.f32 %v1266, %v1268
    %v1271 = vrot.slane %v1158, 4
    %1272 = vrot.lane.b32.xlu0 %v1271, 96
    %v1273 = vpop.permute.xlu0 %1272
    %v1274 = vsel %vm404, %v1273, 0
    %1276 = vmatprep.subr.mxu0 0.0
    %1277 = vmatpush1.msra.mxu0 %v384
    %1278 = vmatprep.subr.mxu0 0.0
    %1279 = vmatpush1.msra.mxu0 %v385
    %1280 = vmatprep.subr.mxu0 0.0
    %1281 = vmatpush1.msra.mxu0 %v386
    %1282 = vmatprep.subr.mxu0 0.0
    %1283 = vmatpush1.msra.mxu0 %v387
    %1284 = vmatprep.subr.mxu0 0.0
    %1285 = vmatpush1.msra.mxu0 0.0
    %1286 = vmatprep.subr.mxu0 0.0
    %1287 = vmatpush1.msra.mxu0 0.0
    %1288 = vmatprep.subr.mxu0 0.0
    %1289 = vmatpush1.msra.mxu0 0.0
    %1290 = vmatprep.subr.mxu0 0.0
    %1291 = vmatpush1.msra.mxu0 0.0
    %1292 = vmatprep.subr.mxu0 0.0
    %1293 = vmatpush1.msra.mxu0 0.0
    %1294 = vmatprep.subr.mxu0 0.0
    %1295 = vmatpush1.msra.mxu0 0.0
    %1296 = vmatprep.subr.mxu0 0.0
    %1297 = vmatpush1.msra.mxu0 0.0
    %1298 = vmatprep.subr.mxu0 0.0
    %1299 = vmatpush1.msra.mxu0 0.0
    %1300 = vmatprep.subr.mxu0 0.0
    %1301 = vmatpush1.msra.mxu0 0.0
    %1302 = vmatprep.subr.mxu0 0.0
    %1303 = vmatpush1.msra.mxu0 0.0
    %1304 = vmatprep.subr.mxu0 0.0
    %1305 = vmatpush1.msra.mxu0 0.0
    %1306 = vmatprep.subr.mxu0 0.0
    %1307 = vmatpush1.msra.mxu0 0.0
    %1308 = vmatprep.subr.mxu0 0.0
    %1309 = vmatpush1.msra.mxu0 0.0
    %1310 = vmatprep.subr.mxu0 0.0
    %1311 = vmatpush1.msra.mxu0 0.0
    %1312 = vmatprep.subr.mxu0 0.0
    %1313 = vmatpush1.msra.mxu0 0.0
    %1314 = vmatprep.subr.mxu0 0.0
    %1315 = vmatpush1.msra.mxu0 0.0
    %1316 = vmatprep.subr.mxu0 0.0
    %1317 = vmatpush1.msra.mxu0 0.0
    %1318 = vmatprep.subr.mxu0 0.0
    %1319 = vmatpush1.msra.mxu0 0.0
    %1320 = vmatprep.subr.mxu0 0.0
    %1321 = vmatpush1.msra.mxu0 0.0
    %1322 = vmatprep.subr.mxu0 0.0
    %1323 = vmatpush1.msra.mxu0 0.0
    %1324 = vmatprep.subr.mxu0 0.0
    %1325 = vmatpush1.msra.mxu0 0.0
    %1326 = vmatprep.subr.mxu0 0.0
    %1327 = vmatpush1.msra.mxu0 0.0
    %1328 = vmatprep.subr.mxu0 0.0
    %1329 = vmatpush1.msra.mxu0 0.0
    %1330 = vmatprep.subr.mxu0 0.0
    %1331 = vmatpush1.msra.mxu0 0.0
    %1332 = vmatprep.subr.mxu0 0.0
    %1333 = vmatpush1.msra.mxu0 0.0
    %1334 = vmatprep.subr.mxu0 0.0
    %1335 = vmatpush1.msra.mxu0 0.0
    %1336 = vmatprep.subr.mxu0 0.0
    %1337 = vmatpush1.msra.mxu0 0.0
    %1338 = vmatprep.subr.mxu0 0.0
    %1339 = vmatpush1.msra.mxu0 0.0
    %1340 = vmatprep.mubr.f32.mxu0 0.0
    %1341 = vmatmul.mubr.f32.gmra.mrb[0].mxu0 %v1274
    %v1342 = vpop.f32.mrb[0].mxu0
    %v1343 = vadd.f32 0.0, %v1342
    %v1344 = vpop.f32.mrb[0].mxu0
    %1345 = vdwg.mxu0
    %v1346 = vadd.f32 %v374, %v1343
    %v1347 = vsub.f32 0.0, %v1346
    %v1348 = vmul.f32 %v1347, 1.442695
    %v1349 = vpow.pop %v1348
    %v1350 = vadd.f32 %v1349, 1.0
    %v1351 = vrcp.pop %v1350
    %v1352 = vadd.f32 %v1343, %v485
    %1354 = vrot.lane.b32.xlu0 %v1352, 64
    %v1355 = vpop.permute.xlu0 %1354
    %v1357 = vmul.f32 %v1351, %v1355
    %1359 = vrot.lane.b32.xlu0 %v1357, 64
    %v1360 = vpop.permute.xlu0 %1359
    %v1362 = vadd.f32 %v374, %v1360
    %v1363 = vtanh.pop %v1362
    %v1364 = vsub.f32 1.0, %v1351
    %1366 = vrot.lane.b32.xlu0 %v1363, 96
    %v1367 = vpop.permute.xlu0 %1366
    %v1369 = vmul.f32 %v1364, %v1367
    %v1371 = vmul.f32 %v1351, %v1271
    %v1372 = vadd.f32 %v1369, %v1371
    %v1374 = vsel %vm404, %v1269, 0
    %1376 = vmatprep.subr.mxu0 0.0
    %1377 = vmatpush1.msra.mxu0 %v388
    %1378 = vmatprep.subr.mxu0 0.0
    %1379 = vmatpush1.msra.mxu0 %v389
    %1380 = vmatprep.subr.mxu0 0.0
    %1381 = vmatpush1.msra.mxu0 %v390
    %1382 = vmatprep.subr.mxu0 0.0
    %1383 = vmatpush1.msra.mxu0 %v391
    %1384 = vmatprep.subr.mxu0 0.0
    %1385 = vmatpush1.msra.mxu0 0.0
    %1386 = vmatprep.subr.mxu0 0.0
    %1387 = vmatpush1.msra.mxu0 0.0
    %1388 = vmatprep.subr.mxu0 0.0
    %1389 = vmatpush1.msra.mxu0 0.0
    %1390 = vmatprep.subr.mxu0 0.0
    %1391 = vmatpush1.msra.mxu0 0.0
    %1392 = vmatprep.subr.mxu0 0.0
    %1393 = vmatpush1.msra.mxu0 0.0
    %1394 = vmatprep.subr.mxu0 0.0
    %1395 = vmatpush1.msra.mxu0 0.0
    %1396 = vmatprep.subr.mxu0 0.0
    %1397 = vmatpush1.msra.mxu0 0.0
    %1398 = vmatprep.subr.mxu0 0.0
    %1399 = vmatpush1.msra.mxu0 0.0
    %1400 = vmatprep.subr.mxu0 0.0
    %1401 = vmatpush1.msra.mxu0 0.0
    %1402 = vmatprep.subr.mxu0 0.0
    %1403 = vmatpush1.msra.mxu0 0.0
    %1404 = vmatprep.subr.mxu0 0.0
    %1405 = vmatpush1.msra.mxu0 0.0
    %1406 = vmatprep.subr.mxu0 0.0
    %1407 = vmatpush1.msra.mxu0 0.0
    %1408 = vmatprep.subr.mxu0 0.0
    %1409 = vmatpush1.msra.mxu0 0.0
    %1410 = vmatprep.subr.mxu0 0.0
    %1411 = vmatpush1.msra.mxu0 0.0
    %1412 = vmatprep.subr.mxu0 0.0
    %1413 = vmatpush1.msra.mxu0 0.0
    %1414 = vmatprep.subr.mxu0 0.0
    %1415 = vmatpush1.msra.mxu0 0.0
    %1416 = vmatprep.subr.mxu0 0.0
    %1417 = vmatpush1.msra.mxu0 0.0
    %1418 = vmatprep.subr.mxu0 0.0
    %1419 = vmatpush1.msra.mxu0 0.0
    %1420 = vmatprep.subr.mxu0 0.0
    %1421 = vmatpush1.msra.mxu0 0.0
    %1422 = vmatprep.subr.mxu0 0.0
    %1423 = vmatpush1.msra.mxu0 0.0
    %1424 = vmatprep.subr.mxu0 0.0
    %1425 = vmatpush1.msra.mxu0 0.0
    %1426 = vmatprep.subr.mxu0 0.0
    %1427 = vmatpush1.msra.mxu0 0.0
    %1428 = vmatprep.subr.mxu0 0.0
    %1429 = vmatpush1.msra.mxu0 0.0
    %1430 = vmatprep.subr.mxu0 0.0
    %1431 = vmatpush1.msra.mxu0 0.0
    %1432 = vmatprep.subr.mxu0 0.0
    %1433 = vmatpush1.msra.mxu0 0.0
    %1434 = vmatprep.subr.mxu0 0.0
    %1435 = vmatpush1.msra.mxu0 0.0
    %1436 = vmatprep.subr.mxu0 0.0
    %1437 = vmatpush1.msra.mxu0 0.0
    %1438 = vmatprep.subr.mxu0 0.0
    %1439 = vmatpush1.msra.mxu0 0.0
    %1440 = vmatprep.mubr.f32.mxu0 0.0
    %1441 = vmatmul.mubr.f32.gmra.mrb[0].mxu0 %v1374
    %v1442 = vpop.f32.mrb[0].mxu0
    %v1443 = vadd.f32 0.0, %v1442
    %v1444 = vpop.f32.mrb[0].mxu0
    %1445 = vdwg.mxu0
    %v1447 = vrot.slane %v1443, 4
    %1448 = vrot.lane.b32.xlu0 %v1447, 96
    %v1449 = vpop.permute.xlu0 %1448
    %v1451 = vadd.f32 %v368, %v1449
    %v1452 = vadd.f32 %v370, %v1449
    %v1453 = vsub.f32 0.0, %v1451
    %v1454 = vsub.f32 0.0, %v1452
    %v1455 = vmul.f32 %v1453, 1.442695
    %v1456 = vpow.pop %v1455
    %v1457 = vmul.f32 %v1454, 1.442695
    %v1458 = vpow.pop %v1457
    %v1459 = vadd.f32 %v1456, 1.0
    %v1460 = vadd.f32 %v1458, 1.0
    %v1461 = vrcp.pop %v1459
    %v1462 = vrcp.pop %v1460
    %v1463 = vadd.f32 %v1443, %v595
    %v1465 = vrot.slane %v1463, 4
    %1466 = vrot.lane.b32.xlu0 %v1465, 32
    %v1467 = vpop.permute.xlu0 %1466
    %v1469 = vmul.f32 %v1461, %v1467
    %1471 = vrot.lane.b32.xlu0 %v1469, 64
    %v1472 = vpop.permute.xlu0 %1471
    %v1474 = vadd.f32 %v370, %v1472
    %v1475 = vtanh.pop %v1474
    %v1476 = vsub.f32 1.0, %v1462
    %1478 = vrot.lane.b32.xlu0 %v1475, 96
    %v1479 = vpop.permute.xlu0 %1478
    %v1481 = vmul.f32 %v1476, %v1479
    %v1482 = vrot.slane %v1269, 4
    %v1484 = vmul.f32 %v1462, %v1482
    %v1485 = vadd.f32 %v1481, %v1484
    %1487 = vrot.lane.b32.xlu0 %v1372, 96
    %v1488 = vpop.permute.xlu0 %1487
    %v1489 = vsel %vm404, %v1488, 0
    %1491 = vmatprep.subr.mxu0 0.0
    %1492 = vmatpush1.msra.mxu0 %v384
    %1493 = vmatprep.subr.mxu0 0.0
    %1494 = vmatpush1.msra.mxu0 %v385
    %1495 = vmatprep.subr.mxu0 0.0
    %1496 = vmatpush1.msra.mxu0 %v386
    %1497 = vmatprep.subr.mxu0 0.0
    %1498 = vmatpush1.msra.mxu0 %v387
    %1499 = vmatprep.subr.mxu0 0.0
    %1500 = vmatpush1.msra.mxu0 0.0
    %1501 = vmatprep.subr.mxu0 0.0
    %1502 = vmatpush1.msra.mxu0 0.0
    %1503 = vmatprep.subr.mxu0 0.0
    %1504 = vmatpush1.msra.mxu0 0.0
    %1505 = vmatprep.subr.mxu0 0.0
    %1506 = vmatpush1.msra.mxu0 0.0
    %1507 = vmatprep.subr.mxu0 0.0
    %1508 = vmatpush1.msra.mxu0 0.0
    %1509 = vmatprep.subr.mxu0 0.0
    %1510 = vmatpush1.msra.mxu0 0.0
    %1511 = vmatprep.subr.mxu0 0.0
    %1512 = vmatpush1.msra.mxu0 0.0
    %1513 = vmatprep.subr.mxu0 0.0
    %1514 = vmatpush1.msra.mxu0 0.0
    %1515 = vmatprep.subr.mxu0 0.0
    %1516 = vmatpush1.msra.mxu0 0.0
    %1517 = vmatprep.subr.mxu0 0.0
    %1518 = vmatpush1.msra.mxu0 0.0
    %1519 = vmatprep.subr.mxu0 0.0
    %1520 = vmatpush1.msra.mxu0 0.0
    %1521 = vmatprep.subr.mxu0 0.0
    %1522 = vmatpush1.msra.mxu0 0.0
    %1523 = vmatprep.subr.mxu0 0.0
    %1524 = vmatpush1.msra.mxu0 0.0
    %1525 = vmatprep.subr.mxu0 0.0
    %1526 = vmatpush1.msra.mxu0 0.0
    %1527 = vmatprep.subr.mxu0 0.0
    %1528 = vmatpush1.msra.mxu0 0.0
    %1529 = vmatprep.subr.mxu0 0.0
    %1530 = vmatpush1.msra.mxu0 0.0
    %1531 = vmatprep.subr.mxu0 0.0
    %1532 = vmatpush1.msra.mxu0 0.0
    %1533 = vmatprep.subr.mxu0 0.0
    %1534 = vmatpush1.msra.mxu0 0.0
    %1535 = vmatprep.subr.mxu0 0.0
    %1536 = vmatpush1.msra.mxu0 0.0
    %1537 = vmatprep.subr.mxu0 0.0
    %1538 = vmatpush1.msra.mxu0 0.0
    %1539 = vmatprep.subr.mxu0 0.0
    %1540 = vmatpush1.msra.mxu0 0.0
    %1541 = vmatprep.subr.mxu0 0.0
    %1542 = vmatpush1.msra.mxu0 0.0
    %1543 = vmatprep.subr.mxu0 0.0
    %1544 = vmatpush1.msra.mxu0 0.0
    %1545 = vmatprep.subr.mxu0 0.0
    %1546 = vmatpush1.msra.mxu0 0.0
    %1547 = vmatprep.subr.mxu0 0.0
    %1548 = vmatpush1.msra.mxu0 0.0
    %1549 = vmatprep.subr.mxu0 0.0
    %1550 = vmatpush1.msra.mxu0 0.0
    %1551 = vmatprep.subr.mxu0 0.0
    %1552 = vmatpush1.msra.mxu0 0.0
    %1553 = vmatprep.subr.mxu0 0.0
    %1554 = vmatpush1.msra.mxu0 0.0
    %1555 = vmatprep.mubr.f32.mxu0 0.0
    %1556 = vmatmul.mubr.f32.gmra.mrb[0].mxu0 %v1489
    %v1557 = vpop.f32.mrb[0].mxu0
    %v1558 = vadd.f32 0.0, %v1557
    %v1559 = vpop.f32.mrb[0].mxu0
    %1560 = vdwg.mxu0
    %v1562 = vrot.slane %v1558, 4
    %v1564 = vadd.f32 %v374, %v1562
    %v1565 = vsub.f32 0.0, %v1564
    %v1566 = vmul.f32 %v1565, 1.442695
    %v1567 = vpow.pop %v1566
    %v1568 = vadd.f32 %v1567, 1.0
    %v1569 = vrcp.pop %v1568
    %v1570 = vadd.f32 %v1558, %v485
    %v1572 = vrot.slane %v1570, 4
    %1573 = vrot.lane.b32.xlu0 %v1572, 64
    %v1574 = vpop.permute.xlu0 %1573
    %v1576 = vmul.f32 %v1569, %v1574
    %1578 = vrot.lane.b32.xlu0 %v1576, 64
    %v1579 = vpop.permute.xlu0 %1578
    %v1581 = vadd.f32 %v374, %v1579
    %v1582 = vtanh.pop %v1581
    %v1583 = vsub.f32 1.0, %v1569
    %1585 = vrot.lane.b32.xlu0 %v1582, 96
    %v1586 = vpop.permute.xlu0 %1585
    %v1588 = vmul.f32 %v1583, %v1586
    %v1589 = vrot.slane %v1372, 4
    %v1591 = vmul.f32 %v1569, %v1589
    %v1592 = vadd.f32 %v1588, %v1591
    %v1594 = vrot.slane %v1485, 4
    %v1595 = vsel %vm404, %v1594, 0
    %1597 = vmatprep.subr.mxu0 0.0
    %1598 = vmatpush1.msra.mxu0 %v388
    %1599 = vmatprep.subr.mxu0 0.0
    %1600 = vmatpush1.msra.mxu0 %v389
    %1601 = vmatprep.subr.mxu0 0.0
    %1602 = vmatpush1.msra.mxu0 %v390
    %1603 = vmatprep.subr.mxu0 0.0
    %1604 = vmatpush1.msra.mxu0 %v391
    %1605 = vmatprep.subr.mxu0 0.0
    %1606 = vmatpush1.msra.mxu0 0.0
    %1607 = vmatprep.subr.mxu0 0.0
    %1608 = vmatpush1.msra.mxu0 0.0
    %1609 = vmatprep.subr.mxu0 0.0
    %1610 = vmatpush1.msra.mxu0 0.0
    %1611 = vmatprep.subr.mxu0 0.0
    %1612 = vmatpush1.msra.mxu0 0.0
    %1613 = vmatprep.subr.mxu0 0.0
    %1614 = vmatpush1.msra.mxu0 0.0
    %1615 = vmatprep.subr.mxu0 0.0
    %1616 = vmatpush1.msra.mxu0 0.0
    %1617 = vmatprep.subr.mxu0 0.0
    %1618 = vmatpush1.msra.mxu0 0.0
    %1619 = vmatprep.subr.mxu0 0.0
    %1620 = vmatpush1.msra.mxu0 0.0
    %1621 = vmatprep.subr.mxu0 0.0
    %1622 = vmatpush1.msra.mxu0 0.0
    %1623 = vmatprep.subr.mxu0 0.0
    %1624 = vmatpush1.msra.mxu0 0.0
    %1625 = vmatprep.subr.mxu0 0.0
    %1626 = vmatpush1.msra.mxu0 0.0
    %1627 = vmatprep.subr.mxu0 0.0
    %1628 = vmatpush1.msra.mxu0 0.0
    %1629 = vmatprep.subr.mxu0 0.0
    %1630 = vmatpush1.msra.mxu0 0.0
    %1631 = vmatprep.subr.mxu0 0.0
    %1632 = vmatpush1.msra.mxu0 0.0
    %1633 = vmatprep.subr.mxu0 0.0
    %1634 = vmatpush1.msra.mxu0 0.0
    %1635 = vmatprep.subr.mxu0 0.0
    %1636 = vmatpush1.msra.mxu0 0.0
    %1637 = vmatprep.subr.mxu0 0.0
    %1638 = vmatpush1.msra.mxu0 0.0
    %1639 = vmatprep.subr.mxu0 0.0
    %1640 = vmatpush1.msra.mxu0 0.0
    %1641 = vmatprep.subr.mxu0 0.0
    %1642 = vmatpush1.msra.mxu0 0.0
    %1643 = vmatprep.subr.mxu0 0.0
    %1644 = vmatpush1.msra.mxu0 0.0
    %1645 = vmatprep.subr.mxu0 0.0
    %1646 = vmatpush1.msra.mxu0 0.0
    %1647 = vmatprep.subr.mxu0 0.0
    %1648 = vmatpush1.msra.mxu0 0.0
    %1649 = vmatprep.subr.mxu0 0.0
    %1650 = vmatpush1.msra.mxu0 0.0
    %1651 = vmatprep.subr.mxu0 0.0
    %1652 = vmatpush1.msra.mxu0 0.0
    %1653 = vmatprep.subr.mxu0 0.0
    %1654 = vmatpush1.msra.mxu0 0.0
    %1655 = vmatprep.subr.mxu0 0.0
    %1656 = vmatpush1.msra.mxu0 0.0
    %1657 = vmatprep.subr.mxu0 0.0
    %1658 = vmatpush1.msra.mxu0 0.0
    %1659 = vmatprep.subr.mxu0 0.0
    %1660 = vmatpush1.msra.mxu0 0.0
    %1661 = vmatprep.mubr.f32.mxu0 0.0
    %1662 = vmatmul.mubr.f32.gmra.mrb[0].mxu0 %v1595
    %v1663 = vpop.f32.mrb[0].mxu0
    %v1664 = vadd.f32 0.0, %v1663
    %v1665 = vpop.f32.mrb[0].mxu0
    %1666 = vdwg.mxu0
    %1668 = vrot.lane.b32.xlu0 %v1664, 96
    %v1669 = vpop.permute.xlu0 %1668
    %v1671 = vadd.f32 %v368, %v1669
    %v1672 = vadd.f32 %v370, %v1669
    %v1673 = vsub.f32 0.0, %v1671
    %v1674 = vsub.f32 0.0, %v1672
    %v1675 = vmul.f32 %v1673, 1.442695
    %v1676 = vpow.pop %v1675
    %v1677 = vmul.f32 %v1674, 1.442695
    %v1678 = vpow.pop %v1677
    %v1679 = vadd.f32 %v1676, 1.0
    %v1680 = vadd.f32 %v1678, 1.0
    %v1681 = vrcp.pop %v1679
    %v1682 = vrcp.pop %v1680
    %v1683 = vadd.f32 %v1664, %v595
    %1685 = vrot.lane.b32.xlu0 %v1683, 32
    %v1686 = vpop.permute.xlu0 %1685
    %v1688 = vmul.f32 %v1681, %v1686
    %1690 = vrot.lane.b32.xlu0 %v1688, 64
    %v1691 = vpop.permute.xlu0 %1690
    %v1693 = vadd.f32 %v370, %v1691
    %v1694 = vtanh.pop %v1693
    %v1695 = vsub.f32 1.0, %v1682
    %1697 = vrot.lane.b32.xlu0 %v1694, 96
    %v1698 = vpop.permute.xlu0 %1697
    %v1700 = vmul.f32 %v1695, %v1698
    %v1702 = vmul.f32 %v1682, %v1594
    %v1703 = vadd.f32 %v1700, %v1702
    %v1705 = vrot.slane %v1592, 4
    %1706 = vrot.lane.b32.xlu0 %v1705, 96
    %v1707 = vpop.permute.xlu0 %1706
    %v1708 = vsel %vm404, %v1707, 0
    %1710 = vmatprep.subr.mxu0 0.0
    %1711 = vmatpush1.msra.mxu0 %v384
    %1712 = vmatprep.subr.mxu0 0.0
    %1713 = vmatpush1.msra.mxu0 %v385
    %1714 = vmatprep.subr.mxu0 0.0
    %1715 = vmatpush1.msra.mxu0 %v386
    %1716 = vmatprep.subr.mxu0 0.0
    %1717 = vmatpush1.msra.mxu0 %v387
    %1718 = vmatprep.subr.mxu0 0.0
    %1719 = vmatpush1.msra.mxu0 0.0
    %1720 = vmatprep.subr.mxu0 0.0
    %1721 = vmatpush1.msra.mxu0 0.0
    %1722 = vmatprep.subr.mxu0 0.0
    %1723 = vmatpush1.msra.mxu0 0.0
    %1724 = vmatprep.subr.mxu0 0.0
    %1725 = vmatpush1.msra.mxu0 0.0
    %1726 = vmatprep.subr.mxu0 0.0
    %1727 = vmatpush1.msra.mxu0 0.0
    %1728 = vmatprep.subr.mxu0 0.0
    %1729 = vmatpush1.msra.mxu0 0.0
    %1730 = vmatprep.subr.mxu0 0.0
    %1731 = vmatpush1.msra.mxu0 0.0
    %1732 = vmatprep.subr.mxu0 0.0
    %1733 = vmatpush1.msra.mxu0 0.0
    %1734 = vmatprep.subr.mxu0 0.0
    %1735 = vmatpush1.msra.mxu0 0.0
    %1736 = vmatprep.subr.mxu0 0.0
    %1737 = vmatpush1.msra.mxu0 0.0
    %1738 = vmatprep.subr.mxu0 0.0
    %1739 = vmatpush1.msra.mxu0 0.0
    %1740 = vmatprep.subr.mxu0 0.0
    %1741 = vmatpush1.msra.mxu0 0.0
    %1742 = vmatprep.subr.mxu0 0.0
    %1743 = vmatpush1.msra.mxu0 0.0
    %1744 = vmatprep.subr.mxu0 0.0
    %1745 = vmatpush1.msra.mxu0 0.0
    %1746 = vmatprep.subr.mxu0 0.0
    %1747 = vmatpush1.msra.mxu0 0.0
    %1748 = vmatprep.subr.mxu0 0.0
    %1749 = vmatpush1.msra.mxu0 0.0
    %1750 = vmatprep.subr.mxu0 0.0
    %1751 = vmatpush1.msra.mxu0 0.0
    %1752 = vmatprep.subr.mxu0 0.0
    %1753 = vmatpush1.msra.mxu0 0.0
    %1754 = vmatprep.subr.mxu0 0.0
    %1755 = vmatpush1.msra.mxu0 0.0
    %1756 = vmatprep.subr.mxu0 0.0
    %1757 = vmatpush1.msra.mxu0 0.0
    %1758 = vmatprep.subr.mxu0 0.0
    %1759 = vmatpush1.msra.mxu0 0.0
    %1760 = vmatprep.subr.mxu0 0.0
    %1761 = vmatpush1.msra.mxu0 0.0
    %1762 = vmatprep.subr.mxu0 0.0
    %1763 = vmatpush1.msra.mxu0 0.0
    %1764 = vmatprep.subr.mxu0 0.0
    %1765 = vmatpush1.msra.mxu0 0.0
    %1766 = vmatprep.subr.mxu0 0.0
    %1767 = vmatpush1.msra.mxu0 0.0
    %1768 = vmatprep.subr.mxu0 0.0
    %1769 = vmatpush1.msra.mxu0 0.0
    %1770 = vmatprep.subr.mxu0 0.0
    %1771 = vmatpush1.msra.mxu0 0.0
    %1772 = vmatprep.subr.mxu0 0.0
    %1773 = vmatpush1.msra.mxu0 0.0
    %1774 = vmatprep.mubr.f32.mxu0 0.0
    %1775 = vmatmul.mubr.f32.gmra.mrb[0].mxu0 %v1708
    %v1776 = vpop.f32.mrb[0].mxu0
    %v1777 = vadd.f32 0.0, %v1776
    %v1778 = vpop.f32.mrb[0].mxu0
    %1779 = vdwg.mxu0
    %v1780 = vadd.f32 %v380, %v1777
    %v1781 = vsub.f32 0.0, %v1780
    %v1782 = vmul.f32 %v1781, 1.442695
    %v1783 = vpow.pop %v1782
    %v1784 = vadd.f32 %v1783, 1.0
    %v1785 = vrcp.pop %v1784
    %v1786 = vadd.f32 %v1777, %v485
    %1788 = vrot.lane.b32.xlu0 %v1786, 64
    %v1789 = vpop.permute.xlu0 %1788
    %v1791 = vmul.f32 %v1785, %v1789
    %1793 = vrot.lane.b32.xlu0 %v1791, 64
    %v1794 = vpop.permute.xlu0 %1793
    %v1796 = vadd.f32 %v380, %v1794
    %v1797 = vtanh.pop %v1796
    %v1798 = vsub.f32 1.0, %v1785
    %1800 = vrot.lane.b32.xlu0 %v1797, 96
    %v1801 = vpop.permute.xlu0 %1800
    %v1803 = vmul.f32 %v1798, %v1801
    %v1805 = vmul.f32 %v1785, %v1705
    %v1806 = vadd.f32 %v1803, %v1805
    %v1808 = vsel %vm404, %v1703, 0
    %1810 = vmatprep.subr.mxu0 0.0
    %1811 = vmatpush1.msra.mxu0 %v388
    %1812 = vmatprep.subr.mxu0 0.0
    %1813 = vmatpush1.msra.mxu0 %v389
    %1814 = vmatprep.subr.mxu0 0.0
    %1815 = vmatpush1.msra.mxu0 %v390
    %1816 = vmatprep.subr.mxu0 0.0
    %1817 = vmatpush1.msra.mxu0 %v391
    %1818 = vmatprep.subr.mxu0 0.0
    %1819 = vmatpush1.msra.mxu0 0.0
    %1820 = vmatprep.subr.mxu0 0.0
    %1821 = vmatpush1.msra.mxu0 0.0
    %1822 = vmatprep.subr.mxu0 0.0
    %1823 = vmatpush1.msra.mxu0 0.0
    %1824 = vmatprep.subr.mxu0 0.0
    %1825 = vmatpush1.msra.mxu0 0.0
    %1826 = vmatprep.subr.mxu0 0.0
    %1827 = vmatpush1.msra.mxu0 0.0
    %1828 = vmatprep.subr.mxu0 0.0
    %1829 = vmatpush1.msra.mxu0 0.0
    %1830 = vmatprep.subr.mxu0 0.0
    %1831 = vmatpush1.msra.mxu0 0.0
    %1832 = vmatprep.subr.mxu0 0.0
    %1833 = vmatpush1.msra.mxu0 0.0
    %1834 = vmatprep.subr.mxu0 0.0
    %1835 = vmatpush1.msra.mxu0 0.0
    %1836 = vmatprep.subr.mxu0 0.0
    %1837 = vmatpush1.msra.mxu0 0.0
    %1838 = vmatprep.subr.mxu0 0.0
    %1839 = vmatpush1.msra.mxu0 0.0
    %1840 = vmatprep.subr.mxu0 0.0
    %1841 = vmatpush1.msra.mxu0 0.0
    %1842 = vmatprep.subr.mxu0 0.0
    %1843 = vmatpush1.msra.mxu0 0.0
    %1844 = vmatprep.subr.mxu0 0.0
    %1845 = vmatpush1.msra.mxu0 0.0
    %1846 = vmatprep.subr.mxu0 0.0
    %1847 = vmatpush1.msra.mxu0 0.0
    %1848 = vmatprep.subr.mxu0 0.0
    %1849 = vmatpush1.msra.mxu0 0.0
    %1850 = vmatprep.subr.mxu0 0.0
    %1851 = vmatpush1.msra.mxu0 0.0
    %1852 = vmatprep.subr.mxu0 0.0
    %1853 = vmatpush1.msra.mxu0 0.0
    %1854 = vmatprep.subr.mxu0 0.0
    %1855 = vmatpush1.msra.mxu0 0.0
    %1856 = vmatprep.subr.mxu0 0.0
    %1857 = vmatpush1.msra.mxu0 0.0
    %1858 = vmatprep.subr.mxu0 0.0
    %1859 = vmatpush1.msra.mxu0 0.0
    %1860 = vmatprep.subr.mxu0 0.0
    %1861 = vmatpush1.msra.mxu0 0.0
    %1862 = vmatprep.subr.mxu0 0.0
    %1863 = vmatpush1.msra.mxu0 0.0
    %1864 = vmatprep.subr.mxu0 0.0
    %1865 = vmatpush1.msra.mxu0 0.0
    %1866 = vmatprep.subr.mxu0 0.0
    %1867 = vmatpush1.msra.mxu0 0.0
    %1868 = vmatprep.subr.mxu0 0.0
    %1869 = vmatpush1.msra.mxu0 0.0
    %1870 = vmatprep.subr.mxu0 0.0
    %1871 = vmatpush1.msra.mxu0 0.0
    %1872 = vmatprep.subr.mxu0 0.0
    %1873 = vmatpush1.msra.mxu0 0.0
    %1874 = vmatprep.mubr.f32.mxu0 0.0
    %1875 = vmatmul.mubr.f32.gmra.mrb[0].mxu0 %v1808
    %v1876 = vpop.f32.mrb[0].mxu0
    %v1877 = vadd.f32 0.0, %v1876
    %v1878 = vpop.f32.mrb[0].mxu0
    %1879 = vdwg.mxu0
    %v1881 = vrot.slane %v1877, 4
    %1882 = vrot.lane.b32.xlu0 %v1881, 96
    %v1883 = vpop.permute.xlu0 %1882
    %v1885 = vadd.f32 %v362, %v1883
    %v1886 = vadd.f32 %v364, %v1883
    %v1887 = vsub.f32 0.0, %v1885
    %v1888 = vsub.f32 0.0, %v1886
    %v1889 = vmul.f32 %v1887, 1.442695
    %v1890 = vpow.pop %v1889
    %v1891 = vmul.f32 %v1888, 1.442695
    %v1892 = vpow.pop %v1891
    %v1893 = vadd.f32 %v1890, 1.0
    %v1894 = vadd.f32 %v1892, 1.0
    %v1895 = vrcp.pop %v1893
    %v1896 = vrcp.pop %v1894
    %v1897 = vadd.f32 %v1877, %v595
    %v1899 = vrot.slane %v1897, 4
    %1900 = vrot.lane.b32.xlu0 %v1899, 32
    %v1901 = vpop.permute.xlu0 %1900
    %v1903 = vmul.f32 %v1895, %v1901
    %1905 = vrot.lane.b32.xlu0 %v1903, 64
    %v1906 = vpop.permute.xlu0 %1905
    %v1908 = vadd.f32 %v364, %v1906
    %v1909 = vtanh.pop %v1908
    %v1910 = vsub.f32 1.0, %v1896
    %1912 = vrot.lane.b32.xlu0 %v1909, 96
    %v1913 = vpop.permute.xlu0 %1912
    %v1915 = vmul.f32 %v1910, %v1913
    %v1916 = vrot.slane %v1703, 4
    %v1918 = vmul.f32 %v1896, %v1916
    %v1919 = vadd.f32 %v1915, %v1918
    %1921 = vrot.lane.b32.xlu0 %v1806, 96
    %v1922 = vpop.permute.xlu0 %1921
    %v1923 = vsel %vm404, %v1922, 0
    %1925 = vmatprep.subr.mxu0 0.0
    %1926 = vmatpush1.msra.mxu0 %v384
    %1927 = vmatprep.subr.mxu0 0.0
    %1928 = vmatpush1.msra.mxu0 %v385
    %1929 = vmatprep.subr.mxu0 0.0
    %1930 = vmatpush1.msra.mxu0 %v386
    %1931 = vmatprep.subr.mxu0 0.0
    %1932 = vmatpush1.msra.mxu0 %v387
    %1933 = vmatprep.subr.mxu0 0.0
    %1934 = vmatpush1.msra.mxu0 0.0
    %1935 = vmatprep.subr.mxu0 0.0
    %1936 = vmatpush1.msra.mxu0 0.0
    %1937 = vmatprep.subr.mxu0 0.0
    %1938 = vmatpush1.msra.mxu0 0.0
    %1939 = vmatprep.subr.mxu0 0.0
    %1940 = vmatpush1.msra.mxu0 0.0
    %1941 = vmatprep.subr.mxu0 0.0
    %1942 = vmatpush1.msra.mxu0 0.0
    %1943 = vmatprep.subr.mxu0 0.0
    %1944 = vmatpush1.msra.mxu0 0.0
    %1945 = vmatprep.subr.mxu0 0.0
    %1946 = vmatpush1.msra.mxu0 0.0
    %1947 = vmatprep.subr.mxu0 0.0
    %1948 = vmatpush1.msra.mxu0 0.0
    %1949 = vmatprep.subr.mxu0 0.0
    %1950 = vmatpush1.msra.mxu0 0.0
    %1951 = vmatprep.subr.mxu0 0.0
    %1952 = vmatpush1.msra.mxu0 0.0
    %1953 = vmatprep.subr.mxu0 0.0
    %1954 = vmatpush1.msra.mxu0 0.0
    %1955 = vmatprep.subr.mxu0 0.0
    %1956 = vmatpush1.msra.mxu0 0.0
    %1957 = vmatprep.subr.mxu0 0.0
    %1958 = vmatpush1.msra.mxu0 0.0
    %1959 = vmatprep.subr.mxu0 0.0
    %1960 = vmatpush1.msra.mxu0 0.0
    %1961 = vmatprep.subr.mxu0 0.0
    %1962 = vmatpush1.msra.mxu0 0.0
    %1963 = vmatprep.subr.mxu0 0.0
    %1964 = vmatpush1.msra.mxu0 0.0
    %1965 = vmatprep.subr.mxu0 0.0
    %1966 = vmatpush1.msra.mxu0 0.0
    %1967 = vmatprep.subr.mxu0 0.0
    %1968 = vmatpush1.msra.mxu0 0.0
    %1969 = vmatprep.subr.mxu0 0.0
    %1970 = vmatpush1.msra.mxu0 0.0
    %1971 = vmatprep.subr.mxu0 0.0
    %1972 = vmatpush1.msra.mxu0 0.0
    %1973 = vmatprep.subr.mxu0 0.0
    %1974 = vmatpush1.msra.mxu0 0.0
    %1975 = vmatprep.subr.mxu0 0.0
    %1976 = vmatpush1.msra.mxu0 0.0
    %1977 = vmatprep.subr.mxu0 0.0
    %1978 = vmatpush1.msra.mxu0 0.0
    %1979 = vmatprep.subr.mxu0 0.0
    %1980 = vmatpush1.msra.mxu0 0.0
    %1981 = vmatprep.subr.mxu0 0.0
    %1982 = vmatpush1.msra.mxu0 0.0
    %1983 = vmatprep.subr.mxu0 0.0
    %1984 = vmatpush1.msra.mxu0 0.0
    %1985 = vmatprep.subr.mxu0 0.0
    %1986 = vmatpush1.msra.mxu0 0.0
    %1987 = vmatprep.subr.mxu0 0.0
    %1988 = vmatpush1.msra.mxu0 0.0
    %1989 = vmatprep.mubr.f32.mxu0 0.0
    %1990 = vmatmul.mubr.f32.gmra.mrb[0].mxu0 %v1923
    %v1991 = vpop.f32.mrb[0].mxu0
    %v1992 = vadd.f32 0.0, %v1991
    %v1993 = vpop.f32.mrb[0].mxu0
    %1994 = vdwg.mxu0
    %v1996 = vrot.slane %v1992, 4
    %v1998 = vadd.f32 %v380, %v1996
    %v1999 = vsub.f32 0.0, %v1998
    %v2000 = vmul.f32 %v1999, 1.442695
    %v2001 = vpow.pop %v2000
    %v2002 = vadd.f32 %v2001, 1.0
    %v2003 = vrcp.pop %v2002
    %v2004 = vadd.f32 %v1992, %v485
    %v2006 = vrot.slane %v2004, 4
    %2007 = vrot.lane.b32.xlu0 %v2006, 64
    %v2008 = vpop.permute.xlu0 %2007
    %v2010 = vmul.f32 %v2003, %v2008
    %2012 = vrot.lane.b32.xlu0 %v2010, 64
    %v2013 = vpop.permute.xlu0 %2012
    %v2015 = vadd.f32 %v380, %v2013
    %v2016 = vtanh.pop %v2015
    %v2017 = vsub.f32 1.0, %v2003
    %2019 = vrot.lane.b32.xlu0 %v2016, 96
    %v2020 = vpop.permute.xlu0 %2019
    %v2022 = vmul.f32 %v2017, %v2020
    %v2023 = vrot.slane %v1806, 4
    %v2025 = vmul.f32 %v2003, %v2023
    %v2026 = vadd.f32 %v2022, %v2025
    %v2028 = vrot.slane %v1919, 4
    %v2029 = vsel %vm404, %v2028, 0
    %2031 = vmatprep.subr.mxu0 0.0
    %2032 = vmatpush1.msra.mxu0 %v388
    %2033 = vmatprep.subr.mxu0 0.0
    %2034 = vmatpush1.msra.mxu0 %v389
    %2035 = vmatprep.subr.mxu0 0.0
    %2036 = vmatpush1.msra.mxu0 %v390
    %2037 = vmatprep.subr.mxu0 0.0
    %2038 = vmatpush1.msra.mxu0 %v391
    %2039 = vmatprep.subr.mxu0 0.0
    %2040 = vmatpush1.msra.mxu0 0.0
    %2041 = vmatprep.subr.mxu0 0.0
    %2042 = vmatpush1.msra.mxu0 0.0
    %2043 = vmatprep.subr.mxu0 0.0
    %2044 = vmatpush1.msra.mxu0 0.0
    %2045 = vmatprep.subr.mxu0 0.0
    %2046 = vmatpush1.msra.mxu0 0.0
    %2047 = vmatprep.subr.mxu0 0.0
    %2048 = vmatpush1.msra.mxu0 0.0
    %2049 = vmatprep.subr.mxu0 0.0
    %2050 = vmatpush1.msra.mxu0 0.0
    %2051 = vmatprep.subr.mxu0 0.0
    %2052 = vmatpush1.msra.mxu0 0.0
    %2053 = vmatprep.subr.mxu0 0.0
    %2054 = vmatpush1.msra.mxu0 0.0
    %2055 = vmatprep.subr.mxu0 0.0
    %2056 = vmatpush1.msra.mxu0 0.0
    %2057 = vmatprep.subr.mxu0 0.0
    %2058 = vmatpush1.msra.mxu0 0.0
    %2059 = vmatprep.subr.mxu0 0.0
    %2060 = vmatpush1.msra.mxu0 0.0
    %2061 = vmatprep.subr.mxu0 0.0
    %2062 = vmatpush1.msra.mxu0 0.0
    %2063 = vmatprep.subr.mxu0 0.0
    %2064 = vmatpush1.msra.mxu0 0.0
    %2065 = vmatprep.subr.mxu0 0.0
    %2066 = vmatpush1.msra.mxu0 0.0
    %2067 = vmatprep.subr.mxu0 0.0
    %2068 = vmatpush1.msra.mxu0 0.0
    %2069 = vmatprep.subr.mxu0 0.0
    %2070 = vmatpush1.msra.mxu0 0.0
    %2071 = vmatprep.subr.mxu0 0.0
    %2072 = vmatpush1.msra.mxu0 0.0
    %2073 = vmatprep.subr.mxu0 0.0
    %2074 = vmatpush1.msra.mxu0 0.0
    %2075 = vmatprep.subr.mxu0 0.0
    %2076 = vmatpush1.msra.mxu0 0.0
    %2077 = vmatprep.subr.mxu0 0.0
    %2078 = vmatpush1.msra.mxu0 0.0
    %2079 = vmatprep.subr.mxu0 0.0
    %2080 = vmatpush1.msra.mxu0 0.0
    %2081 = vmatprep.subr.mxu0 0.0
    %2082 = vmatpush1.msra.mxu0 0.0
    %2083 = vmatprep.subr.mxu0 0.0
    %2084 = vmatpush1.msra.mxu0 0.0
    %2085 = vmatprep.subr.mxu0 0.0
    %2086 = vmatpush1.msra.mxu0 0.0
    %2087 = vmatprep.subr.mxu0 0.0
    %2088 = vmatpush1.msra.mxu0 0.0
    %2089 = vmatprep.subr.mxu0 0.0
    %2090 = vmatpush1.msra.mxu0 0.0
    %2091 = vmatprep.subr.mxu0 0.0
    %2092 = vmatpush1.msra.mxu0 0.0
    %2093 = vmatprep.subr.mxu0 0.0
    %2094 = vmatpush1.msra.mxu0 0.0
    %2095 = vmatprep.mubr.f32.mxu0 0.0
    %2096 = vmatmul.mubr.f32.gmra.mrb[0].mxu0 %v2029
    %v2097 = vpop.f32.mrb[0].mxu0
    %v2098 = vadd.f32 0.0, %v2097
    %v2099 = vpop.f32.mrb[0].mxu0
    %2100 = vdwg.mxu0
    %2102 = vrot.lane.b32.xlu0 %v2098, 96
    %v2103 = vpop.permute.xlu0 %2102
    %v2105 = vadd.f32 %v362, %v2103
    %v2106 = vadd.f32 %v364, %v2103
    %v2107 = vsub.f32 0.0, %v2105
    %v2108 = vsub.f32 0.0, %v2106
    %v2109 = vmul.f32 %v2107, 1.442695
    %v2110 = vpow.pop %v2109
    %v2111 = vmul.f32 %v2108, 1.442695
    %v2112 = vpow.pop %v2111
    %v2113 = vadd.f32 %v2110, 1.0
    %v2114 = vadd.f32 %v2112, 1.0
    %v2115 = vrcp.pop %v2113
    %v2116 = vrcp.pop %v2114
    %v2117 = vadd.f32 %v2098, %v595
    %2119 = vrot.lane.b32.xlu0 %v2117, 32
    %v2120 = vpop.permute.xlu0 %2119
    %v2122 = vmul.f32 %v2115, %v2120
    %2124 = vrot.lane.b32.xlu0 %v2122, 64
    %v2125 = vpop.permute.xlu0 %2124
    %v2127 = vadd.f32 %v364, %v2125
    %v2128 = vtanh.pop %v2127
    %v2129 = vsub.f32 1.0, %v2116
    %2131 = vrot.lane.b32.xlu0 %v2128, 96
    %v2132 = vpop.permute.xlu0 %2131
    %v2134 = vmul.f32 %v2129, %v2132
    %v2136 = vmul.f32 %v2116, %v2028
    %v2137 = vadd.f32 %v2134, %v2136
    %v2139 = vrot.slane %v2026, 4
    %v2142 = vrot.slane %v2137, 4
    %2143 = vrot.lane.b32.xlu0 %v2142, 32
    %v2144 = vpop.permute.xlu0 %2143
    %vm2146 = vcmask 1043456
    %v2147 = vsel %vm2146, %v2139, %v2144
    %v2148 = vld [vmem:[#allocation17] sm:$0xff]
    %v2149 = vld [vmem:[#allocation17 + $0x8] sm:$0xff]
    %v2150 = vld [vmem:[#allocation17 + $0x10] sm:$0xff]
    %v2151 = vld [vmem:[#allocation17 + $0x18] sm:$0xff]
    %2153 = vrot.lane.b32.xlu0 %v2147, 96
    %v2154 = vpop.permute.xlu0 %2153
    %v2155 = vsel %vm404, %v2154, 0
    %2157 = vmatprep.subr.mxu0 0.0
    %2158 = vmatpush1.msra.mxu0 %v2148
    %2159 = vmatprep.subr.mxu0 0.0
    %2160 = vmatpush1.msra.mxu0 %v2149
    %2161 = vmatprep.subr.mxu0 0.0
    %2162 = vmatpush1.msra.mxu0 %v2150
    %2163 = vmatprep.subr.mxu0 0.0
    %2164 = vmatpush1.msra.mxu0 %v2151
    %2165 = vmatprep.subr.mxu0 0.0
    %2166 = vmatpush1.msra.mxu0 0.0
    %2167 = vmatprep.subr.mxu0 0.0
    %2168 = vmatpush1.msra.mxu0 0.0
    %2169 = vmatprep.subr.mxu0 0.0
    %2170 = vmatpush1.msra.mxu0 0.0
    %2171 = vmatprep.subr.mxu0 0.0
    %2172 = vmatpush1.msra.mxu0 0.0
    %2173 = vmatprep.subr.mxu0 0.0
    %2174 = vmatpush1.msra.mxu0 0.0
    %2175 = vmatprep.subr.mxu0 0.0
    %2176 = vmatpush1.msra.mxu0 0.0
    %2177 = vmatprep.subr.mxu0 0.0
    %2178 = vmatpush1.msra.mxu0 0.0
    %2179 = vmatprep.subr.mxu0 0.0
    %2180 = vmatpush1.msra.mxu0 0.0
    %2181 = vmatprep.subr.mxu0 0.0
    %2182 = vmatpush1.msra.mxu0 0.0
    %2183 = vmatprep.subr.mxu0 0.0
    %2184 = vmatpush1.msra.mxu0 0.0
    %2185 = vmatprep.subr.mxu0 0.0
    %2186 = vmatpush1.msra.mxu0 0.0
    %2187 = vmatprep.subr.mxu0 0.0
    %2188 = vmatpush1.msra.mxu0 0.0
    %2189 = vmatprep.subr.mxu0 0.0
    %2190 = vmatpush1.msra.mxu0 0.0
    %2191 = vmatprep.subr.mxu0 0.0
    %2192 = vmatpush1.msra.mxu0 0.0
    %2193 = vmatprep.subr.mxu0 0.0
    %2194 = vmatpush1.msra.mxu0 0.0
    %2195 = vmatprep.subr.mxu0 0.0
    %2196 = vmatpush1.msra.mxu0 0.0
    %2197 = vmatprep.subr.mxu0 0.0
    %2198 = vmatpush1.msra.mxu0 0.0
    %2199 = vmatprep.subr.mxu0 0.0
    %2200 = vmatpush1.msra.mxu0 0.0
    %2201 = vmatprep.subr.mxu0 0.0
    %2202 = vmatpush1.msra.mxu0 0.0
    %2203 = vmatprep.subr.mxu0 0.0
    %2204 = vmatpush1.msra.mxu0 0.0
    %2205 = vmatprep.subr.mxu0 0.0
    %2206 = vmatpush1.msra.mxu0 0.0
    %2207 = vmatprep.subr.mxu0 0.0
    %2208 = vmatpush1.msra.mxu0 0.0
    %2209 = vmatprep.subr.mxu0 0.0
    %2210 = vmatpush1.msra.mxu0 0.0
    %2211 = vmatprep.subr.mxu0 0.0
    %2212 = vmatpush1.msra.mxu0 0.0
    %2213 = vmatprep.subr.mxu0 0.0
    %2214 = vmatpush1.msra.mxu0 0.0
    %2215 = vmatprep.subr.mxu0 0.0
    %2216 = vmatpush1.msra.mxu0 0.0
    %2217 = vmatprep.subr.mxu0 0.0
    %2218 = vmatpush1.msra.mxu0 0.0
    %2219 = vmatprep.subr.mxu0 0.0
    %2220 = vmatpush1.msra.mxu0 0.0
    %2221 = vmatprep.mubr.f32.mxu0 0.0
    %2222 = vmatmul.mubr.f32.gmra.mrb[0].mxu0 %v2155
    %v2223 = vpop.f32.mrb[0].mxu0
    %v2224 = vadd.f32 0.0, %v2223
    %v2225 = vpop.f32.mrb[0].mxu0
    %2226 = vdwg.mxu0
    %v2227 = vld [vmem:[#allocation18] sm:$0xff]
    %v2228 = vld [vmem:[#allocation18 + $0x8] sm:$0xff]
    %v2229 = vld [vmem:[#allocation18 + $0x10] sm:$0xff]
    %v2230 = vld [vmem:[#allocation18 + $0x18] sm:$0xff]
    %2231 = vmatprep.subr.mxu0 0.0
    %2232 = vmatpush1.msra.mxu0 %v2227
    %2233 = vmatprep.subr.mxu0 0.0
    %2234 = vmatpush1.msra.mxu0 %v2228
    %2235 = vmatprep.subr.mxu0 0.0
    %2236 = vmatpush1.msra.mxu0 %v2229
    %2237 = vmatprep.subr.mxu0 0.0
    %2238 = vmatpush1.msra.mxu0 %v2230
    %2239 = vmatprep.subr.mxu0 0.0
    %2240 = vmatpush1.msra.mxu0 0.0
    %2241 = vmatprep.subr.mxu0 0.0
    %2242 = vmatpush1.msra.mxu0 0.0
    %2243 = vmatprep.subr.mxu0 0.0
    %2244 = vmatpush1.msra.mxu0 0.0
    %2245 = vmatprep.subr.mxu0 0.0
    %2246 = vmatpush1.msra.mxu0 0.0
    %2247 = vmatprep.subr.mxu0 0.0
    %2248 = vmatpush1.msra.mxu0 0.0
    %2249 = vmatprep.subr.mxu0 0.0
    %2250 = vmatpush1.msra.mxu0 0.0
    %2251 = vmatprep.subr.mxu0 0.0
    %2252 = vmatpush1.msra.mxu0 0.0
    %2253 = vmatprep.subr.mxu0 0.0
    %2254 = vmatpush1.msra.mxu0 0.0
    %2255 = vmatprep.subr.mxu0 0.0
    %2256 = vmatpush1.msra.mxu0 0.0
    %2257 = vmatprep.subr.mxu0 0.0
    %2258 = vmatpush1.msra.mxu0 0.0
    %2259 = vmatprep.subr.mxu0 0.0
    %2260 = vmatpush1.msra.mxu0 0.0
    %2261 = vmatprep.subr.mxu0 0.0
    %2262 = vmatpush1.msra.mxu0 0.0
    %2263 = vmatprep.subr.mxu0 0.0
    %2264 = vmatpush1.msra.mxu0 0.0
    %2265 = vmatprep.subr.mxu0 0.0
    %2266 = vmatpush1.msra.mxu0 0.0
    %2267 = vmatprep.subr.mxu0 0.0
    %2268 = vmatpush1.msra.mxu0 0.0
    %2269 = vmatprep.subr.mxu0 0.0
    %2270 = vmatpush1.msra.mxu0 0.0
    %2271 = vmatprep.subr.mxu0 0.0
    %2272 = vmatpush1.msra.mxu0 0.0
    %2273 = vmatprep.subr.mxu0 0.0
    %2274 = vmatpush1.msra.mxu0 0.0
    %2275 = vmatprep.subr.mxu0 0.0
    %2276 = vmatpush1.msra.mxu0 0.0
    %2277 = vmatprep.subr.mxu0 0.0
    %2278 = vmatpush1.msra.mxu0 0.0
    %2279 = vmatprep.subr.mxu0 0.0
    %2280 = vmatpush1.msra.mxu0 0.0
    %2281 = vmatprep.subr.mxu0 0.0
    %2282 = vmatpush1.msra.mxu0 0.0
    %2283 = vmatprep.subr.mxu0 0.0
    %2284 = vmatpush1.msra.mxu0 0.0
    %2285 = vmatprep.subr.mxu0 0.0
    %2286 = vmatpush1.msra.mxu0 0.0
    %2287 = vmatprep.subr.mxu0 0.0
    %2288 = vmatpush1.msra.mxu0 0.0
    %2289 = vmatprep.subr.mxu0 0.0
    %2290 = vmatpush1.msra.mxu0 0.0
    %2291 = vmatprep.subr.mxu0 0.0
    %2292 = vmatpush1.msra.mxu0 0.0
    %2293 = vmatprep.subr.mxu0 0.0
    %2294 = vmatpush1.msra.mxu0 0.0
    %2295 = vmatprep.mubr.f32.mxu0 0.0
    %2296 = vmatmul.mubr.f32.gmra.mrb[0].mxu0 %v2155
    %v2297 = vpop.f32.mrb[0].mxu0
    %v2298 = vadd.f32 0.0, %v2297
    %v2299 = vpop.f32.mrb[0].mxu0
    %2300 = vdwg.mxu0
    %v2301 = vld [vmem:[#allocation15] sm:$0xf]
    %v2302 = vld [vmem:[#allocation20] sm:$0x1]
    %v2304 = vlaneseq
    %v2305 = vshrl.u32 %v2304, 7
    %v2306 = vsub.s32 0, %v2305
    %v2307 = vrot.slane %v2302, %v2306
    %v2310 = vsel %vm282, %v2301, 0
    %2312 = vmatprep.subr.mxu0 0.0
    %2313 = vmatpush1.msra.mxu0 %v2224
    %2314 = vmatprep.subr.mxu0 0.0
    %2315 = vmatpush1.msra.mxu0 %v2298
    %2316 = vmatprep.subr.mxu0 0.0
    %2317 = vmatpush1.msra.mxu0 0.0
    %2318 = vmatprep.subr.mxu0 0.0
    %2319 = vmatpush1.msra.mxu0 0.0
    %2320 = vmatprep.subr.mxu0 0.0
    %2321 = vmatpush1.msra.mxu0 0.0
    %2322 = vmatprep.subr.mxu0 0.0
    %2323 = vmatpush1.msra.mxu0 0.0
    %2324 = vmatprep.subr.mxu0 0.0
    %2325 = vmatpush1.msra.mxu0 0.0
    %2326 = vmatprep.subr.mxu0 0.0
    %2327 = vmatpush1.msra.mxu0 0.0
    %2328 = vmatprep.subr.mxu0 0.0
    %2329 = vmatpush1.msra.mxu0 0.0
    %2330 = vmatprep.subr.mxu0 0.0
    %2331 = vmatpush1.msra.mxu0 0.0
    %2332 = vmatprep.subr.mxu0 0.0
    %2333 = vmatpush1.msra.mxu0 0.0
    %2334 = vmatprep.subr.mxu0 0.0
    %2335 = vmatpush1.msra.mxu0 0.0
    %2336 = vmatprep.subr.mxu0 0.0
    %2337 = vmatpush1.msra.mxu0 0.0
    %2338 = vmatprep.subr.mxu0 0.0
    %2339 = vmatpush1.msra.mxu0 0.0
    %2340 = vmatprep.subr.mxu0 0.0
    %2341 = vmatpush1.msra.mxu0 0.0
    %2342 = vmatprep.subr.mxu0 0.0
    %2343 = vmatpush1.msra.mxu0 0.0
    %2344 = vmatprep.subr.mxu0 0.0
    %2345 = vmatpush1.msra.mxu0 0.0
    %2346 = vmatprep.subr.mxu0 0.0
    %2347 = vmatpush1.msra.mxu0 0.0
    %2348 = vmatprep.subr.mxu0 0.0
    %2349 = vmatpush1.msra.mxu0 0.0
    %2350 = vmatprep.subr.mxu0 0.0
    %2351 = vmatpush1.msra.mxu0 0.0
    %2352 = vmatprep.subr.mxu0 0.0
    %2353 = vmatpush1.msra.mxu0 0.0
    %2354 = vmatprep.subr.mxu0 0.0
    %2355 = vmatpush1.msra.mxu0 0.0
    %2356 = vmatprep.subr.mxu0 0.0
    %2357 = vmatpush1.msra.mxu0 0.0
    %2358 = vmatprep.subr.mxu0 0.0
    %2359 = vmatpush1.msra.mxu0 0.0
    %2360 = vmatprep.subr.mxu0 0.0
    %2361 = vmatpush1.msra.mxu0 0.0
    %2362 = vmatprep.subr.mxu0 0.0
    %2363 = vmatpush1.msra.mxu0 0.0
    %2364 = vmatprep.subr.mxu0 0.0
    %2365 = vmatpush1.msra.mxu0 0.0
    %2366 = vmatprep.subr.mxu0 0.0
    %2367 = vmatpush1.msra.mxu0 0.0
    %2368 = vmatprep.subr.mxu0 0.0
    %2369 = vmatpush1.msra.mxu0 0.0
    %2370 = vmatprep.subr.mxu0 0.0
    %2371 = vmatpush1.msra.mxu0 0.0
    %2372 = vmatprep.subr.mxu0 0.0
    %2373 = vmatpush1.msra.mxu0 0.0
    %2374 = vmatprep.subr.mxu0 0.0
    %2375 = vmatpush1.msra.mxu0 0.0
    %2376 = vmatprep.mubr.f32.mxu0 0.0
    %2377 = vmatmul.mubr.f32.gmra.mrb[0].mxu0 %v2310
    %v2378 = vpop.f32.mrb[0].mxu0
    %v2379 = vadd.f32 %v2307, %v2378
    %v2380 = vpop.f32.mrb[0].mxu0
    %2381 = vdwg.mxu0
    %vm2382 = vcmp.gt.f32.partialorder %v2379, 0.0
    %v2383 = vmul.f32 %v2379, 1.442695
    %v2384 = vpow.pop %v2383
    %v2385 = vsub.f32 %v2384, 1.0
    %v2386 = vmul.f32 %v2385, 1.6732632
    %v2387 = vsel %vm2382, %v2379, %v2386
    %v2388 = vmul.f32 %v2387, 1.050701
    %v2389 = vld [vmem:[#allocation21] sm:$0xff]
    %v2390 = vld [vmem:[#allocation21 + $0x8] sm:$0xff]
    %v2391 = vld [vmem:[#allocation21 + $0x10] sm:$0xff]
    %v2392 = vld [vmem:[#allocation21 + $0x18] sm:$0xff]
    %v2393 = vld [vmem:[#allocation21 + $0x20] sm:$0xff]
    %v2394 = vld [vmem:[#allocation21 + $0x28] sm:$0xff]
    %v2395 = vld [vmem:[#allocation21 + $0x30] sm:$0xff]
    %v2396 = vld [vmem:[#allocation21 + $0x38] sm:$0xff]
    %v2397 = vld [vmem:[#allocation21 + $0x40] sm:$0xff]
    %v2398 = vld [vmem:[#allocation21 + $0x48] sm:$0xff]
    %v2399 = vld [vmem:[#allocation21 + $0x50] sm:$0xff]
    %v2400 = vld [vmem:[#allocation21 + $0x58] sm:$0xff]
    %v2401 = vld [vmem:[#allocation21 + $0x60] sm:$0xff]
    %v2402 = vld [vmem:[#allocation21 + $0x68] sm:$0xff]
    %v2403 = vld [vmem:[#allocation21 + $0x70] sm:$0xff]
    %v2404 = vld [vmem:[#allocation21 + $0x78] sm:$0xff]
    %v2405 = vld [vmem:[#allocation23] sm:$0x1]
    %v2407 = vlaneseq
    %v2408 = vshrl.u32 %v2407, 7
    %v2409 = vsub.s32 0, %v2408
    %v2410 = vrot.slane %v2405, %v2409
    %2412 = vmatprep.subr.mxu0 0.0
    %2413 = vmatpush1.msra.mxu0 %v2389
    %2414 = vmatprep.subr.mxu0 0.0
    %2415 = vmatpush1.msra.mxu0 %v2390
    %2416 = vmatprep.subr.mxu0 0.0
    %2417 = vmatpush1.msra.mxu0 %v2391
    %2418 = vmatprep.subr.mxu0 0.0
    %2419 = vmatpush1.msra.mxu0 %v2392
    %2420 = vmatprep.subr.mxu0 0.0
    %2421 = vmatpush1.msra.mxu0 %v2393
    %2422 = vmatprep.subr.mxu0 0.0
    %2423 = vmatpush1.msra.mxu0 %v2394
    %2424 = vmatprep.subr.mxu0 0.0
    %2425 = vmatpush1.msra.mxu0 %v2395
    %2426 = vmatprep.subr.mxu0 0.0
    %2427 = vmatpush1.msra.mxu0 %v2396
    %2428 = vmatprep.subr.mxu0 0.0
    %2429 = vmatpush1.msra.mxu0 %v2397
    %2430 = vmatprep.subr.mxu0 0.0
    %2431 = vmatpush1.msra.mxu0 %v2398
    %2432 = vmatprep.subr.mxu0 0.0
    %2433 = vmatpush1.msra.mxu0 %v2399
    %2434 = vmatprep.subr.mxu0 0.0
    %2435 = vmatpush1.msra.mxu0 %v2400
    %2436 = vmatprep.subr.mxu0 0.0
    %2437 = vmatpush1.msra.mxu0 %v2401
    %2438 = vmatprep.subr.mxu0 0.0
    %2439 = vmatpush1.msra.mxu0 %v2402
    %2440 = vmatprep.subr.mxu0 0.0
    %2441 = vmatpush1.msra.mxu0 %v2403
    %2442 = vmatprep.subr.mxu0 0.0
    %2443 = vmatpush1.msra.mxu0 %v2404
    %2444 = vmatprep.subr.mxu0 0.0
    %2445 = vmatpush1.msra.mxu0 0.0
    %2446 = vmatprep.subr.mxu0 0.0
    %2447 = vmatpush1.msra.mxu0 0.0
    %2448 = vmatprep.subr.mxu0 0.0
    %2449 = vmatpush1.msra.mxu0 0.0
    %2450 = vmatprep.subr.mxu0 0.0
    %2451 = vmatpush1.msra.mxu0 0.0
    %2452 = vmatprep.subr.mxu0 0.0
    %2453 = vmatpush1.msra.mxu0 0.0
    %2454 = vmatprep.subr.mxu0 0.0
    %2455 = vmatpush1.msra.mxu0 0.0
    %2456 = vmatprep.subr.mxu0 0.0
    %2457 = vmatpush1.msra.mxu0 0.0
    %2458 = vmatprep.subr.mxu0 0.0
    %2459 = vmatpush1.msra.mxu0 0.0
    %2460 = vmatprep.subr.mxu0 0.0
    %2461 = vmatpush1.msra.mxu0 0.0
    %2462 = vmatprep.subr.mxu0 0.0
    %2463 = vmatpush1.msra.mxu0 0.0
    %2464 = vmatprep.subr.mxu0 0.0
    %2465 = vmatpush1.msra.mxu0 0.0
    %2466 = vmatprep.subr.mxu0 0.0
    %2467 = vmatpush1.msra.mxu0 0.0
    %2468 = vmatprep.subr.mxu0 0.0
    %2469 = vmatpush1.msra.mxu0 0.0
    %2470 = vmatprep.subr.mxu0 0.0
    %2471 = vmatpush1.msra.mxu0 0.0
    %2472 = vmatprep.subr.mxu0 0.0
    %2473 = vmatpush1.msra.mxu0 0.0
    %2474 = vmatprep.subr.mxu0 0.0
    %2475 = vmatpush1.msra.mxu0 0.0
    %2476 = vmatprep.mubr.f32.mxu0 0.0
    %2477 = vmatmul.mubr.f32.gmra.mrb[0].mxu0 %v2388
    %v2478 = vpop.f32.mrb[0].mxu0
    %v2479 = vadd.f32 %v2410, %v2478
    %v2480 = vpop.f32.mrb[0].mxu0
    %2481 = vdwg.mxu0
    %vm2482 = vcmp.gt.f32.partialorder %v2479, 0.0
    %v2483 = vmul.f32 %v2479, 1.442695
    %v2484 = vpow.pop %v2483
    %v2485 = vsub.f32 %v2484, 1.0
    %v2486 = vmul.f32 %v2485, 1.6732632
    %v2487 = vsel %vm2482, %v2479, %v2486
    %v2488 = vmul.f32 %v2487, 1.050701
    %v2489 = vld [vmem:[#allocation24] sm:$0xff]
    %v2490 = vld [vmem:[#allocation24 + $0x8] sm:$0xff]
    %v2491 = vld [vmem:[#allocation24 + $0x10] sm:$0xff]
    %v2492 = vld [vmem:[#allocation24 + $0x18] sm:$0xff]
    %v2493 = vld [vmem:[#allocation24 + $0x20] sm:$0xff]
    %v2494 = vld [vmem:[#allocation24 + $0x28] sm:$0xff]
    %v2495 = vld [vmem:[#allocation24 + $0x30] sm:$0xff]
    %v2496 = vld [vmem:[#allocation24 + $0x38] sm:$0xff]
    %v2497 = vld [vmem:[#allocation24 + $0x40] sm:$0xff]
    %v2498 = vld [vmem:[#allocation24 + $0x48] sm:$0xff]
    %v2499 = vld [vmem:[#allocation24 + $0x50] sm:$0xff]
    %v2500 = vld [vmem:[#allocation24 + $0x58] sm:$0xff]
    %v2501 = vld [vmem:[#allocation24 + $0x60] sm:$0xff]
    %v2502 = vld [vmem:[#allocation24 + $0x68] sm:$0xff]
    %v2503 = vld [vmem:[#allocation24 + $0x70] sm:$0xff]
    %v2504 = vld [vmem:[#allocation24 + $0x78] sm:$0xff]
    %v2505 = vld [vmem:[#allocation26] sm:$0x1]
    %v2507 = vlaneseq
    %v2508 = vshrl.u32 %v2507, 7
    %v2509 = vsub.s32 0, %v2508
    %v2510 = vrot.slane %v2505, %v2509
    %2512 = vmatprep.subr.mxu0 0.0
    %2513 = vmatpush1.msra.mxu0 %v2489
    %2514 = vmatprep.subr.mxu0 0.0
    %2515 = vmatpush1.msra.mxu0 %v2490
    %2516 = vmatprep.subr.mxu0 0.0
    %2517 = vmatpush1.msra.mxu0 %v2491
    %2518 = vmatprep.subr.mxu0 0.0
    %2519 = vmatpush1.msra.mxu0 %v2492
    %2520 = vmatprep.subr.mxu0 0.0
    %2521 = vmatpush1.msra.mxu0 %v2493
    %2522 = vmatprep.subr.mxu0 0.0
    %2523 = vmatpush1.msra.mxu0 %v2494
    %2524 = vmatprep.subr.mxu0 0.0
    %2525 = vmatpush1.msra.mxu0 %v2495
    %2526 = vmatprep.subr.mxu0 0.0
    %2527 = vmatpush1.msra.mxu0 %v2496
    %2528 = vmatprep.subr.mxu0 0.0
    %2529 = vmatpush1.msra.mxu0 %v2497
    %2530 = vmatprep.subr.mxu0 0.0
    %2531 = vmatpush1.msra.mxu0 %v2498
    %2532 = vmatprep.subr.mxu0 0.0
    %2533 = vmatpush1.msra.mxu0 %v2499
    %2534 = vmatprep.subr.mxu0 0.0
    %2535 = vmatpush1.msra.mxu0 %v2500
    %2536 = vmatprep.subr.mxu0 0.0
    %2537 = vmatpush1.msra.mxu0 %v2501
    %2538 = vmatprep.subr.mxu0 0.0
    %2539 = vmatpush1.msra.mxu0 %v2502
    %2540 = vmatprep.subr.mxu0 0.0
    %2541 = vmatpush1.msra.mxu0 %v2503
    %2542 = vmatprep.subr.mxu0 0.0
    %2543 = vmatpush1.msra.mxu0 %v2504
    %2544 = vmatprep.subr.mxu0 0.0
    %2545 = vmatpush1.msra.mxu0 0.0
    %2546 = vmatprep.subr.mxu0 0.0
    %2547 = vmatpush1.msra.mxu0 0.0
    %2548 = vmatprep.subr.mxu0 0.0
    %2549 = vmatpush1.msra.mxu0 0.0
    %2550 = vmatprep.subr.mxu0 0.0
    %2551 = vmatpush1.msra.mxu0 0.0
    %2552 = vmatprep.subr.mxu0 0.0
    %2553 = vmatpush1.msra.mxu0 0.0
    %2554 = vmatprep.subr.mxu0 0.0
    %2555 = vmatpush1.msra.mxu0 0.0
    %2556 = vmatprep.subr.mxu0 0.0
    %2557 = vmatpush1.msra.mxu0 0.0
    %2558 = vmatprep.subr.mxu0 0.0
    %2559 = vmatpush1.msra.mxu0 0.0
    %2560 = vmatprep.subr.mxu0 0.0
    %2561 = vmatpush1.msra.mxu0 0.0
    %2562 = vmatprep.subr.mxu0 0.0
    %2563 = vmatpush1.msra.mxu0 0.0
    %2564 = vmatprep.subr.mxu0 0.0
    %2565 = vmatpush1.msra.mxu0 0.0
    %2566 = vmatprep.subr.mxu0 0.0
    %2567 = vmatpush1.msra.mxu0 0.0
    %2568 = vmatprep.subr.mxu0 0.0
    %2569 = vmatpush1.msra.mxu0 0.0
    %2570 = vmatprep.subr.mxu0 0.0
    %2571 = vmatpush1.msra.mxu0 0.0
    %2572 = vmatprep.subr.mxu0 0.0
    %2573 = vmatpush1.msra.mxu0 0.0
    %2574 = vmatprep.subr.mxu0 0.0
    %2575 = vmatpush1.msra.mxu0 0.0
    %2576 = vmatprep.mubr.f32.mxu0 0.0
    %2577 = vmatmul.mubr.f32.gmra.mrb[0].mxu0 %v2488
    %v2578 = vpop.f32.mrb[0].mxu0
    %v2579 = vadd.f32 %v2510, %v2578
    %v2580 = vpop.f32.mrb[0].mxu0
    %2581 = vdwg.mxu0
    %vm2582 = vcmp.gt.f32.partialorder %v2579, 0.0
    %v2583 = vmul.f32 %v2579, 1.442695
    %v2584 = vpow.pop %v2583
    %v2585 = vsub.f32 %v2584, 1.0
    %v2586 = vmul.f32 %v2585, 1.6732632
    %v2587 = vsel %vm2582, %v2579, %v2586
    %v2588 = vmul.f32 %v2587, 1.050701
    %v2589 = vld [vmem:[#allocation27] sm:$0xff]
    %v2590 = vld [vmem:[#allocation27 + $0x8] sm:$0xff]
    %v2591 = vld [vmem:[#allocation27 + $0x10] sm:$0xff]
    %v2592 = vld [vmem:[#allocation27 + $0x18] sm:$0xff]
    %v2593 = vld [vmem:[#allocation27 + $0x20] sm:$0xff]
    %v2594 = vld [vmem:[#allocation27 + $0x28] sm:$0xff]
    %v2595 = vld [vmem:[#allocation27 + $0x30] sm:$0xff]
    %v2596 = vld [vmem:[#allocation27 + $0x38] sm:$0xff]
    %v2597 = vld [vmem:[#allocation27 + $0x40] sm:$0xff]
    %v2598 = vld [vmem:[#allocation27 + $0x48] sm:$0xff]
    %v2599 = vld [vmem:[#allocation27 + $0x50] sm:$0xff]
    %v2600 = vld [vmem:[#allocation27 + $0x58] sm:$0xff]
    %v2601 = vld [vmem:[#allocation27 + $0x60] sm:$0xff]
    %v2602 = vld [vmem:[#allocation27 + $0x68] sm:$0xff]
    %v2603 = vld [vmem:[#allocation27 + $0x70] sm:$0xff]
    %v2604 = vld [vmem:[#allocation27 + $0x78] sm:$0xff]
    %v2605 = vld [vmem:[#allocation2] sm:$0x1]
    %v2607 = vlaneseq
    %v2608 = vshrl.u32 %v2607, 7
    %v2609 = vsub.s32 0, %v2608
    %v2610 = vrot.slane %v2605, %v2609
    %2612 = vmatprep.subr.mxu0 0.0
    %2613 = vmatpush1.msra.mxu0 %v2589
    %2614 = vmatprep.subr.mxu0 0.0
    %2615 = vmatpush1.msra.mxu0 %v2590
    %2616 = vmatprep.subr.mxu0 0.0
    %2617 = vmatpush1.msra.mxu0 %v2591
    %2618 = vmatprep.subr.mxu0 0.0
    %2619 = vmatpush1.msra.mxu0 %v2592
    %2620 = vmatprep.subr.mxu0 0.0
    %2621 = vmatpush1.msra.mxu0 %v2593
    %2622 = vmatprep.subr.mxu0 0.0
    %2623 = vmatpush1.msra.mxu0 %v2594
    %2624 = vmatprep.subr.mxu0 0.0
    %2625 = vmatpush1.msra.mxu0 %v2595
    %2626 = vmatprep.subr.mxu0 0.0
    %2627 = vmatpush1.msra.mxu0 %v2596
    %2628 = vmatprep.subr.mxu0 0.0
    %2629 = vmatpush1.msra.mxu0 %v2597
    %2630 = vmatprep.subr.mxu0 0.0
    %2631 = vmatpush1.msra.mxu0 %v2598
    %2632 = vmatprep.subr.mxu0 0.0
    %2633 = vmatpush1.msra.mxu0 %v2599
    %2634 = vmatprep.subr.mxu0 0.0
    %2635 = vmatpush1.msra.mxu0 %v2600
    %2636 = vmatprep.subr.mxu0 0.0
    %2637 = vmatpush1.msra.mxu0 %v2601
    %2638 = vmatprep.subr.mxu0 0.0
    %2639 = vmatpush1.msra.mxu0 %v2602
    %2640 = vmatprep.subr.mxu0 0.0
    %2641 = vmatpush1.msra.mxu0 %v2603
    %2642 = vmatprep.subr.mxu0 0.0
    %2643 = vmatpush1.msra.mxu0 %v2604
    %2644 = vmatprep.subr.mxu0 0.0
    %2645 = vmatpush1.msra.mxu0 0.0
    %2646 = vmatprep.subr.mxu0 0.0
    %2647 = vmatpush1.msra.mxu0 0.0
    %2648 = vmatprep.subr.mxu0 0.0
    %2649 = vmatpush1.msra.mxu0 0.0
    %2650 = vmatprep.subr.mxu0 0.0
    %2651 = vmatpush1.msra.mxu0 0.0
    %2652 = vmatprep.subr.mxu0 0.0
    %2653 = vmatpush1.msra.mxu0 0.0
    %2654 = vmatprep.subr.mxu0 0.0
    %2655 = vmatpush1.msra.mxu0 0.0
    %2656 = vmatprep.subr.mxu0 0.0
    %2657 = vmatpush1.msra.mxu0 0.0
    %2658 = vmatprep.subr.mxu0 0.0
    %2659 = vmatpush1.msra.mxu0 0.0
    %2660 = vmatprep.subr.mxu0 0.0
    %2661 = vmatpush1.msra.mxu0 0.0
    %2662 = vmatprep.subr.mxu0 0.0
    %2663 = vmatpush1.msra.mxu0 0.0
    %2664 = vmatprep.subr.mxu0 0.0
    %2665 = vmatpush1.msra.mxu0 0.0
    %2666 = vmatprep.subr.mxu0 0.0
    %2667 = vmatpush1.msra.mxu0 0.0
    %2668 = vmatprep.subr.mxu0 0.0
    %2669 = vmatpush1.msra.mxu0 0.0
    %2670 = vmatprep.subr.mxu0 0.0
    %2671 = vmatpush1.msra.mxu0 0.0
    %2672 = vmatprep.subr.mxu0 0.0
    %2673 = vmatpush1.msra.mxu0 0.0
    %2674 = vmatprep.subr.mxu0 0.0
    %2675 = vmatpush1.msra.mxu0 0.0
    %2676 = vmatprep.mubr.f32.mxu0 0.0
    %2677 = vmatmul.mubr.f32.gmra.mrb[0].mxu0 %v2588
    %v2678 = vpop.f32.mrb[0].mxu0
    %v2679 = vadd.f32 %v2610, %v2678
    %v2680 = vpop.f32.mrb[0].mxu0
    %2681 = vdwg.mxu0
    %v2682 = vsub.f32 0.0, %v2679
    %v2683 = vmul.f32 %v2682, 1.442695
    %v2684 = vpow.pop %v2683
    %v2685 = vadd.f32 %v2684, 1.0
    %v2686 = vrcp.pop %v2685
    %vm2687 = vcmask 3072
    %2688 = vst.msk [vmem:[#allocation29] sm:$0xf] %vm2687, %v2686
    // Predicated region
    $region134: #{discriminator_forward.1} parent=1 // pred_check
      _
    $region135: #{discriminator_forward.1} parent=1 // pred_check_branch
      %2690 = sbr.rel (0) target = $region137
    $region136: #{discriminator_forward.1} parent=1 // pred_region
      %s2692 = ssub.s32 64, 64
      %2693 = vsyncadd [#allocation5], %s2692
      %s2695 = sshll.u32 [#allocation29], 4
      %s2696 = int_to_ptr.vmem [resolvable:$true] %s2695
      %2698 = dma.vmem_to_hbm [thread:$0]  %s2696, 64, %s17, [#allocation5]
    $region137: #{discriminator_forward.1} parent=1 // pred_fallthru
      _
    // Predicated region
    $region138: #{discriminator_forward.1} parent=1 // pred_check
      _
    $region139: #{discriminator_forward.1} parent=1 // pred_check_branch
      %2700 = sbr.rel (0) target = $region141
    $region140: #{discriminator_forward.1} parent=1 // pred_region
      %2701 = dma.done [#allocation5], 64
    $region141: #{discriminator_forward.1} parent=1 // pred_fallthru
      _
    %2702 = vsyncpa [#allocation4], 1
    %2703 = vsyncpa [#allocation7], 1
    %2704 = vsyncpa [#allocation10], 1
    %2705 = vsyncpa [#allocation13], 1
    %2706 = vsyncpa [#allocation16], 1
    %2707 = vsyncpa [#allocation19], 1
    %2708 = vsyncpa [#allocation22], 1
    %2709 = vsyncpa [#allocation25], 1
    %2710 = vsyncpa [#allocation28], 1
    %2711 = vsyncpa [#allocation5], 1

</llo_original>
